<compile_context>
chip_gen: v6e
topology: v6e:2x2x1
jax: 0.10.0
libtpu: 0.0.40
codegen_flags: <defaults>
</compile_context>

<pallas_src>
import functools
import math

import jax
import jax.numpy as jnp
from jax.experimental import pallas as pl
from jax.experimental.pallas import tpu as pltpu

# ----------------------------- tiny DeepSeek config -----------------------------
VOCAB = 256
D = 128            # hidden size
N_HEADS = 4
DH = D // N_HEADS  # head dim = 32
N_LAYERS = 2
INTER = 256        # MLP intermediate size
EPS = 1e-6
ROPE_BASE = 10000.0
MASK_MIN = float(jnp.finfo(jnp.float32).min)


# ----------------------------- Pallas kernels -----------------------------
def _rmsnorm_f32(x, w, eps):
    var = jnp.mean(x * x, axis=-1, keepdims=True)
    return x * jax.lax.rsqrt(var + eps) * w


def _norm_matmul_kernel(x_ref, nw_ref, w_ref, o_ref, *, eps):
    # Fused RMSNorm + matmul (used for the QKV projection and the lm_head).
    x = x_ref[...].astype(jnp.float32)
    xn = _rmsnorm_f32(x, nw_ref[...].astype(jnp.float32), eps)
    o_ref[...] = jnp.dot(
        xn.astype(w_ref.dtype), w_ref[...], preferred_element_type=jnp.float32
    ).astype(o_ref.dtype)


def norm_matmul(x, nw, w, out_dtype, row_blk):
    M, Dm = x.shape
    N = w.shape[1]
    return pl.pallas_call(
        functools.partial(_norm_matmul_kernel, eps=EPS),
        out_shape=jax.ShapeDtypeStruct((M, N), out_dtype),
        grid=(M // row_blk,),
        in_specs=[
            pl.BlockSpec((row_blk, Dm), lambda i: (i, 0)),
            pl.BlockSpec((1, Dm), lambda i: (0, 0)),
            pl.BlockSpec((Dm, N), lambda i: (0, 0)),
        ],
        out_specs=pl.BlockSpec((row_blk, N), lambda i: (i, 0)),
        compiler_params=pltpu.CompilerParams(dimension_semantics=("parallel",)),
    )(x, nw.reshape(1, Dm), w)


def _proj_residual_kernel(a_ref, w_ref, res_ref, o_ref):
    # out = residual + a @ w   (attention output projection, fused residual add)
    o_ref[...] = (
        res_ref[...].astype(jnp.float32)
        + jnp.dot(a_ref[...], w_ref[...], preferred_element_type=jnp.float32)
    ).astype(o_ref.dtype)


def proj_residual(a, w, res, row_blk):
    M, K = a.shape
    N = w.shape[1]
    return pl.pallas_call(
        _proj_residual_kernel,
        out_shape=jax.ShapeDtypeStruct((M, N), res.dtype),
        grid=(M // row_blk,),
        in_specs=[
            pl.BlockSpec((row_blk, K), lambda i: (i, 0)),
            pl.BlockSpec((K, N), lambda i: (0, 0)),
            pl.BlockSpec((row_blk, N), lambda i: (i, 0)),
        ],
        out_specs=pl.BlockSpec((row_blk, N), lambda i: (i, 0)),
        compiler_params=pltpu.CompilerParams(dimension_semantics=("parallel",)),
    )(a, w, res)


def _norm_mlp_kernel(x_ref, nw_ref, wgu_ref, wd_ref, o_ref, *, eps, inter):
    # out = x + down( SiLU(gate(norm(x))) * up(norm(x)) ), gate/up fused [D, 2I].
    x = x_ref[...].astype(jnp.float32)
    xn = _rmsnorm_f32(x, nw_ref[...].astype(jnp.float32), eps)
    gu = jnp.dot(xn.astype(wgu_ref.dtype), wgu_ref[...],
                 preferred_element_type=jnp.float32)           # [rows, 2I] f32
    g = gu[:, :inter]
    u = gu[:, inter:]
    hmid = (g * jax.nn.sigmoid(g)) * u                         # SiLU epilogue in f32
    o_ref[...] = (
        x + jnp.dot(hmid.astype(wd_ref.dtype), wd_ref[...],
                    preferred_element_type=jnp.float32)
    ).astype(o_ref.dtype)


def norm_mlp(x, nw, wgu, wd, row_blk):
    M, Dm = x.shape
    I2 = wgu.shape[1]
    return pl.pallas_call(
        functools.partial(_norm_mlp_kernel, eps=EPS, inter=I2 // 2),
        out_shape=jax.ShapeDtypeStruct((M, Dm), x.dtype),
        grid=(M // row_blk,),
        in_specs=[
            pl.BlockSpec((row_blk, Dm), lambda i: (i, 0)),
            pl.BlockSpec((1, Dm), lambda i: (0, 0)),
            pl.BlockSpec((Dm, I2), lambda i: (0, 0)),
            pl.BlockSpec((I2 // 2, Dm), lambda i: (0, 0)),
        ],
        out_specs=pl.BlockSpec((row_blk, Dm), lambda i: (i, 0)),
        compiler_params=pltpu.CompilerParams(dimension_semantics=("parallel",)),
    )(x, nw.reshape(1, Dm), wgu, wd)


def _attn_kernel(qkv_ref, cos_ref, sin_ref, pad_ref, o_ref, *,
                 scale, n_heads, dh, seq, d_model):
    # qkv_ref: [S, 3D] bf16 ; cos/sin: [S, Dh] f32 ; pad: [1, S] additive f32
    # Output is lane-dense [S, D]: heads folded back onto the 128-lane axis.
    cos = cos_ref[...]
    sin = sin_ref[...]

    # Causal mask built in-kernel (no [B,1,S,S] HBM mask).
    row = jax.lax.broadcasted_iota(jnp.int32, (seq, seq), 0)
    col = jax.lax.broadcasted_iota(jnp.int32, (seq, seq), 1)
    causal = jnp.where(col > row, MASK_MIN, 0.0).astype(jnp.float32)
    mask = jnp.maximum(causal + pad_ref[...].astype(jnp.float32), MASK_MIN)

    qkv = qkv_ref[...]                       # [S, 3D] bf16, one lane-dense load
    qkv32 = qkv.astype(jnp.float32)

    def rot_half(x):
        x1 = x[:, : dh // 2]
        x2 = x[:, dh // 2:]
        return jnp.concatenate([-x2, x1], axis=-1)

    outs = []
    for h in range(n_heads):                 # small static unroll (H=4)
        qh = qkv32[:, h * dh:(h + 1) * dh]
        kh = qkv32[:, d_model + h * dh: d_model + (h + 1) * dh]
        vh = qkv[:, 2 * d_model + h * dh: 2 * d_model + (h + 1) * dh]   # bf16

        # RoPE in f32.
        qh = qh * cos + rot_half(qh) * sin
        kh = kh * cos + rot_half(kh) * sin

        # scores = q @ k^T without materializing a transpose.
        scores = jax.lax.dot_general(
            qh.astype(jnp.bfloat16), kh.astype(jnp.bfloat16),
            (((1,), (1,)), ((), ())),
            preferred_element_type=jnp.float32) * scale
        scores = scores + mask

        m = jnp.max(scores, axis=-1, keepdims=True)
        p = jnp.exp(scores - m)
        l = jnp.sum(p, axis=-1, keepdims=True)
        oh = jax.lax.dot_general(
            p.astype(jnp.bfloat16), vh,
            (((1,), (0,)), ((), ())),
            preferred_element_type=jnp.float32)
        outs.append(oh * pl.reciprocal(l, approx=True))

    o_ref[...] = jnp.concatenate(outs, axis=-1).astype(o_ref.dtype)   # [S, D]


def pallas_attention(qkv, cos, sin, pad):
    # qkv: [B, S, 3D] bf16 ; cos/sin: [S, Dh] f32 ; pad: [B, 1, S] f32
    B, S, threeD = qkv.shape
    d_model = threeD // 3
    scale = 1.0 / math.sqrt(DH)
    return pl.pallas_call(
        functools.partial(_attn_kernel, scale=scale, n_heads=N_HEADS,
                          dh=DH, seq=S, d_model=d_model),
        out_shape=jax.ShapeDtypeStruct((B, S, d_model), qkv.dtype),
        grid=(B,),
        in_specs=[
            pl.BlockSpec((None, S, threeD), lambda b: (b, 0, 0)),
            pl.BlockSpec((S, DH), lambda b: (0, 0)),
            pl.BlockSpec((S, DH), lambda b: (0, 0)),
            pl.BlockSpec((None, 1, S), lambda b: (b, 0, 0)),
        ],
        out_specs=pl.BlockSpec((None, S, d_model), lambda b: (b, 0, 0)),
        compiler_params=pltpu.CompilerParams(dimension_semantics=("parallel",)),
    )(qkv, cos, sin, pad)


# ----------------------------- model -----------------------------
def init_params(key):
    def dense(k, shape, dtype=jnp.bfloat16):
        return (0.02 * jax.random.normal(k, shape, dtype=jnp.float32)).astype(dtype)

    keys = jax.random.split(key, 2 + 8 * N_LAYERS)
    params = {
        "embed_tokens": (0.02 * jax.random.normal(keys[0], (VOCAB, D),
                                                  dtype=jnp.float32)),
        "lm_head": dense(keys[1], (D, VOCAB)),
        "final_norm": jnp.ones((D,), jnp.float32),
        "layers": [],
    }
    ki = 2
    for _ in range(N_LAYERS):
        wq = dense(keys[ki + 0], (D, D))
        wk = dense(keys[ki + 1], (D, D))
        wv = dense(keys[ki + 2], (D, D))
        layer = {
            "input_norm": jnp.ones((D,), jnp.float32),
            "post_norm": jnp.ones((D,), jnp.float32),
            "wqkv": jnp.concatenate([wq, wk, wv], axis=1),               # [D, 3D]
            "wo": dense(keys[ki + 3], (D, D)),
            "wgu": jnp.concatenate([dense(keys[ki + 4], (D, INTER)),
                                    dense(keys[ki + 5], (D, INTER))],
                                   axis=1),                              # [D, 2I]
            "wd": dense(keys[ki + 6], (INTER, D)),
        }
        ki += 8
        params["layers"].append(layer)
    return params


def deepseek_wrapper_forward(params, input_ids, attention_mask=None,
                             past_key_values=None):
    B, S = input_ids.shape
    past_len = 0 if past_key_values is None else past_key_values[0][0].shape[-2]
    # TODO(synk): KV-cache concat for past_key_values is not implemented (None here).

    # inputs_embeds = self.embed_tokens(input_tensor)  (gather stays in JAX)
    inputs_embeds = jnp.take(params["embed_tokens"], input_ids, axis=0)   # [B,S,D]

    # Padding component of the HF 4D causal mask; the causal triangle itself is
    # generated inside the attention kernel.
    if attention_mask is not None:
        pad = (1.0 - attention_mask.astype(jnp.float32)) * MASK_MIN
    else:
        pad = jnp.zeros((B, S), jnp.float32)
    pad = pad.reshape(B, 1, S)

    # RoPE tables: computed once per forward, shared by all layers.
    positions = jnp.arange(past_len, past_len + S, dtype=jnp.float32)
    inv_freq = 1.0 / (ROPE_BASE ** (jnp.arange(0, DH, 2, dtype=jnp.float32) / DH))
    freqs = positions[:, None] * inv_freq[None, :]          # [S, Dh/2]
    emb = jnp.concatenate([freqs, freqs], axis=-1)          # [S, Dh]
    cos = jnp.cos(emb)
    sin = jnp.sin(emb)

    M = B * S
    row_blk = M // 2 if (M % 2 == 0 and (M // 2) % 8 == 0) else M

    h = inputs_embeds.reshape(M, D).astype(jnp.float32)     # residual stream f32
    for layer in params["layers"]:
        # --- self attention: fused norm+QKV, fused attn, fused wo+residual ---
        qkv = norm_matmul(h, layer["input_norm"], layer["wqkv"],
                          jnp.bfloat16, row_blk)            # [M, 3D] bf16
        attn = pallas_attention(qkv.reshape(B, S, 3 * D), cos, sin, pad)  # [B,S,D]
        h = proj_residual(attn.reshape(M, D), layer["wo"], h, row_blk)
        # --- MLP: fused norm + gate/up + SiLU + down + residual ---
        h = norm_mlp(h, layer["post_norm"], layer["wgu"], layer["wd"], row_blk)

    # Final norm fused with the lm_head matmul.
    logits = norm_matmul(h, params["final_norm"], params["lm_head"],
                         jnp.float32, row_blk)              # [M, VOCAB] f32
    return logits.reshape(B, S, VOCAB)


# ----------------------------- main -----------------------------
if __name__ == "__main__":
    key = jax.random.PRNGKey(0)
    pkey, tkey = jax.random.split(key)
    params = init_params(pkey)

    B, S = 2, 16
    input_ids = jax.random.randint(tkey, (B, S), 0, VOCAB, dtype=jnp.int32)
    attention_mask = jnp.ones((B, S), dtype=jnp.int32)

    fwd = jax.jit(deepseek_wrapper_forward)
    logits = fwd(params, input_ids, attention_mask)
    jax.block_until_ready(logits)

    assert logits.shape == (B, S, VOCAB)
    assert logits.dtype == jnp.float32
    assert bool(jnp.all(jnp.isfinite(logits)))
    print("KERNEL_OK")
</pallas_src>

<mosaic_0001>
module attributes {stable_mosaic.version = 11 : i64} {
  func.func @_norm_matmul_kernel(%arg0: i32, %arg1: memref<16x128xf32, #tpu.memory_space<vmem>>, %arg2: memref<1x128xf32, #tpu.memory_space<vmem>>, %arg3: memref<128x384xbf16, #tpu.memory_space<vmem>>, %arg4: memref<16x384xbf16, #tpu.memory_space<vmem>>) attributes {dimension_semantics = [#tpu.dimension_semantics<parallel>], iteration_bounds = array<i64: 2>, scalar_prefetch = 0 : i64, scratch_operands = 0 : i64, tpu.core_type = #tpu.core_type<tc>, window_params = [{transform_indices = @transform_0, window_bounds = array<i64: 16, 128>}, {pipeline_mode = #tpu.pipeline_mode<synchronous>, transform_indices = @transform_1, window_bounds = array<i64: 1, 128>}, {pipeline_mode = #tpu.pipeline_mode<synchronous>, transform_indices = @transform_2, window_bounds = array<i64: 128, 384>}, {transform_indices = @transform_3, window_bounds = array<i64: 16, 384>}]} {
    %c0 = arith.constant 0 : index
    %c0_0 = arith.constant 0 : index
    %0 = vector.load %arg1[%c0, %c0_0] : memref<16x128xf32, #tpu.memory_space<vmem>>, vector<16x128xf32>
    %c0_1 = arith.constant 0 : index
    %c0_2 = arith.constant 0 : index
    %1 = vector.load %arg2[%c0_1, %c0_2] : memref<1x128xf32, #tpu.memory_space<vmem>>, vector<1x128xf32>
    %2 = arith.mulf %0, %0 : vector<16x128xf32>
    %cst = arith.constant dense<0.000000e+00> : vector<16xf32>
    %3 = vector.multi_reduction <add>, %2, %cst [1] : vector<16x128xf32> to vector<16xf32>
    %4 = vector.shape_cast %3 : vector<16xf32> to vector<16x1xf32>
    %cst_3 = arith.constant 1.280000e+02 : f32
    %5 = vector.broadcast %cst_3 : f32 to vector<16x1xf32>
    %6 = arith.divf %4, %5 : vector<16x1xf32>
    %cst_4 = arith.constant 9.99999997E-7 : f32
    %7 = vector.broadcast %cst_4 : f32 to vector<16x1xf32>
    %8 = arith.addf %6, %7 : vector<16x1xf32>
    %9 = math.rsqrt %8 : vector<16x1xf32>
    %10 = vector.broadcast %9 : vector<16x1xf32> to vector<16x128xf32>
    %11 = arith.mulf %0, %10 : vector<16x128xf32>
    %12 = vector.broadcast %1 : vector<1x128xf32> to vector<16x128xf32>
    %13 = arith.mulf %11, %12 : vector<16x128xf32>
    %14 = arith.truncf %13 : vector<16x128xf32> to vector<16x128xbf16>
    %c0_5 = arith.constant 0 : index
    %c0_6 = arith.constant 0 : index
    %15 = vector.load %arg3[%c0_5, %c0_6] : memref<128x384xbf16, #tpu.memory_space<vmem>>, vector<128x384xbf16>
    %cst_7 = arith.constant dense<0.000000e+00> : vector<16x384xf32>
    %16 = tpu.matmul %14, %15, %cst_7 {dimension_numbers = #tpu.dot_dimension_numbers<[1], [0], [0], [1], [0, 0, 1, 1], [], []>} : vector<16x128xbf16>, vector<128x384xbf16>, vector<16x384xf32> -> vector<16x384xf32>
    %17 = arith.truncf %16 : vector<16x384xf32> to vector<16x384xbf16>
    %c0_8 = arith.constant 0 : index
    %c0_9 = arith.constant 0 : index
    %18 = vector.load %arg4[%c0_8, %c0_9] : memref<16x384xbf16, #tpu.memory_space<vmem>>, vector<16x384xbf16>
    tpu.vector_store %arg4[%c0_8, %c0_9], %17 {strides = array<i32>} : memref<16x384xbf16, #tpu.memory_space<vmem>>, vector<16x384xbf16>,
    return
  }
  func.func @transform_0(%arg0: i32) -> (i32, i32) {
    %c0_i32 = arith.constant 0 : i32
    %c0_i32_0 = arith.constant 0 : i32
    return %arg0, %c0_i32 : i32, i32
  }
  func.func @transform_1(%arg0: i32) -> (i32, i32) {
    %c0_i32 = arith.constant 0 : i32
    %c0_i32_0 = arith.constant 0 : i32
    %c0_i32_1 = arith.constant 0 : i32
    return %c0_i32, %c0_i32_0 : i32, i32
  }
  func.func @transform_2(%arg0: i32) -> (i32, i32) {
    %c0_i32 = arith.constant 0 : i32
    %c0_i32_0 = arith.constant 0 : i32
    %c0_i32_1 = arith.constant 0 : i32
    return %c0_i32, %c0_i32_0 : i32, i32
  }
  func.func @transform_3(%arg0: i32) -> (i32, i32) {
    %c0_i32 = arith.constant 0 : i32
    %c0_i32_0 = arith.constant 0 : i32
    return %arg0, %c0_i32 : i32, i32
  }
}

module attributes {stable_mosaic.version = 11 : i64} {
  func.func @_attn_kernel(%arg0: i32, %arg1: memref<1x16x384xbf16, #tpu.memory_space<vmem>>, %arg2: memref<16x32xf32, #tpu.memory_space<vmem>>, %arg3: memref<16x32xf32, #tpu.memory_space<vmem>>, %arg4: memref<1x1x16xf32, #tpu.memory_space<vmem>>, %arg5: memref<1x16x128xbf16, #tpu.memory_space<vmem>>) attributes {dimension_semantics = [#tpu.dimension_semantics<parallel>], iteration_bounds = array<i64: 2>, scalar_prefetch = 0 : i64, scratch_operands = 0 : i64, tpu.core_type = #tpu.core_type<tc>, window_params = [{transform_indices = @transform_0, window_bounds = array<i64: 1, 16, 384>}, {pipeline_mode = #tpu.pipeline_mode<synchronous>, transform_indices = @transform_1, window_bounds = array<i64: 16, 32>}, {pipeline_mode = #tpu.pipeline_mode<synchronous>, transform_indices = @transform_2, window_bounds = array<i64: 16, 32>}, {transform_indices = @transform_3, window_bounds = array<i64: 1, 1, 16>}, {transform_indices = @transform_4, window_bounds = array<i64: 1, 16, 128>}]} {
    %c0 = arith.constant 0 : index
    %c0_0 = arith.constant 0 : index
    %0 = vector.load %arg2[%c0, %c0_0] : memref<16x32xf32, #tpu.memory_space<vmem>>, vector<16x32xf32>
    %c0_1 = arith.constant 0 : index
    %c0_2 = arith.constant 0 : index
    %1 = vector.load %arg3[%c0_1, %c0_2] : memref<16x32xf32, #tpu.memory_space<vmem>>, vector<16x32xf32>
    %2 = tpu.iota {dimensions = array<i32: 0>} : vector<16x16xi32>
    %3 = tpu.iota {dimensions = array<i32: 1>} : vector<16x16xi32>
    %4 = arith.cmpi sgt, %3, %2 : vector<16x16xi32>
    %cst = arith.constant -3.40282347E+38 : f32
    %cst_3 = arith.constant 0.000000e+00 : f32
    %5 = vector.broadcast %cst : f32 to vector<16x16xf32>
    %6 = vector.broadcast %cst_3 : f32 to vector<16x16xf32>
    %7 = arith.select %4, %5, %6 : vector<16x16xi1>, vector<16x16xf32>
    %c0_4 = arith.constant 0 : index
    %c0_5 = arith.constant 0 : index
    %c0_6 = arith.constant 0 : index
    %8 = vector.load %arg4[%c0_4, %c0_5, %c0_6] : memref<1x1x16xf32, #tpu.memory_space<vmem>>, vector<1x1x16xf32>
    %9 = vector.shape_cast %8 : vector<1x1x16xf32> to vector<1x16xf32>
    %10 = vector.broadcast %9 : vector<1x16xf32> to vector<16x16xf32>
    %11 = arith.addf %7, %10 : vector<16x16xf32>
    %cst_7 = arith.constant -3.40282347E+38 : f32
    %12 = vector.broadcast %cst_7 : f32 to vector<16x16xf32>
    %13 = arith.maximumf %11, %12 : vector<16x16xf32>
    %c0_8 = arith.constant 0 : index
    %c0_9 = arith.constant 0 : index
    %c0_10 = arith.constant 0 : index
    %14 = vector.load %arg1[%c0_8, %c0_9, %c0_10] : memref<1x16x384xbf16, #tpu.memory_space<vmem>>, vector<1x16x384xbf16>
    %15 = vector.shape_cast %14 : vector<1x16x384xbf16> to vector<16x384xbf16>
    %16 = arith.extf %15 : vector<16x384xbf16> to vector<16x384xf32>
    %17 = vector.extract_strided_slice %16 {offsets = [0, 0], sizes = [16, 32], strides = [1, 1]} : vector<16x384xf32> to vector<16x32xf32>
    %18 = vector.extract_strided_slice %16 {offsets = [0, 128], sizes = [16, 32], strides = [1, 1]} : vector<16x384xf32> to vector<16x32xf32>
    %19 = vector.extract_strided_slice %15 {offsets = [0, 256], sizes = [16, 32], strides = [1, 1]} : vector<16x384xbf16> to vector<16x32xbf16>
    %20 = arith.mulf %17, %0 : vector<16x32xf32>
    %21 = vector.extract_strided_slice %17 {offsets = [0, 0], sizes = [16, 16], strides = [1, 1]} : vector<16x32xf32> to vector<16x16xf32>
    %22 = vector.extract_strided_slice %17 {offsets = [0, 16], sizes = [16, 16], strides = [1, 1]} : vector<16x32xf32> to vector<16x16xf32>
    %cst_11 = arith.constant 0.000000e+00 : f32
    %23 = vector.broadcast %cst_11 : f32 to vector<16x16xf32>
    %24 = arith.subf %23, %22 : vector<16x16xf32>
    %25 = tpu.concatenate %24, %21 in 1 : vector<16x16xf32>, vector<16x16xf32> -> vector<16x32xf32>
    %26 = arith.mulf %25, %1 : vector<16x32xf32>
    %27 = arith.addf %20, %26 : vector<16x32xf32>
    %28 = arith.mulf %18, %0 : vector<16x32xf32>
    %29 = vector.extract_strided_slice %18 {offsets = [0, 0], sizes = [16, 16], strides = [1, 1]} : vector<16x32xf32> to vector<16x16xf32>
    %30 = vector.extract_strided_slice %18 {offsets = [0, 16], sizes = [16, 16], strides = [1, 1]} : vector<16x32xf32> to vector<16x16xf32>
    %cst_12 = arith.constant 0.000000e+00 : f32
    %31 = vector.broadcast %cst_12 : f32 to vector<16x16xf32>
    %32 = arith.subf %31, %30 : vector<16x16xf32>
    %33 = tpu.concatenate %32, %29 in 1 : vector<16x16xf32>, vector<16x16xf32> -> vector<16x32xf32>
    %34 = arith.mulf %33, %1 : vector<16x32xf32>
    %35 = arith.addf %28, %34 : vector<16x32xf32>
    %36 = arith.truncf %27 : vector<16x32xf32> to vector<16x32xbf16>
    %37 = arith.truncf %35 : vector<16x32xf32> to vector<16x32xbf16>
    %cst_13 = arith.constant dense<0.000000e+00> : vector<16x16xf32>
    %38 = tpu.matmul %36, %37, %cst_13 {dimension_numbers = #tpu.dot_dimension_numbers<[1], [1], [0], [0], [0, 0, 1, 0], [], []>} : vector<16x32xbf16>, vector<16x32xbf16>, vector<16x16xf32> -> vector<16x16xf32>
    %cst_14 = arith.constant 0.176776692 : f32
    %39 = vector.broadcast %cst_14 : f32 to vector<16x16xf32>
    %40 = arith.mulf %38, %39 : vector<16x16xf32>
    %41 = arith.addf %40, %13 : vector<16x16xf32>
    %cst_15 = arith.constant dense<0xFF800000> : vector<16xf32>
    %42 = vector.multi_reduction <maximumf>, %41, %cst_15 [1] : vector<16x16xf32> to vector<16xf32>
    %43 = vector.shape_cast %42 : vector<16xf32> to vector<16x1xf32>
    %44 = vector.broadcast %43 : vector<16x1xf32> to vector<16x16xf32>
    %45 = arith.subf %41, %44 : vector<16x16xf32>
    %46 = math.exp %45 : vector<16x16xf32>
    %cst_16 = arith.constant dense<0.000000e+00> : vector<16xf32>
    %47 = vector.multi_reduction <add>, %46, %cst_16 [1] : vector<16x16xf32> to vector<16xf32>
    %48 = vector.shape_cast %47 : vector<16xf32> to vector<16x1xf32>
    %49 = arith.truncf %46 : vector<16x16xf32> to vector<16x16xbf16>
    %cst_17 = arith.constant dense<0.000000e+00> : vector<16x32xf32>
    %50 = tpu.matmul %49, %19, %cst_17 {dimension_numbers = #tpu.dot_dimension_numbers<[1], [0], [0], [1], [0, 0, 1, 1], [], []>} : vector<16x16xbf16>, vector<16x32xbf16>, vector<16x32xf32> -> vector<16x32xf32>
    %51 = tpu.reciprocal %48 {approx = true} : vector<16x1xf32> -> vector<16x1xf32>
    %52 = vector.broadcast %51 : vector<16x1xf32> to vector<16x32xf32>
    %53 = arith.mulf %50, %52 : vector<16x32xf32>
    %54 = vector.extract_strided_slice %16 {offsets = [0, 32], sizes = [16, 32], strides = [1, 1]} : vector<16x384xf32> to vector<16x32xf32>
    %55 = vector.extract_strided_slice %16 {offsets = [0, 160], sizes = [16, 32], strides = [1, 1]} : vector<16x384xf32> to vector<16x32xf32>
    %56 = vector.extract_strided_slice %15 {offsets = [0, 288], sizes = [16, 32], strides = [1, 1]} : vector<16x384xbf16> to vector<16x32xbf16>
    %57 = arith.mulf %54, %0 : vector<16x32xf32>
    %58 = vector.extract_strided_slice %54 {offsets = [0, 0], sizes = [16, 16], strides = [1, 1]} : vector<16x32xf32> to vector<16x16xf32>
    %59 = vector.extract_strided_slice %54 {offsets = [0, 16], sizes = [16, 16], strides = [1, 1]} : vector<16x32xf32> to vector<16x16xf32>
    %cst_18 = arith.constant 0.000000e+00 : f32
    %60 = vector.broadcast %cst_18 : f32 to vector<16x16xf32>
    %61 = arith.subf %60, %59 : vector<16x16xf32>
    %62 = tpu.concatenate %61, %58 in 1 : vector<16x16xf32>, vector<16x16xf32> -> vector<16x32xf32>
    %63 = arith.mulf %62, %1 : vector<16x32xf32>
    %64 = arith.addf %57, %63 : vector<16x32xf32>
    %65 = arith.mulf %55, %0 : vector<16x32xf32>
    %66 = vector.extract_strided_slice %55 {offsets = [0, 0], sizes = [16, 16], strides = [1, 1]} : vector<16x32xf32> to vector<16x16xf32>
    %67 = vector.extract_strided_slice %55 {offsets = [0, 16], sizes = [16, 16], strides = [1, 1]} : vector<16x32xf32> to vector<16x16xf32>
    %cst_19 = arith.constant 0.000000e+00 : f32
    %68 = vector.broadcast %cst_19 : f32 to vector<16x16xf32>
    %69 = arith.subf %68, %67 : vector<16x16xf32>
    %70 = tpu.concatenate %69, %66 in 1 : vector<16x16xf32>, vector<16x16xf32> -> vector<16x32xf32>
    %71 = arith.mulf %70, %1 : vector<16x32xf32>
    %72 = arith.addf %65, %71 : vector<16x32xf32>
    %73 = arith.truncf %64 : vector<16x32xf32> to vector<16x32xbf16>
    %74 = arith.truncf %72 : vector<16x32xf32> to vector<16x32xbf16>
    %cst_20 = arith.constant dense<0.000000e+00> : vector<16x16xf32>
    %75 = tpu.matmul %73, %74, %cst_20 {dimension_numbers = #tpu.dot_dimension_numbers<[1], [1], [0], [0], [0, 0, 1, 0], [], []>} : vector<16x32xbf16>, vector<16x32xbf16>, vector<16x16xf32> -> vector<16x16xf32>
    %cst_21 = arith.constant 0.176776692 : f32
    %76 = vector.broadcast %cst_21 : f32 to vector<16x16xf32>
    %77 = arith.mulf %75, %76 : vector<16x16xf32>
    %78 = arith.addf %77, %13 : vector<16x16xf32>
    %cst_22 = arith.constant dense<0xFF800000> : vector<16xf32>
    %79 = vector.multi_reduction <maximumf>, %78, %cst_22 [1] : vector<16x16xf32> to vector<16xf32>
    %80 = vector.shape_cast %79 : vector<16xf32> to vector<16x1xf32>
    %81 = vector.broadcast %80 : vector<16x1xf32> to vector<16x16xf32>
    %82 = arith.subf %78, %81 : vector<16x16xf32>
    %83 = math.exp %82 : vector<16x16xf32>
    %cst_23 = arith.constant dense<0.000000e+00> : vector<16xf32>
    %84 = vector.multi_reduction <add>, %83, %cst_23 [1] : vector<16x16xf32> to vector<16xf32>
    %85 = vector.shape_cast %84 : vector<16xf32> to vector<16x1xf32>
    %86 = arith.truncf %83 : vector<16x16xf32> to vector<16x16xbf16>
    %cst_24 = arith.constant dense<0.000000e+00> : vector<16x32xf32>
    %87 = tpu.matmul %86, %56, %cst_24 {dimension_numbers = #tpu.dot_dimension_numbers<[1], [0], [0], [1], [0, 0, 1, 1], [], []>} : vector<16x16xbf16>, vector<16x32xbf16>, vector<16x32xf32> -> vector<16x32xf32>
    %88 = tpu.reciprocal %85 {approx = true} : vector<16x1xf32> -> vector<16x1xf32>
    %89 = vector.broadcast %88 : vector<16x1xf32> to vector<16x32xf32>
    %90 = arith.mulf %87, %89 : vector<16x32xf32>
    %91 = vector.extract_strided_slice %16 {offsets = [0, 64], sizes = [16, 32], strides = [1, 1]} : vector<16x384xf32> to vector<16x32xf32>
    %92 = vector.extract_strided_slice %16 {offsets = [0, 192], sizes = [16, 32], strides = [1, 1]} : vector<16x384xf32> to vector<16x32xf32>
    %93 = vector.extract_strided_slice %15 {offsets = [0, 320], sizes = [16, 32], strides = [1, 1]} : vector<16x384xbf16> to vector<16x32xbf16>
    %94 = arith.mulf %91, %0 : vector<16x32xf32>
    %95 = vector.extract_strided_slice %91 {offsets = [0, 0], sizes = [16, 16], strides = [1, 1]} : vector<16x32xf32> to vector<16x16xf32>
    %96 = vector.extract_strided_slice %91 {offsets = [0, 16], sizes = [16, 16], strides = [1, 1]} : vector<16x32xf32> to vector<16x16xf32>
    %cst_25 = arith.constant 0.000000e+00 : f32
    %97 = vector.broadcast %cst_25 : f32 to vector<16x16xf32>
    %98 = arith.subf %97, %96 : vector<16x16xf32>
    %99 = tpu.concatenate %98, %95 in 1 : vector<16x16xf32>, vector<16x16xf32> -> vector<16x32xf32>
    %100 = arith.mulf %99, %1 : vector<16x32xf32>
    %101 = arith.addf %94, %100 : vector<16x32xf32>
    %102 = arith.mulf %92, %0 : vector<16x32xf32>
    %103 = vector.extract_strided_slice %92 {offsets = [0, 0], sizes = [16, 16], strides = [1, 1]} : vector<16x32xf32> to vector<16x16xf32>
    %104 = vector.extract_strided_slice %92 {offsets = [0, 16], sizes = [16, 16], strides = [1, 1]} : vector<16x32xf32> to vector<16x16xf32>
    %cst_26 = arith.constant 0.000000e+00 : f32
    %105 = vector.broadcast %cst_26 : f32 to vector<16x16xf32>
    %106 = arith.subf %105, %104 : vector<16x16xf32>
    %107 = tpu.concatenate %106, %103 in 1 : vector<16x16xf32>, vector<16x16xf32> -> vector<16x32xf32>
    %108 = arith.mulf %107, %1 : vector<16x32xf32>
    %109 = arith.addf %102, %108 : vector<16x32xf32>
    %110 = arith.truncf %101 : vector<16x32xf32> to vector<16x32xbf16>
    %111 = arith.truncf %109 : vector<16x32xf32> to vector<16x32xbf16>
    %cst_27 = arith.constant dense<0.000000e+00> : vector<16x16xf32>
    %112 = tpu.matmul %110, %111, %cst_27 {dimension_numbers = #tpu.dot_dimension_numbers<[1], [1], [0], [0], [0, 0, 1, 0], [], []>} : vector<16x32xbf16>, vector<16x32xbf16>, vector<16x16xf32> -> vector<16x16xf32>
    %cst_28 = arith.constant 0.176776692 : f32
    %113 = vector.broadcast %cst_28 : f32 to vector<16x16xf32>
    %114 = arith.mulf %112, %113 : vector<16x16xf32>
    %115 = arith.addf %114, %13 : vector<16x16xf32>
    %cst_29 = arith.constant dense<0xFF800000> : vector<16xf32>
    %116 = vector.multi_reduction <maximumf>, %115, %cst_29 [1] : vector<16x16xf32> to vector<16xf32>
    %117 = vector.shape_cast %116 : vector<16xf32> to vector<16x1xf32>
    %118 = vector.broadcast %117 : vector<16x1xf32> to vector<16x16xf32>
    %119 = arith.subf %115, %118 : vector<16x16xf32>
    %120 = math.exp %119 : vector<16x16xf32>
    %cst_30 = arith.constant dense<0.000000e+00> : vector<16xf32>
    %121 = vector.multi_reduction <add>, %120, %cst_30 [1] : vector<16x16xf32> to vector<16xf32>
    %122 = vector.shape_cast %121 : vector<16xf32> to vector<16x1xf32>
    %123 = arith.truncf %120 : vector<16x16xf32> to vector<16x16xbf16>
    %cst_31 = arith.constant dense<0.000000e+00> : vector<16x32xf32>
    %124 = tpu.matmul %123, %93, %cst_31 {dimension_numbers = #tpu.dot_dimension_numbers<[1], [0], [0], [1], [0, 0, 1, 1], [], []>} : vector<16x16xbf16>, vector<16x32xbf16>, vector<16x32xf32> -> vector<16x32xf32>
    %125 = tpu.reciprocal %122 {approx = true} : vector<16x1xf32> -> vector<16x1xf32>
    %126 = vector.broadcast %125 : vector<16x1xf32> to vector<16x32xf32>
    %127 = arith.mulf %124, %126 : vector<16x32xf32>
    %128 = vector.extract_strided_slice %16 {offsets = [0, 96], sizes = [16, 32], strides = [1, 1]} : vector<16x384xf32> to vector<16x32xf32>
    %129 = vector.extract_strided_slice %16 {offsets = [0, 224], sizes = [16, 32], strides = [1, 1]} : vector<16x384xf32> to vector<16x32xf32>
    %130 = vector.extract_strided_slice %15 {offsets = [0, 352], sizes = [16, 32], strides = [1, 1]} : vector<16x384xbf16> to vector<16x32xbf16>
    %131 = arith.mulf %128, %0 : vector<16x32xf32>
    %132 = vector.extract_strided_slice %128 {offsets = [0, 0], sizes = [16, 16], strides = [1, 1]} : vector<16x32xf32> to vector<16x16xf32>
    %133 = vector.extract_strided_slice %128 {offsets = [0, 16], sizes = [16, 16], strides = [1, 1]} : vector<16x32xf32> to vector<16x16xf32>
    %cst_32 = arith.constant 0.000000e+00 : f32
    %134 = vector.broadcast %cst_32 : f32 to vector<16x16xf32>
    %135 = arith.subf %134, %133 : vector<16x16xf32>
    %136 = tpu.concatenate %135, %132 in 1 : vector<16x16xf32>, vector<16x16xf32> -> vector<16x32xf32>
    %137 = arith.mulf %136, %1 : vector<16x32xf32>
    %138 = arith.addf %131, %137 : vector<16x32xf32>
    %139 = arith.mulf %129, %0 : vector<16x32xf32>
    %140 = vector.extract_strided_slice %129 {offsets = [0, 0], sizes = [16, 16], strides = [1, 1]} : vector<16x32xf32> to vector<16x16xf32>
    %141 = vector.extract_strided_slice %129 {offsets = [0, 16], sizes = [16, 16], strides = [1, 1]} : vector<16x32xf32> to vector<16x16xf32>
    %cst_33 = arith.constant 0.000000e+00 : f32
    %142 = vector.broadcast %cst_33 : f32 to vector<16x16xf32>
    %143 = arith.subf %142, %141 : vector<16x16xf32>
    %144 = tpu.concatenate %143, %140 in 1 : vector<16x16xf32>, vector<16x16xf32> -> vector<16x32xf32>
    %145 = arith.mulf %144, %1 : vector<16x32xf32>
    %146 = arith.addf %139, %145 : vector<16x32xf32>
    %147 = arith.truncf %138 : vector<16x32xf32> to vector<16x32xbf16>
    %148 = arith.truncf %146 : vector<16x32xf32> to vector<16x32xbf16>
    %cst_34 = arith.constant dense<0.000000e+00> : vector<16x16xf32>
    %149 = tpu.matmul %147, %148, %cst_34 {dimension_numbers = #tpu.dot_dimension_numbers<[1], [1], [0], [0], [0, 0, 1, 0], [], []>} : vector<16x32xbf16>, vector<16x32xbf16>, vector<16x16xf32> -> vector<16x16xf32>
    %cst_35 = arith.constant 0.176776692 : f32
    %150 = vector.broadcast %cst_35 : f32 to vector<16x16xf32>
    %151 = arith.mulf %149, %150 : vector<16x16xf32>
    %152 = arith.addf %151, %13 : vector<16x16xf32>
    %cst_36 = arith.constant dense<0xFF800000> : vector<16xf32>
    %153 = vector.multi_reduction <maximumf>, %152, %cst_36 [1] : vector<16x16xf32> to vector<16xf32>
    %154 = vector.shape_cast %153 : vector<16xf32> to vector<16x1xf32>
    %155 = vector.broadcast %154 : vector<16x1xf32> to vector<16x16xf32>
    %156 = arith.subf %152, %155 : vector<16x16xf32>
    %157 = math.exp %156 : vector<16x16xf32>
    %cst_37 = arith.constant dense<0.000000e+00> : vector<16xf32>
    %158 = vector.multi_reduction <add>, %157, %cst_37 [1] : vector<16x16xf32> to vector<16xf32>
    %159 = vector.shape_cast %158 : vector<16xf32> to vector<16x1xf32>
    %160 = arith.truncf %157 : vector<16x16xf32> to vector<16x16xbf16>
    %cst_38 = arith.constant dense<0.000000e+00> : vector<16x32xf32>
    %161 = tpu.matmul %160, %130, %cst_38 {dimension_numbers = #tpu.dot_dimension_numbers<[1], [0], [0], [1], [0, 0, 1, 1], [], []>} : vector<16x16xbf16>, vector<16x32xbf16>, vector<16x32xf32> -> vector<16x32xf32>
    %162 = tpu.reciprocal %159 {approx = true} : vector<16x1xf32> -> vector<16x1xf32>
    %163 = vector.broadcast %162 : vector<16x1xf32> to vector<16x32xf32>
    %164 = arith.mulf %161, %163 : vector<16x32xf32>
    %165 = tpu.concatenate %53, %90, %127, %164 in 1 : vector<16x32xf32>, vector<16x32xf32>, vector<16x32xf32>, vector<16x32xf32> -> vector<16x128xf32>
    %166 = arith.truncf %165 : vector<16x128xf32> to vector<16x128xbf16>
    %c0_39 = arith.constant 0 : index
    %c0_40 = arith.constant 0 : index
    %c0_41 = arith.constant 0 : index
    %167 = vector.load %arg5[%c0_39, %c0_40, %c0_41] : memref<1x16x128xbf16, #tpu.memory_space<vmem>>, vector<1x16x128xbf16>
    %168 = vector.shape_cast %167 : vector<1x16x128xbf16> to vector<16x128xbf16>
    %169 = vector.shape_cast %166 : vector<16x128xbf16> to vector<1x16x128xbf16>
    tpu.vector_store %arg5[%c0_39, %c0_40, %c0_41], %169 {strides = array<i32>} : memref<1x16x128xbf16, #tpu.memory_space<vmem>>, vector<1x16x128xbf16>,
    return
  }
  func.func @transform_0(%arg0: i32) -> (i32, i32, i32) {
    %c0_i32 = arith.constant 0 : i32
    %c0_i32_0 = arith.constant 0 : i32
    %c0_i32_1 = arith.constant 0 : i32
    return %arg0, %c0_i32, %c0_i32_0 : i32, i32, i32
  }
  func.func @transform_1(%arg0: i32) -> (i32, i32) {
    %c0_i32 = arith.constant 0 : i32
    %c0_i32_0 = arith.constant 0 : i32
    %c0_i32_1 = arith.constant 0 : i32
    return %c0_i32, %c0_i32_0 : i32, i32
  }
  func.func @transform_2(%arg0: i32) -> (i32, i32) {
    %c0_i32 = arith.constant 0 : i32
    %c0_i32_0 = arith.constant 0 : i32
    %c0_i32_1 = arith.constant 0 : i32
    return %c0_i32, %c0_i32_0 : i32, i32
  }
  func.func @transform_3(%arg0: i32) -> (i32, i32, i32) {
    %c0_i32 = arith.constant 0 : i32
    %c0_i32_0 = arith.constant 0 : i32
    %c0_i32_1 = arith.constant 0 : i32
    return %arg0, %c0_i32, %c0_i32_0 : i32, i32, i32
  }
  func.func @transform_4(%arg0: i32) -> (i32, i32, i32) {
    %c0_i32 = arith.constant 0 : i32
    %c0_i32_0 = arith.constant 0 : i32
    %c0_i32_1 = arith.constant 0 : i32
    return %arg0, %c0_i32, %c0_i32_0 : i32, i32, i32
  }
}

module attributes {stable_mosaic.version = 11 : i64} {
  func.func @_proj_residual_kernel(%arg0: i32, %arg1: memref<16x128xbf16, #tpu.memory_space<vmem>>, %arg2: memref<128x128xbf16, #tpu.memory_space<vmem>>, %arg3: memref<16x128xf32, #tpu.memory_space<vmem>>, %arg4: memref<16x128xf32, #tpu.memory_space<vmem>>) attributes {dimension_semantics = [#tpu.dimension_semantics<parallel>], iteration_bounds = array<i64: 2>, scalar_prefetch = 0 : i64, scratch_operands = 0 : i64, tpu.core_type = #tpu.core_type<tc>, window_params = [{transform_indices = @transform_0, window_bounds = array<i64: 16, 128>}, {pipeline_mode = #tpu.pipeline_mode<synchronous>, transform_indices = @transform_1, window_bounds = array<i64: 128, 128>}, {transform_indices = @transform_2, window_bounds = array<i64: 16, 128>}, {transform_indices = @transform_3, window_bounds = array<i64: 16, 128>}]} {
    %c0 = arith.constant 0 : index
    %c0_0 = arith.constant 0 : index
    %0 = vector.load %arg3[%c0, %c0_0] : memref<16x128xf32, #tpu.memory_space<vmem>>, vector<16x128xf32>
    %c0_1 = arith.constant 0 : index
    %c0_2 = arith.constant 0 : index
    %1 = vector.load %arg1[%c0_1, %c0_2] : memref<16x128xbf16, #tpu.memory_space<vmem>>, vector<16x128xbf16>
    %c0_3 = arith.constant 0 : index
    %c0_4 = arith.constant 0 : index
    %2 = vector.load %arg2[%c0_3, %c0_4] : memref<128x128xbf16, #tpu.memory_space<vmem>>, vector<128x128xbf16>
    %cst = arith.constant dense<0.000000e+00> : vector<16x128xf32>
    %3 = tpu.matmul %1, %2, %cst {dimension_numbers = #tpu.dot_dimension_numbers<[1], [0], [0], [1], [0, 0, 1, 1], [], []>} : vector<16x128xbf16>, vector<128x128xbf16>, vector<16x128xf32> -> vector<16x128xf32>
    %4 = arith.addf %0, %3 : vector<16x128xf32>
    %c0_5 = arith.constant 0 : index
    %c0_6 = arith.constant 0 : index
    %5 = vector.load %arg4[%c0_5, %c0_6] : memref<16x128xf32, #tpu.memory_space<vmem>>, vector<16x128xf32>
    tpu.vector_store %arg4[%c0_5, %c0_6], %4 {strides = array<i32>} : memref<16x128xf32, #tpu.memory_space<vmem>>, vector<16x128xf32>,
    return
  }
  func.func @transform_0(%arg0: i32) -> (i32, i32) {
    %c0_i32 = arith.constant 0 : i32
    %c0_i32_0 = arith.constant 0 : i32
    return %arg0, %c0_i32 : i32, i32
  }
  func.func @transform_1(%arg0: i32) -> (i32, i32) {
    %c0_i32 = arith.constant 0 : i32
    %c0_i32_0 = arith.constant 0 : i32
    %c0_i32_1 = arith.constant 0 : i32
    return %c0_i32, %c0_i32_0 : i32, i32
  }
  func.func @transform_2(%arg0: i32) -> (i32, i32) {
    %c0_i32 = arith.constant 0 : i32
    %c0_i32_0 = arith.constant 0 : i32
    return %arg0, %c0_i32 : i32, i32
  }
  func.func @transform_3(%arg0: i32) -> (i32, i32) {
    %c0_i32 = arith.constant 0 : i32
    %c0_i32_0 = arith.constant 0 : i32
    return %arg0, %c0_i32 : i32, i32
  }
}

module attributes {stable_mosaic.version = 11 : i64} {
  func.func @_norm_mlp_kernel(%arg0: i32, %arg1: memref<16x128xf32, #tpu.memory_space<vmem>>, %arg2: memref<1x128xf32, #tpu.memory_space<vmem>>, %arg3: memref<128x512xbf16, #tpu.memory_space<vmem>>, %arg4: memref<256x128xbf16, #tpu.memory_space<vmem>>, %arg5: memref<16x128xf32, #tpu.memory_space<vmem>>) attributes {dimension_semantics = [#tpu.dimension_semantics<parallel>], iteration_bounds = array<i64: 2>, scalar_prefetch = 0 : i64, scratch_operands = 0 : i64, tpu.core_type = #tpu.core_type<tc>, window_params = [{transform_indices = @transform_0, window_bounds = array<i64: 16, 128>}, {pipeline_mode = #tpu.pipeline_mode<synchronous>, transform_indices = @transform_1, window_bounds = array<i64: 1, 128>}, {pipeline_mode = #tpu.pipeline_mode<synchronous>, transform_indices = @transform_2, window_bounds = array<i64: 128, 512>}, {pipeline_mode = #tpu.pipeline_mode<synchronous>, transform_indices = @transform_3, window_bounds = array<i64: 256, 128>}, {transform_indices = @transform_4, window_bounds = array<i64: 16, 128>}]} {
    %c0 = arith.constant 0 : index
    %c0_0 = arith.constant 0 : index
    %0 = vector.load %arg1[%c0, %c0_0] : memref<16x128xf32, #tpu.memory_space<vmem>>, vector<16x128xf32>
    %c0_1 = arith.constant 0 : index
    %c0_2 = arith.constant 0 : index
    %1 = vector.load %arg2[%c0_1, %c0_2] : memref<1x128xf32, #tpu.memory_space<vmem>>, vector<1x128xf32>
    %2 = arith.mulf %0, %0 : vector<16x128xf32>
    %cst = arith.constant dense<0.000000e+00> : vector<16xf32>
    %3 = vector.multi_reduction <add>, %2, %cst [1] : vector<16x128xf32> to vector<16xf32>
    %4 = vector.shape_cast %3 : vector<16xf32> to vector<16x1xf32>
    %cst_3 = arith.constant 1.280000e+02 : f32
    %5 = vector.broadcast %cst_3 : f32 to vector<16x1xf32>
    %6 = arith.divf %4, %5 : vector<16x1xf32>
    %cst_4 = arith.constant 9.99999997E-7 : f32
    %7 = vector.broadcast %cst_4 : f32 to vector<16x1xf32>
    %8 = arith.addf %6, %7 : vector<16x1xf32>
    %9 = math.rsqrt %8 : vector<16x1xf32>
    %10 = vector.broadcast %9 : vector<16x1xf32> to vector<16x128xf32>
    %11 = arith.mulf %0, %10 : vector<16x128xf32>
    %12 = vector.broadcast %1 : vector<1x128xf32> to vector<16x128xf32>
    %13 = arith.mulf %11, %12 : vector<16x128xf32>
    %14 = arith.truncf %13 : vector<16x128xf32> to vector<16x128xbf16>
    %c0_5 = arith.constant 0 : index
    %c0_6 = arith.constant 0 : index
    %15 = vector.load %arg3[%c0_5, %c0_6] : memref<128x512xbf16, #tpu.memory_space<vmem>>, vector<128x512xbf16>
    %cst_7 = arith.constant dense<0.000000e+00> : vector<16x512xf32>
    %16 = tpu.matmul %14, %15, %cst_7 {dimension_numbers = #tpu.dot_dimension_numbers<[1], [0], [0], [1], [0, 0, 1, 1], [], []>} : vector<16x128xbf16>, vector<128x512xbf16>, vector<16x512xf32> -> vector<16x512xf32>
    %17 = vector.extract_strided_slice %16 {offsets = [0, 0], sizes = [16, 256], strides = [1, 1]} : vector<16x512xf32> to vector<16x256xf32>
    %18 = vector.extract_strided_slice %16 {offsets = [0, 256], sizes = [16, 256], strides = [1, 1]} : vector<16x512xf32> to vector<16x256xf32>
    %19 = arith.negf %17 : vector<16x256xf32>
    %20 = math.exp %19 : vector<16x256xf32>
    %cst_8 = arith.constant 1.000000e+00 : f32
    %21 = vector.broadcast %cst_8 : f32 to vector<16x256xf32>
    %22 = arith.addf %21, %20 : vector<16x256xf32>
    %23 = arith.divf %21, %22 : vector<16x256xf32>
    %24 = arith.mulf %17, %23 : vector<16x256xf32>
    %25 = arith.mulf %24, %18 : vector<16x256xf32>
    %26 = arith.truncf %25 : vector<16x256xf32> to vector<16x256xbf16>
    %c0_9 = arith.constant 0 : index
    %c0_10 = arith.constant 0 : index
    %27 = vector.load %arg4[%c0_9, %c0_10] : memref<256x128xbf16, #tpu.memory_space<vmem>>, vector<256x128xbf16>
    %cst_11 = arith.constant dense<0.000000e+00> : vector<16x128xf32>
    %28 = tpu.matmul %26, %27, %cst_11 {dimension_numbers = #tpu.dot_dimension_numbers<[1], [0], [0], [1], [0, 0, 1, 1], [], []>} : vector<16x256xbf16>, vector<256x128xbf16>, vector<16x128xf32> -> vector<16x128xf32>
    %29 = arith.addf %0, %28 : vector<16x128xf32>
    %c0_12 = arith.constant 0 : index
    %c0_13 = arith.constant 0 : index
    %30 = vector.load %arg5[%c0_12, %c0_13] : memref<16x128xf32, #tpu.memory_space<vmem>>, vector<16x128xf32>
    tpu.vector_store %arg5[%c0_12, %c0_13], %29 {strides = array<i32>} : memref<16x128xf32, #tpu.memory_space<vmem>>, vector<16x128xf32>,
    return
  }
  func.func @transform_0(%arg0: i32) -> (i32, i32) {
    %c0_i32 = arith.constant 0 : i32
    %c0_i32_0 = arith.constant 0 : i32
    return %arg0, %c0_i32 : i32, i32
  }
  func.func @transform_1(%arg0: i32) -> (i32, i32) {
    %c0_i32 = arith.constant 0 : i32
    %c0_i32_0 = arith.constant 0 : i32
    %c0_i32_1 = arith.constant 0 : i32
    return %c0_i32, %c0_i32_0 : i32, i32
  }
  func.func @transform_2(%arg0: i32) -> (i32, i32) {
    %c0_i32 = arith.constant 0 : i32
    %c0_i32_0 = arith.constant 0 : i32
    %c0_i32_1 = arith.constant 0 : i32
    return %c0_i32, %c0_i32_0 : i32, i32
  }
  func.func @transform_3(%arg0: i32) -> (i32, i32) {
    %c0_i32 = arith.constant 0 : i32
    %c0_i32_0 = arith.constant 0 : i32
    %c0_i32_1 = arith.constant 0 : i32
    return %c0_i32, %c0_i32_0 : i32, i32
  }
  func.func @transform_4(%arg0: i32) -> (i32, i32) {
    %c0_i32 = arith.constant 0 : i32
    %c0_i32_0 = arith.constant 0 : i32
    return %arg0, %c0_i32 : i32, i32
  }
}

module attributes {stable_mosaic.version = 11 : i64} {
  func.func @_norm_matmul_kernel(%arg0: i32, %arg1: memref<16x128xf32, #tpu.memory_space<vmem>>, %arg2: memref<1x128xf32, #tpu.memory_space<vmem>>, %arg3: memref<128x256xbf16, #tpu.memory_space<vmem>>, %arg4: memref<16x256xf32, #tpu.memory_space<vmem>>) attributes {dimension_semantics = [#tpu.dimension_semantics<parallel>], iteration_bounds = array<i64: 2>, scalar_prefetch = 0 : i64, scratch_operands = 0 : i64, tpu.core_type = #tpu.core_type<tc>, window_params = [{transform_indices = @transform_0, window_bounds = array<i64: 16, 128>}, {pipeline_mode = #tpu.pipeline_mode<synchronous>, transform_indices = @transform_1, window_bounds = array<i64: 1, 128>}, {pipeline_mode = #tpu.pipeline_mode<synchronous>, transform_indices = @transform_2, window_bounds = array<i64: 128, 256>}, {transform_indices = @transform_3, window_bounds = array<i64: 16, 256>}]} {
    %c0 = arith.constant 0 : index
    %c0_0 = arith.constant 0 : index
    %0 = vector.load %arg1[%c0, %c0_0] : memref<16x128xf32, #tpu.memory_space<vmem>>, vector<16x128xf32>
    %c0_1 = arith.constant 0 : index
    %c0_2 = arith.constant 0 : index
    %1 = vector.load %arg2[%c0_1, %c0_2] : memref<1x128xf32, #tpu.memory_space<vmem>>, vector<1x128xf32>
    %2 = arith.mulf %0, %0 : vector<16x128xf32>
    %cst = arith.constant dense<0.000000e+00> : vector<16xf32>
    %3 = vector.multi_reduction <add>, %2, %cst [1] : vector<16x128xf32> to vector<16xf32>
    %4 = vector.shape_cast %3 : vector<16xf32> to vector<16x1xf32>
    %cst_3 = arith.constant 1.280000e+02 : f32
    %5 = vector.broadcast %cst_3 : f32 to vector<16x1xf32>
    %6 = arith.divf %4, %5 : vector<16x1xf32>
    %cst_4 = arith.constant 9.99999997E-7 : f32
    %7 = vector.broadcast %cst_4 : f32 to vector<16x1xf32>
    %8 = arith.addf %6, %7 : vector<16x1xf32>
    %9 = math.rsqrt %8 : vector<16x1xf32>
    %10 = vector.broadcast %9 : vector<16x1xf32> to vector<16x128xf32>
    %11 = arith.mulf %0, %10 : vector<16x128xf32>
    %12 = vector.broadcast %1 : vector<1x128xf32> to vector<16x128xf32>
    %13 = arith.mulf %11, %12 : vector<16x128xf32>
    %14 = arith.truncf %13 : vector<16x128xf32> to vector<16x128xbf16>
    %c0_5 = arith.constant 0 : index
    %c0_6 = arith.constant 0 : index
    %15 = vector.load %arg3[%c0_5, %c0_6] : memref<128x256xbf16, #tpu.memory_space<vmem>>, vector<128x256xbf16>
    %cst_7 = arith.constant dense<0.000000e+00> : vector<16x256xf32>
    %16 = tpu.matmul %14, %15, %cst_7 {dimension_numbers = #tpu.dot_dimension_numbers<[1], [0], [0], [1], [0, 0, 1, 1], [], []>} : vector<16x128xbf16>, vector<128x256xbf16>, vector<16x256xf32> -> vector<16x256xf32>
    %c0_8 = arith.constant 0 : index
    %c0_9 = arith.constant 0 : index
    %17 = vector.load %arg4[%c0_8, %c0_9] : memref<16x256xf32, #tpu.memory_space<vmem>>, vector<16x256xf32>
    tpu.vector_store %arg4[%c0_8, %c0_9], %16 {strides = array<i32>} : memref<16x256xf32, #tpu.memory_space<vmem>>, vector<16x256xf32>,
    return
  }
  func.func @transform_0(%arg0: i32) -> (i32, i32) {
    %c0_i32 = arith.constant 0 : i32
    %c0_i32_0 = arith.constant 0 : i32
    return %arg0, %c0_i32 : i32, i32
  }
  func.func @transform_1(%arg0: i32) -> (i32, i32) {
    %c0_i32 = arith.constant 0 : i32
    %c0_i32_0 = arith.constant 0 : i32
    %c0_i32_1 = arith.constant 0 : i32
    return %c0_i32, %c0_i32_0 : i32, i32
  }
  func.func @transform_2(%arg0: i32) -> (i32, i32) {
    %c0_i32 = arith.constant 0 : i32
    %c0_i32_0 = arith.constant 0 : i32
    %c0_i32_1 = arith.constant 0 : i32
    return %c0_i32, %c0_i32_0 : i32, i32
  }
  func.func @transform_3(%arg0: i32) -> (i32, i32) {
    %c0_i32 = arith.constant 0 : i32
    %c0_i32_0 = arith.constant 0 : i32
    return %arg0, %c0_i32 : i32, i32
  }
}

</mosaic_0001>

<llo_original>
// kernel: deepseek_wrapper_forward.11
$region0: #{deepseek_wrapper_forward.11}
  #allocation0 [shape = 'u32[]', space=smem, size = 0x4, offset = 0x4, fixed_abs, tag = 'smem constant byte address 0x4 - core index']
  #allocation1 [shape = 'u32[144,128]{1,0:T(1,128)}', space=vmem, size = 0x12000, scoped, tag = 'internal scratch']
  %s0 = inlined_call_operand.vmem [shape: bf16[32,128], index: 0, kind: input, shape index: {}]
  %s1 = inlined_call_operand.vmem [shape: bf16[128,128], index: 1, kind: input, shape index: {}]
  %s2 = inlined_call_operand.vmem [shape: f32[32,128], index: 2, kind: input, shape index: {}]
  %s3 = inlined_call_operand.vmem [shape: f32[32,128], index: 3, kind: output, shape index: {}]
  %s4 = sld [smem:[#allocation0]]
  $region45: #{deepseek_wrapper_forward.11} parent=0
    _
  %s6 = ssub.s32 1, %s4
  %s7 = scalar_select 0, %s6, %s4
  loop: start=0, step=1, limit=4
  $region2: #{deepseek_wrapper_forward.11} parent=0 // loop_pre_header
    _
  $region3: #{deepseek_wrapper_forward.11} parent=0 // loop_header
    %s9 = sphi 0, %s13
    %p10 = scmp.ge.s32.totalorder %s9, 4
    %s19 = sphi 0, %s21
    %s22 = sphi 0, %s19
    %s23 = sphi 0, %s22
    %s39 = sphi 0, %s23
    %s43 = sphi 0, %s43
    %s45 = sphi 0, %s43
    %s46 = sphi 0, %s45
    %s60 = sphi 0, %s46
    %s66 = sphi 0, %s68
    %s69 = sphi 0, %s66
    %s70 = sphi 0, %s69
    %s86 = sphi 0, %s70
    %s92 = sphi 0, %s94
    %s95 = sphi 0, %s92
    %s96 = sphi 0, %s95
    %s112 = sphi 0, %s96
  $region4: #{deepseek_wrapper_forward.11} parent=0 // loop_header_branch
    %12 = sbr.rel (%p10) target = $region8
  $region5: #{deepseek_wrapper_forward.11} parent=0 // loop_body
    %s14 = ssub.s32 %s9, 1
    %s15 = ssub.s32 %s9, 2
    %s16 = sadd.s32 %s9, 1
    %s17 = ssub.s32 %s9, %s16
    %p18 = scmp.eq.s32.totalorder %s17, 0
    %s20 = sadd.s32 %s19, 1
    %s21 = scalar_select %p18, %s19, %s20
    %p24 = pneg %p18
    %p25 = scmp.eq.s32.totalorder %s9, 1
    %p26 = por %p24, %p25
    %p27 = scmp.ne.s32.totalorder %s19, %s22
    %p28 = scmp.eq.s32.totalorder %s9, 0
    %p29 = por %p27, %p28
    %p30 = scmp.ne.s32.totalorder %s19, %s22
    %p31 = scmp.eq.s32.totalorder %s14, 1
    %p32 = por %p30, %p31
    %p33 = scmp.ne.s32.totalorder %s22, %s23
    %p34 = scmp.eq.s32.totalorder %s14, 0
    %p35 = por %p33, %p34
    %p36 = scmp.ne.s32.totalorder %s22, %s23
    %p37 = scmp.eq.s32.totalorder %s15, 1
    %p38 = por %p36, %p37
    %p40 = scmp.ne.s32.totalorder %s23, %s39
    %p41 = scmp.eq.s32.totalorder %s15, 0
    %p42 = por %p40, %p41
    %s44 = sadd.s32 %s43, 1
    %p47 = scmp.eq.s32.totalorder %s9, 1
    %p48 = scmp.ne.s32.totalorder %s43, %s45
    %p49 = scmp.eq.s32.totalorder %s9, 0
    %p50 = por %p48, %p49
    %p51 = scmp.ne.s32.totalorder %s43, %s45
    %p52 = scmp.eq.s32.totalorder %s14, 1
    %p53 = por %p51, %p52
    %p54 = scmp.ne.s32.totalorder %s45, %s46
    %p55 = scmp.eq.s32.totalorder %s14, 0
    %p56 = por %p54, %p55
    %p57 = scmp.ne.s32.totalorder %s45, %s46
    %p58 = scmp.eq.s32.totalorder %s15, 1
    %p59 = por %p57, %p58
    %p61 = scmp.ne.s32.totalorder %s46, %s60
    %p62 = scmp.eq.s32.totalorder %s15, 0
    %p63 = por %p61, %p62
    %s64 = ssub.s32 %s9, %s16
    %p65 = scmp.eq.s32.totalorder %s64, 0
    %s67 = sadd.s32 %s66, 1
    %s68 = scalar_select %p65, %s66, %s67
    %p71 = pneg %p65
    %p72 = scmp.eq.s32.totalorder %s9, 1
    %p73 = por %p71, %p72
    %p74 = scmp.ne.s32.totalorder %s66, %s69
    %p75 = scmp.eq.s32.totalorder %s9, 0
    %p76 = por %p74, %p75
    %p77 = scmp.ne.s32.totalorder %s66, %s69
    %p78 = scmp.eq.s32.totalorder %s14, 1
    %p79 = por %p77, %p78
    %p80 = scmp.ne.s32.totalorder %s69, %s70
    %p81 = scmp.eq.s32.totalorder %s14, 0
    %p82 = por %p80, %p81
    %p83 = scmp.ne.s32.totalorder %s69, %s70
    %p84 = scmp.eq.s32.totalorder %s15, 1
    %p85 = por %p83, %p84
    %p87 = scmp.ne.s32.totalorder %s70, %s86
    %p88 = scmp.eq.s32.totalorder %s15, 0
    %p89 = por %p87, %p88
    %s90 = ssub.s32 %s9, %s16
    %p91 = scmp.eq.s32.totalorder %s90, 0
    %s93 = sadd.s32 %s92, 1
    %s94 = scalar_select %p91, %s92, %s93
    %p97 = pneg %p91
    %p98 = scmp.eq.s32.totalorder %s9, 1
    %p99 = por %p97, %p98
    %p100 = scmp.ne.s32.totalorder %s92, %s95
    %p101 = scmp.eq.s32.totalorder %s9, 0
    %p102 = por %p100, %p101
    %p103 = scmp.ne.s32.totalorder %s92, %s95
    %p104 = scmp.eq.s32.totalorder %s14, 1
    %p105 = por %p103, %p104
    %p106 = scmp.ne.s32.totalorder %s95, %s96
    %p107 = scmp.eq.s32.totalorder %s14, 0
    %p108 = por %p106, %p107
    %p109 = scmp.ne.s32.totalorder %s95, %s96
    %p110 = scmp.eq.s32.totalorder %s15, 1
    %p111 = por %p109, %p110
    %p113 = scmp.ne.s32.totalorder %s96, %s112
    %p114 = scmp.eq.s32.totalorder %s15, 0
    %p115 = por %p113, %p114
    %p116 = scmp.le.s32.totalorder 1, %s9
    %p117 = scmp.lt.s32.totalorder %s9, 3
    %p118 = pnand %p116, %p117
    %p119 = pneg %p118
    // Predicated region
    $region9: #{deepseek_wrapper_forward.11} parent=5 // pred_check
      _
    $region10: #{deepseek_wrapper_forward.11} parent=5 // pred_check_branch
      %121 = sbr.rel (%p118) target = $region12
    $region11: #{deepseek_wrapper_forward.11} parent=5 // pred_region
      %s122 = ssub.s32 %s9, 1
      // Predicated region
      $region13: #{deepseek_wrapper_forward.11} parent=11 // pred_check
        %p123 = pneg %p56
      $region14: #{deepseek_wrapper_forward.11} parent=11 // pred_check_branch
        %125 = sbr.rel (%p123) target = $region16
      $region15: #{deepseek_wrapper_forward.11} parent=11 // pred_region
        _
      $region16: #{deepseek_wrapper_forward.11} parent=11 // pred_fallthru
        _
    $region12: #{deepseek_wrapper_forward.11} parent=5 // pred_fallthru
      _
    %p126 = scmp.lt.s32.totalorder %s9, 2
    // Predicated region
    $region17: #{deepseek_wrapper_forward.11} parent=5 // pred_check
      %p127 = pneg %p126
    $region18: #{deepseek_wrapper_forward.11} parent=5 // pred_check_branch
      %129 = sbr.rel (%p127) target = $region20
    $region19: #{deepseek_wrapper_forward.11} parent=5 // pred_region
      // Predicated region
      $region21: #{deepseek_wrapper_forward.11} parent=19 // pred_check
        %p130 = pneg %p29
      $region22: #{deepseek_wrapper_forward.11} parent=19 // pred_check_branch
        %132 = sbr.rel (%p130) target = $region24
      $region23: #{deepseek_wrapper_forward.11} parent=19 // pred_region
        %s133 = smul.u32 2, %s9
        %p134 = scmp.lt.s32.totalorder %s133, 3
        %s135 = scalar_select %p134, %s133, 3
        %s136 = smul.addr %s135, 4
        %s137 = scalar_lea.vmem %s0, %s136
        %s138 = smul.u32 2, %s9
      $region24: #{deepseek_wrapper_forward.11} parent=19 // pred_fallthru
        _
      // Predicated region
      $region25: #{deepseek_wrapper_forward.11} parent=19 // pred_check
        %p139 = pneg %p76
      $region26: #{deepseek_wrapper_forward.11} parent=19 // pred_check_branch
        %141 = sbr.rel (%p139) target = $region28
      $region27: #{deepseek_wrapper_forward.11} parent=19 // pred_region
        %s142 = smul.u32 2, %s9
        %p143 = scmp.lt.s32.totalorder %s142, 3
        %s144 = scalar_select %p143, %s142, 3
        %s145 = smul.addr %s144, 8
        %s146 = scalar_lea.vmem %s2, %s145
        %s147 = smul.u32 2, %s9
      $region28: #{deepseek_wrapper_forward.11} parent=19 // pred_fallthru
        _
    $region20: #{deepseek_wrapper_forward.11} parent=5 // pred_fallthru
      _
    %p148 = scmp.le.s32.totalorder 1, %s9
    %p149 = scmp.lt.s32.totalorder %s9, 3
    %p150 = pnand %p148, %p149
    %p151 = pneg %p150
    // Predicated region
    $region29: #{deepseek_wrapper_forward.11} parent=5 // pred_check
      _
    $region30: #{deepseek_wrapper_forward.11} parent=5 // pred_check_branch
      %153 = sbr.rel (%p150) target = $region32
    $region31: #{deepseek_wrapper_forward.11} parent=5 // pred_region
      %s154 = ssub.s32 %s9, 1
      %s155 = smul.u32 2, %s14
      %p156 = scmp.lt.s32.totalorder %s155, 3
      %s157 = scalar_select %p156, %s155, 3
      %s158 = smul.addr %s157, 4
      %s159 = scalar_lea.vmem %s0, %s158
      %p160 = pneg %p35
      %p161 = pneg %p32
      %p162 = pneg %p56
      %p163 = pneg %p53
      %s164 = smul.u32 2, %s14
      %p165 = scmp.lt.s32.totalorder %s164, 3
      %s166 = scalar_select %p165, %s164, 3
      %s167 = smul.addr %s166, 8
      %s168 = scalar_lea.vmem %s2, %s167
      %p169 = pneg %p82
      %p170 = pneg %p79
      %p171 = pneg %p108
      %p172 = pneg %p105
      %s173 = smul.u32 2, %s14
      %p174 = scmp.lt.s32.totalorder %s173, 3
      %s175 = scalar_select %p174, %s173, 3
      %s176 = smul.addr %s175, 8
      %s177 = scalar_lea.vmem %s3, %s176
      %s178 = smul.u32 2, %s14
      %p179 = scmp.lt.s32.totalorder %s178, 3
      %s180 = scalar_select %p179, %s178, 3
      %s181 = smul.addr %s180, 4
      %s182 = scalar_lea.vmem %s0, %s181
      %s183 = smul.u32 2, %s14
      %s184 = smul.u32 2, %s14
      %p185 = scmp.lt.s32.totalorder %s184, 3
      %s186 = scalar_select %p185, %s184, 3
      %s187 = smul.addr %s186, 8
      %s188 = scalar_lea.vmem %s2, %s187
      %s189 = smul.u32 2, %s14
      %s190 = smul.u32 2, %s14
      %p191 = scmp.lt.s32.totalorder %s190, 3
      %s192 = scalar_select %p191, %s190, 3
      %s193 = smul.addr %s192, 8
      %s194 = scalar_lea.vmem %s3, %s193
      %s195 = smul.u32 2, %s14
      %v197 = vld [vmem:[%s188] sm:$0xff]
      %v198 = vld [vmem:[%s188 + $0x8] sm:$0xff]
      %v199 = vld [vmem:[%s182] sm:$0xf]
      %v200 = vld [vmem:[%s182 + $0x4] sm:$0xf]
      %v201 = vld [vmem:[%s1] sm:$0xf]
      %v202 = vld [vmem:[%s1 + $0x4] sm:$0xf]
      %v203 = vld [vmem:[%s1 + $0x8] sm:$0xf]
      %v204 = vld [vmem:[%s1 + $0xc] sm:$0xf]
      %v205 = vld [vmem:[%s1 + $0x10] sm:$0xf]
      %v206 = vld [vmem:[%s1 + $0x14] sm:$0xf]
      %v207 = vld [vmem:[%s1 + $0x18] sm:$0xf]
      %v208 = vld [vmem:[%s1 + $0x1c] sm:$0xf]
      %v209 = vld [vmem:[%s1 + $0x20] sm:$0xf]
      %v210 = vld [vmem:[%s1 + $0x24] sm:$0xf]
      %v211 = vld [vmem:[%s1 + $0x28] sm:$0xf]
      %v212 = vld [vmem:[%s1 + $0x2c] sm:$0xf]
      %v213 = vld [vmem:[%s1 + $0x30] sm:$0xf]
      %v214 = vld [vmem:[%s1 + $0x34] sm:$0xf]
      %v215 = vld [vmem:[%s1 + $0x38] sm:$0xf]
      %v216 = vld [vmem:[%s1 + $0x3c] sm:$0xf]
      %v219 = vunpack.c.l.b16 %v199
      %v220 = vunpack.c.l.b16 %v200
      %v221 = vpack.c.b16 %v220, %v219
      %v239 = vunpack.c.l.b16 %v201
      %v240 = vunpack.c.l.b16 %v202
      %v241 = vunpack.c.l.b16 %v203
      %v242 = vunpack.c.l.b16 %v204
      %v243 = vunpack.c.l.b16 %v205
      %v244 = vunpack.c.l.b16 %v206
      %v245 = vunpack.c.l.b16 %v207
      %v246 = vunpack.c.l.b16 %v208
      %v247 = vunpack.c.l.b16 %v209
      %v248 = vunpack.c.l.b16 %v210
      %v249 = vunpack.c.l.b16 %v211
      %v250 = vunpack.c.l.b16 %v212
      %v251 = vunpack.c.l.b16 %v213
      %v252 = vunpack.c.l.b16 %v214
      %v253 = vunpack.c.l.b16 %v215
      %v254 = vunpack.c.l.b16 %v216
      %v255 = vpack.c.b16 %v240, %v239
      %v256 = vpack.c.b16 %v242, %v241
      %v257 = vpack.c.b16 %v244, %v243
      %v258 = vpack.c.b16 %v246, %v245
      %v259 = vpack.c.b16 %v248, %v247
      %v260 = vpack.c.b16 %v250, %v249
      %v261 = vpack.c.b16 %v252, %v251
      %v262 = vpack.c.b16 %v254, %v253
      %271 = vmatprep.subr.bf16.mxu0 0
      %272 = vmatpush1.bf16.msra.mxu0 %v262
      %273 = vmatprep.subr.bf16.mxu0 0
      %274 = vmatpush1.bf16.msra.mxu0 %v261
      %275 = vmatprep.subr.bf16.mxu0 0
      %276 = vmatpush1.bf16.msra.mxu0 %v260
      %277 = vmatprep.subr.bf16.mxu0 0
      %278 = vmatpush1.bf16.msra.mxu0 %v259
      %279 = vmatprep.subr.bf16.mxu0 0
      %280 = vmatpush1.bf16.msra.mxu0 %v258
      %281 = vmatprep.subr.bf16.mxu0 0
      %282 = vmatpush1.bf16.msra.mxu0 %v257
      %283 = vmatprep.subr.bf16.mxu0 0
      %284 = vmatpush1.bf16.msra.mxu0 %v256
      %285 = vmatprep.subr.bf16.mxu0 0
      %286 = vmatpush1.bf16.msra.mxu0 %v255
      %287 = vmatprep.subr.bf16.mxu0 0
      %288 = vmatpush2.bf16.msra.mxu0 0
      %289 = vmatprep.subr.bf16.mxu0 0
      %290 = vmatpush2.bf16.msra.mxu0 0
      %291 = vmatprep.subr.bf16.mxu0 0
      %292 = vmatpush2.bf16.msra.mxu0 0
      %293 = vmatprep.subr.bf16.mxu0 0
      %294 = vmatpush2.bf16.msra.mxu0 0
      %295 = vmatprep.subr.bf16.mxu0 0
      %296 = vmatpush2.bf16.msra.mxu0 0
      %297 = vmatprep.subr.bf16.mxu0 0
      %298 = vmatpush2.bf16.msra.mxu0 0
      %299 = vmatprep.subr.bf16.mxu0 0
      %300 = vmatpush2.bf16.msra.mxu0 0
      %301 = vmatprep.subr.bf16.mxu0 0
      %302 = vmatpush2.bf16.msra.mxu0 0
      %303 = vmatprep.mubr.bf16.mxu0 0
      %304 = vmatmul.mubr.bf16.gmra.mxu0 %v221
      %v305 = vpop.f32.mrf.mxu0
      %v306 = vadd.f32 0.0, %v305
      %v307 = vpop.f32.mrf.mxu0
      %v308 = vpop.f32.mrf.mxu0
      %v309 = vadd.f32 0.0, %v308
      %v310 = vpop.f32.mrf.mxu0
      %311 = vdwg.mxu0
      %v312 = vadd.f32 %v197, %v306
      %v313 = vadd.f32 %v198, %v309
      %314 = vst [vmem:[%s194] sm:$0xff] %v312
      %315 = vst [vmem:[%s194 + $0x8] sm:$0xff] %v313
      %s316 = smul.u32 2, %s14
      %p317 = scmp.lt.s32.totalorder %s316, 3
      %s318 = scalar_select %p317, %s316, 3
      %s319 = smul.addr %s318, 8
      %s320 = scalar_lea.vmem %s3, %s319
      // Predicated region
      $region33: #{deepseek_wrapper_forward.11} parent=31 // pred_check
        %p321 = pneg %p105
      $region34: #{deepseek_wrapper_forward.11} parent=31 // pred_check_branch
        %323 = sbr.rel (%p321) target = $region36
      $region35: #{deepseek_wrapper_forward.11} parent=31 // pred_region
        %s324 = smul.u32 2, %s14
      $region36: #{deepseek_wrapper_forward.11} parent=31 // pred_fallthru
        _
    $region32: #{deepseek_wrapper_forward.11} parent=5 // pred_fallthru
      _
    %p325 = scmp.le.s32.totalorder 2, %s9
    // Predicated region
    $region37: #{deepseek_wrapper_forward.11} parent=5 // pred_check
      %p326 = pneg %p325
    $region38: #{deepseek_wrapper_forward.11} parent=5 // pred_check_branch
      %328 = sbr.rel (%p326) target = $region40
    $region39: #{deepseek_wrapper_forward.11} parent=5 // pred_region
      %s329 = ssub.s32 %s9, 2
      // Predicated region
      $region41: #{deepseek_wrapper_forward.11} parent=39 // pred_check
        %p330 = pneg %p111
      $region42: #{deepseek_wrapper_forward.11} parent=39 // pred_check_branch
        %332 = sbr.rel (%p330) target = $region44
      $region43: #{deepseek_wrapper_forward.11} parent=39 // pred_region
        %s333 = smul.u32 2, %s15
        %p334 = scmp.lt.s32.totalorder %s333, 3
        %s335 = scalar_select %p334, %s333, 3
        %s336 = smul.addr %s335, 8
        %s337 = scalar_lea.vmem %s3, %s336
      $region44: #{deepseek_wrapper_forward.11} parent=39 // pred_fallthru
        _
    $region40: #{deepseek_wrapper_forward.11} parent=5 // pred_fallthru
      _
  $region6: #{deepseek_wrapper_forward.11} parent=0 // loop_footer
    %s13 = sadd.s32 1, %s9
  $region7: #{deepseek_wrapper_forward.11} parent=0 // loop_footer_branch
    %8 = sbr.rel target = $region3
  $region8: #{deepseek_wrapper_forward.11} parent=0 // loop_exit
    _

// kernel: deepseek_wrapper_forward.9
$region0: #{deepseek_wrapper_forward.9}
  #allocation0 [shape = 'u32[]', space=smem, size = 0x4, offset = 0x4, fixed_abs, tag = 'smem constant byte address 0x4 - core index']
  #allocation1 [shape = 'u32[144,128]{1,0:T(1,128)}', space=vmem, size = 0x12000, scoped, tag = 'internal scratch']
  %s0 = inlined_call_operand.vmem [shape: f32[32,128], index: 0, kind: input, shape index: {}]
  %s1 = inlined_call_operand.vmem [shape: f32[1,128], index: 1, kind: input, shape index: {}]
  %s2 = inlined_call_operand.vmem [shape: bf16[128,384], index: 2, kind: input, shape index: {}]
  %s3 = inlined_call_operand.vmem [shape: bf16[32,384], index: 3, kind: output, shape index: {}]
  %s4 = sld [smem:[#allocation0]]
  $region45: #{deepseek_wrapper_forward.9} parent=0
    _
  %s6 = ssub.s32 1, %s4
  %s7 = scalar_select 0, %s6, %s4
  loop: start=0, step=1, limit=4
  $region2: #{deepseek_wrapper_forward.9} parent=0 // loop_pre_header
    _
  $region3: #{deepseek_wrapper_forward.9} parent=0 // loop_header
    %s9 = sphi 0, %s13
    %p10 = scmp.ge.s32.totalorder %s9, 4
    %s19 = sphi 0, %s21
    %s22 = sphi 0, %s19
    %s23 = sphi 0, %s22
    %s39 = sphi 0, %s23
    %s43 = sphi 0, %s43
    %s45 = sphi 0, %s43
    %s46 = sphi 0, %s45
    %s60 = sphi 0, %s46
    %s64 = sphi 0, %s64
    %s66 = sphi 0, %s64
    %s67 = sphi 0, %s66
    %s81 = sphi 0, %s67
    %s87 = sphi 0, %s89
    %s90 = sphi 0, %s87
    %s91 = sphi 0, %s90
    %s107 = sphi 0, %s91
  $region4: #{deepseek_wrapper_forward.9} parent=0 // loop_header_branch
    %12 = sbr.rel (%p10) target = $region8
  $region5: #{deepseek_wrapper_forward.9} parent=0 // loop_body
    %s14 = ssub.s32 %s9, 1
    %s15 = ssub.s32 %s9, 2
    %s16 = sadd.s32 %s9, 1
    %s17 = ssub.s32 %s9, %s16
    %p18 = scmp.eq.s32.totalorder %s17, 0
    %s20 = sadd.s32 %s19, 1
    %s21 = scalar_select %p18, %s19, %s20
    %p24 = pneg %p18
    %p25 = scmp.eq.s32.totalorder %s9, 1
    %p26 = por %p24, %p25
    %p27 = scmp.ne.s32.totalorder %s19, %s22
    %p28 = scmp.eq.s32.totalorder %s9, 0
    %p29 = por %p27, %p28
    %p30 = scmp.ne.s32.totalorder %s19, %s22
    %p31 = scmp.eq.s32.totalorder %s14, 1
    %p32 = por %p30, %p31
    %p33 = scmp.ne.s32.totalorder %s22, %s23
    %p34 = scmp.eq.s32.totalorder %s14, 0
    %p35 = por %p33, %p34
    %p36 = scmp.ne.s32.totalorder %s22, %s23
    %p37 = scmp.eq.s32.totalorder %s15, 1
    %p38 = por %p36, %p37
    %p40 = scmp.ne.s32.totalorder %s23, %s39
    %p41 = scmp.eq.s32.totalorder %s15, 0
    %p42 = por %p40, %p41
    %s44 = sadd.s32 %s43, 1
    %p47 = scmp.eq.s32.totalorder %s9, 1
    %p48 = scmp.ne.s32.totalorder %s43, %s45
    %p49 = scmp.eq.s32.totalorder %s9, 0
    %p50 = por %p48, %p49
    %p51 = scmp.ne.s32.totalorder %s43, %s45
    %p52 = scmp.eq.s32.totalorder %s14, 1
    %p53 = por %p51, %p52
    %p54 = scmp.ne.s32.totalorder %s45, %s46
    %p55 = scmp.eq.s32.totalorder %s14, 0
    %p56 = por %p54, %p55
    %p57 = scmp.ne.s32.totalorder %s45, %s46
    %p58 = scmp.eq.s32.totalorder %s15, 1
    %p59 = por %p57, %p58
    %p61 = scmp.ne.s32.totalorder %s46, %s60
    %p62 = scmp.eq.s32.totalorder %s15, 0
    %p63 = por %p61, %p62
    %s65 = sadd.s32 %s64, 1
    %p68 = scmp.eq.s32.totalorder %s9, 1
    %p69 = scmp.ne.s32.totalorder %s64, %s66
    %p70 = scmp.eq.s32.totalorder %s9, 0
    %p71 = por %p69, %p70
    %p72 = scmp.ne.s32.totalorder %s64, %s66
    %p73 = scmp.eq.s32.totalorder %s14, 1
    %p74 = por %p72, %p73
    %p75 = scmp.ne.s32.totalorder %s66, %s67
    %p76 = scmp.eq.s32.totalorder %s14, 0
    %p77 = por %p75, %p76
    %p78 = scmp.ne.s32.totalorder %s66, %s67
    %p79 = scmp.eq.s32.totalorder %s15, 1
    %p80 = por %p78, %p79
    %p82 = scmp.ne.s32.totalorder %s67, %s81
    %p83 = scmp.eq.s32.totalorder %s15, 0
    %p84 = por %p82, %p83
    %s85 = ssub.s32 %s9, %s16
    %p86 = scmp.eq.s32.totalorder %s85, 0
    %s88 = sadd.s32 %s87, 1
    %s89 = scalar_select %p86, %s87, %s88
    %p92 = pneg %p86
    %p93 = scmp.eq.s32.totalorder %s9, 1
    %p94 = por %p92, %p93
    %p95 = scmp.ne.s32.totalorder %s87, %s90
    %p96 = scmp.eq.s32.totalorder %s9, 0
    %p97 = por %p95, %p96
    %p98 = scmp.ne.s32.totalorder %s87, %s90
    %p99 = scmp.eq.s32.totalorder %s14, 1
    %p100 = por %p98, %p99
    %p101 = scmp.ne.s32.totalorder %s90, %s91
    %p102 = scmp.eq.s32.totalorder %s14, 0
    %p103 = por %p101, %p102
    %p104 = scmp.ne.s32.totalorder %s90, %s91
    %p105 = scmp.eq.s32.totalorder %s15, 1
    %p106 = por %p104, %p105
    %p108 = scmp.ne.s32.totalorder %s91, %s107
    %p109 = scmp.eq.s32.totalorder %s15, 0
    %p110 = por %p108, %p109
    %p111 = scmp.le.s32.totalorder 1, %s9
    %p112 = scmp.lt.s32.totalorder %s9, 3
    %p113 = pnand %p111, %p112
    %p114 = pneg %p113
    // Predicated region
    $region9: #{deepseek_wrapper_forward.9} parent=5 // pred_check
      _
    $region10: #{deepseek_wrapper_forward.9} parent=5 // pred_check_branch
      %116 = sbr.rel (%p113) target = $region12
    $region11: #{deepseek_wrapper_forward.9} parent=5 // pred_region
      %s117 = ssub.s32 %s9, 1
      // Predicated region
      $region13: #{deepseek_wrapper_forward.9} parent=11 // pred_check
        %p118 = pneg %p56
      $region14: #{deepseek_wrapper_forward.9} parent=11 // pred_check_branch
        %120 = sbr.rel (%p118) target = $region16
      $region15: #{deepseek_wrapper_forward.9} parent=11 // pred_region
        _
      $region16: #{deepseek_wrapper_forward.9} parent=11 // pred_fallthru
        _
      // Predicated region
      $region17: #{deepseek_wrapper_forward.9} parent=11 // pred_check
        %p121 = pneg %p77
      $region18: #{deepseek_wrapper_forward.9} parent=11 // pred_check_branch
        %123 = sbr.rel (%p121) target = $region20
      $region19: #{deepseek_wrapper_forward.9} parent=11 // pred_region
        _
      $region20: #{deepseek_wrapper_forward.9} parent=11 // pred_fallthru
        _
    $region12: #{deepseek_wrapper_forward.9} parent=5 // pred_fallthru
      _
    %p124 = scmp.lt.s32.totalorder %s9, 2
    // Predicated region
    $region21: #{deepseek_wrapper_forward.9} parent=5 // pred_check
      %p125 = pneg %p124
    $region22: #{deepseek_wrapper_forward.9} parent=5 // pred_check_branch
      %127 = sbr.rel (%p125) target = $region24
    $region23: #{deepseek_wrapper_forward.9} parent=5 // pred_region
      // Predicated region
      $region25: #{deepseek_wrapper_forward.9} parent=23 // pred_check
        %p128 = pneg %p29
      $region26: #{deepseek_wrapper_forward.9} parent=23 // pred_check_branch
        %130 = sbr.rel (%p128) target = $region28
      $region27: #{deepseek_wrapper_forward.9} parent=23 // pred_region
        %s131 = smul.u32 2, %s9
        %p132 = scmp.lt.s32.totalorder %s131, 3
        %s133 = scalar_select %p132, %s131, 3
        %s134 = smul.addr %s133, 8
        %s135 = scalar_lea.vmem %s0, %s134
        %s136 = smul.u32 2, %s9
      $region28: #{deepseek_wrapper_forward.9} parent=23 // pred_fallthru
        _
    $region24: #{deepseek_wrapper_forward.9} parent=5 // pred_fallthru
      _
    %p137 = scmp.le.s32.totalorder 1, %s9
    %p138 = scmp.lt.s32.totalorder %s9, 3
    %p139 = pnand %p137, %p138
    %p140 = pneg %p139
    // Predicated region
    $region29: #{deepseek_wrapper_forward.9} parent=5 // pred_check
      _
    $region30: #{deepseek_wrapper_forward.9} parent=5 // pred_check_branch
      %142 = sbr.rel (%p139) target = $region32
    $region31: #{deepseek_wrapper_forward.9} parent=5 // pred_region
      %s143 = ssub.s32 %s9, 1
      %s144 = smul.u32 2, %s14
      %p145 = scmp.lt.s32.totalorder %s144, 3
      %s146 = scalar_select %p145, %s144, 3
      %s147 = smul.addr %s146, 8
      %s148 = scalar_lea.vmem %s0, %s147
      %p149 = pneg %p35
      %p150 = pneg %p32
      %p151 = pneg %p56
      %p152 = pneg %p53
      %p153 = pneg %p77
      %p154 = pneg %p74
      %p155 = pneg %p103
      %p156 = pneg %p100
      %s157 = smul.u32 2, %s14
      %p158 = scmp.lt.s32.totalorder %s157, 3
      %s159 = scalar_select %p158, %s157, 3
      %s160 = smul.addr %s159, 3
      %s161 = smul.addr %s160, 4
      %s162 = scalar_lea.vmem %s3, %s161
      %s163 = smul.u32 2, %s14
      %p164 = scmp.lt.s32.totalorder %s163, 3
      %s165 = scalar_select %p164, %s163, 3
      %s166 = smul.addr %s165, 8
      %s167 = scalar_lea.vmem %s0, %s166
      %s168 = smul.u32 2, %s14
      %s169 = smul.u32 2, %s14
      %p170 = scmp.lt.s32.totalorder %s169, 3
      %s171 = scalar_select %p170, %s169, 3
      %s172 = smul.addr %s171, 3
      %s173 = smul.addr %s172, 4
      %s174 = scalar_lea.vmem %s3, %s173
      %s175 = smul.u32 2, %s14
      %v177 = vld [vmem:[%s167] sm:$0xff]
      %v178 = vld [vmem:[%s167 + $0x8] sm:$0xff]
      %v179 = vld [vmem:[%s1] sm:$0x1]
      %v180 = vmul.f32 %v177, %v177
      %v181 = vmul.f32 %v178, %v178
      %182 = vadd.xlane.f32.xlu0 %v180
      %v183 = vpop.xlane.xlu0 %182
      %184 = vadd.xlane.f32.xlu0 %v181
      %v185 = vpop.xlane.xlu0 %184
      %v186 = vrcp.pop 128.0
      %v187 = vmul.f32 %v183, %v186
      %v188 = vmul.f32 %v185, %v186
      %v189 = vadd.f32 %v187, 1e-06
      %v190 = vadd.f32 %v188, 1e-06
      %v191 = vrsqrt.pop %v189
      %v192 = vrsqrt.pop %v190
      %v193 = vmul.f32 %v177, %v191
      %v194 = vmul.f32 %v178, %v192
      %v196 = vlaneseq
      %v197 = vshrl.u32 %v196, 7
      %v198 = vsub.s32 0, %v197
      %v199 = vrot.slane %v179, %v198
      %v201 = vmul.f32 %v193, %v199
      %v202 = vmul.f32 %v194, %v199
      %v203 = vpack.c.bf16 %v202, %v201
      %v204 = vld [vmem:[%s2] sm:$0xff]
      %v205 = vld [vmem:[%s2 + $0x8] sm:$0xf]
      %v206 = vld [vmem:[%s2 + $0xc] sm:$0xff]
      %v207 = vld [vmem:[%s2 + $0x14] sm:$0xf]
      %v208 = vld [vmem:[%s2 + $0x18] sm:$0xff]
      %v209 = vld [vmem:[%s2 + $0x20] sm:$0xf]
      %v210 = vld [vmem:[%s2 + $0x24] sm:$0xff]
      %v211 = vld [vmem:[%s2 + $0x2c] sm:$0xf]
      %v212 = vld [vmem:[%s2 + $0x30] sm:$0xff]
      %v213 = vld [vmem:[%s2 + $0x38] sm:$0xf]
      %v214 = vld [vmem:[%s2 + $0x3c] sm:$0xff]
      %v215 = vld [vmem:[%s2 + $0x44] sm:$0xf]
      %v216 = vld [vmem:[%s2 + $0x48] sm:$0xff]
      %v217 = vld [vmem:[%s2 + $0x50] sm:$0xf]
      %v218 = vld [vmem:[%s2 + $0x54] sm:$0xff]
      %v219 = vld [vmem:[%s2 + $0x5c] sm:$0xf]
      %v220 = vld [vmem:[%s2 + $0x60] sm:$0xff]
      %v221 = vld [vmem:[%s2 + $0x68] sm:$0xf]
      %v222 = vld [vmem:[%s2 + $0x6c] sm:$0xff]
      %v223 = vld [vmem:[%s2 + $0x74] sm:$0xf]
      %v224 = vld [vmem:[%s2 + $0x78] sm:$0xff]
      %v225 = vld [vmem:[%s2 + $0x80] sm:$0xf]
      %v226 = vld [vmem:[%s2 + $0x84] sm:$0xff]
      %v227 = vld [vmem:[%s2 + $0x8c] sm:$0xf]
      %v228 = vld [vmem:[%s2 + $0x90] sm:$0xff]
      %v229 = vld [vmem:[%s2 + $0x98] sm:$0xf]
      %v230 = vld [vmem:[%s2 + $0x9c] sm:$0xff]
      %v231 = vld [vmem:[%s2 + $0xa4] sm:$0xf]
      %v232 = vld [vmem:[%s2 + $0xa8] sm:$0xff]
      %v233 = vld [vmem:[%s2 + $0xb0] sm:$0xf]
      %v234 = vld [vmem:[%s2 + $0xb4] sm:$0xff]
      %v235 = vld [vmem:[%s2 + $0xbc] sm:$0xf]
      %v268 = vunpack.c.l.b16 %v204
      %v269 = vunpack.c.h.b16 %v204
      %v270 = vunpack.c.l.b16 %v205
      %v271 = vunpack.c.l.b16 %v206
      %v272 = vunpack.c.h.b16 %v206
      %v273 = vunpack.c.l.b16 %v207
      %v274 = vunpack.c.l.b16 %v208
      %v275 = vunpack.c.h.b16 %v208
      %v276 = vunpack.c.l.b16 %v209
      %v277 = vunpack.c.l.b16 %v210
      %v278 = vunpack.c.h.b16 %v210
      %v279 = vunpack.c.l.b16 %v211
      %v280 = vunpack.c.l.b16 %v212
      %v281 = vunpack.c.h.b16 %v212
      %v282 = vunpack.c.l.b16 %v213
      %v283 = vunpack.c.l.b16 %v214
      %v284 = vunpack.c.h.b16 %v214
      %v285 = vunpack.c.l.b16 %v215
      %v286 = vunpack.c.l.b16 %v216
      %v287 = vunpack.c.h.b16 %v216
      %v288 = vunpack.c.l.b16 %v217
      %v289 = vunpack.c.l.b16 %v218
      %v290 = vunpack.c.h.b16 %v218
      %v291 = vunpack.c.l.b16 %v219
      %v292 = vunpack.c.l.b16 %v220
      %v293 = vunpack.c.h.b16 %v220
      %v294 = vunpack.c.l.b16 %v221
      %v295 = vunpack.c.l.b16 %v222
      %v296 = vunpack.c.h.b16 %v222
      %v297 = vunpack.c.l.b16 %v223
      %v298 = vunpack.c.l.b16 %v224
      %v299 = vunpack.c.h.b16 %v224
      %v300 = vunpack.c.l.b16 %v225
      %v301 = vunpack.c.l.b16 %v226
      %v302 = vunpack.c.h.b16 %v226
      %v303 = vunpack.c.l.b16 %v227
      %v304 = vunpack.c.l.b16 %v228
      %v305 = vunpack.c.h.b16 %v228
      %v306 = vunpack.c.l.b16 %v229
      %v307 = vunpack.c.l.b16 %v230
      %v308 = vunpack.c.h.b16 %v230
      %v309 = vunpack.c.l.b16 %v231
      %v310 = vunpack.c.l.b16 %v232
      %v311 = vunpack.c.h.b16 %v232
      %v312 = vunpack.c.l.b16 %v233
      %v313 = vunpack.c.l.b16 %v234
      %v314 = vunpack.c.h.b16 %v234
      %v315 = vunpack.c.l.b16 %v235
      %v316 = vpack.c.b16 %v271, %v268
      %v317 = vpack.c.b16 %v272, %v269
      %v318 = vpack.c.b16 %v273, %v270
      %v319 = vpack.c.b16 %v277, %v274
      %v320 = vpack.c.b16 %v278, %v275
      %v321 = vpack.c.b16 %v279, %v276
      %v322 = vpack.c.b16 %v283, %v280
      %v323 = vpack.c.b16 %v284, %v281
      %v324 = vpack.c.b16 %v285, %v282
      %v325 = vpack.c.b16 %v289, %v286
      %v326 = vpack.c.b16 %v290, %v287
      %v327 = vpack.c.b16 %v291, %v288
      %v328 = vpack.c.b16 %v295, %v292
      %v329 = vpack.c.b16 %v296, %v293
      %v330 = vpack.c.b16 %v297, %v294
      %v331 = vpack.c.b16 %v301, %v298
      %v332 = vpack.c.b16 %v302, %v299
      %v333 = vpack.c.b16 %v303, %v300
      %v334 = vpack.c.b16 %v307, %v304
      %v335 = vpack.c.b16 %v308, %v305
      %v336 = vpack.c.b16 %v309, %v306
      %v337 = vpack.c.b16 %v313, %v310
      %v338 = vpack.c.b16 %v314, %v311
      %v339 = vpack.c.b16 %v315, %v312
      %364 = vmatprep.subr.bf16.mxu0 %v338
      %365 = vmatpush1.bf16.msra.mxu0 %v337
      %366 = vmatprep.subr.bf16.mxu0 %v335
      %367 = vmatpush1.bf16.msra.mxu0 %v334
      %368 = vmatprep.subr.bf16.mxu0 %v332
      %369 = vmatpush1.bf16.msra.mxu0 %v331
      %370 = vmatprep.subr.bf16.mxu0 %v329
      %371 = vmatpush1.bf16.msra.mxu0 %v328
      %372 = vmatprep.subr.bf16.mxu0 %v326
      %373 = vmatpush1.bf16.msra.mxu0 %v325
      %374 = vmatprep.subr.bf16.mxu0 %v323
      %375 = vmatpush1.bf16.msra.mxu0 %v322
      %376 = vmatprep.subr.bf16.mxu0 %v320
      %377 = vmatpush1.bf16.msra.mxu0 %v319
      %378 = vmatprep.subr.bf16.mxu0 %v317
      %379 = vmatpush1.bf16.msra.mxu0 %v316
      %380 = vmatprep.subr.bf16.mxu0 0
      %381 = vmatpush2.bf16.msra.mxu0 0
      %382 = vmatprep.subr.bf16.mxu0 0
      %383 = vmatpush2.bf16.msra.mxu0 0
      %384 = vmatprep.subr.bf16.mxu0 0
      %385 = vmatpush2.bf16.msra.mxu0 0
      %386 = vmatprep.subr.bf16.mxu0 0
      %387 = vmatpush2.bf16.msra.mxu0 0
      %388 = vmatprep.subr.bf16.mxu0 0
      %389 = vmatpush2.bf16.msra.mxu0 0
      %390 = vmatprep.subr.bf16.mxu0 0
      %391 = vmatpush2.bf16.msra.mxu0 0
      %392 = vmatprep.subr.bf16.mxu0 0
      %393 = vmatpush2.bf16.msra.mxu0 0
      %394 = vmatprep.subr.bf16.mxu0 0
      %395 = vmatpush2.bf16.msra.mxu0 0
      %396 = vmatprep.mubr.bf16.mxu0 0
      %397 = vmatmul.mubr.bf16.gmra.mxu0 %v203
      %v398 = vpop.f32.mrf.mxu0
      %v399 = vadd.f32 0.0, %v398
      %v400 = vpop.f32.mrf.mxu0
      %v401 = vadd.f32 0.0, %v400
      %v402 = vpop.f32.mrf.mxu0
      %v403 = vadd.f32 0.0, %v402
      %v404 = vpop.f32.mrf.mxu0
      %v405 = vadd.f32 0.0, %v404
      %406 = vdwg.mxu0
      %407 = vmatprep.subr.bf16.mxu0 0
      %408 = vmatpush1.bf16.msra.mxu0 %v339
      %409 = vmatprep.subr.bf16.mxu0 0
      %410 = vmatpush1.bf16.msra.mxu0 %v336
      %411 = vmatprep.subr.bf16.mxu0 0
      %412 = vmatpush1.bf16.msra.mxu0 %v333
      %413 = vmatprep.subr.bf16.mxu0 0
      %414 = vmatpush1.bf16.msra.mxu0 %v330
      %415 = vmatprep.subr.bf16.mxu0 0
      %416 = vmatpush1.bf16.msra.mxu0 %v327
      %417 = vmatprep.subr.bf16.mxu0 0
      %418 = vmatpush1.bf16.msra.mxu0 %v324
      %419 = vmatprep.subr.bf16.mxu0 0
      %420 = vmatpush1.bf16.msra.mxu0 %v321
      %421 = vmatprep.subr.bf16.mxu0 0
      %422 = vmatpush1.bf16.msra.mxu0 %v318
      %423 = vmatprep.subr.bf16.mxu0 0
      %424 = vmatpush2.bf16.msra.mxu0 0
      %425 = vmatprep.subr.bf16.mxu0 0
      %426 = vmatpush2.bf16.msra.mxu0 0
      %427 = vmatprep.subr.bf16.mxu0 0
      %428 = vmatpush2.bf16.msra.mxu0 0
      %429 = vmatprep.subr.bf16.mxu0 0
      %430 = vmatpush2.bf16.msra.mxu0 0
      %431 = vmatprep.subr.bf16.mxu0 0
      %432 = vmatpush2.bf16.msra.mxu0 0
      %433 = vmatprep.subr.bf16.mxu0 0
      %434 = vmatpush2.bf16.msra.mxu0 0
      %435 = vmatprep.subr.bf16.mxu0 0
      %436 = vmatpush2.bf16.msra.mxu0 0
      %437 = vmatprep.subr.bf16.mxu0 0
      %438 = vmatpush2.bf16.msra.mxu0 0
      %439 = vmatprep.mubr.bf16.mxu0 0
      %440 = vmatmul.mubr.bf16.gmra.mxu0 %v203
      %v441 = vpop.f32.mrf.mxu0
      %v442 = vadd.f32 0.0, %v441
      %v443 = vpop.f32.mrf.mxu0
      %v444 = vpop.f32.mrf.mxu0
      %v445 = vadd.f32 0.0, %v444
      %v446 = vpop.f32.mrf.mxu0
      %447 = vdwg.mxu0
      %v448 = vpack.c.bf16 %v403, %v399
      %v449 = vpack.c.bf16 %v405, %v401
      %v450 = vpack.c.bf16 %v445, %v442
      %v454 = vunpack.c.l.b16 %v448
      %v455 = vunpack.c.l.b16 %v449
      %v456 = vunpack.c.l.b16 %v450
      %v457 = vunpack.c.h.b16 %v448
      %v458 = vunpack.c.h.b16 %v449
      %v459 = vunpack.c.h.b16 %v450
      %v460 = vpack.c.b16 %v455, %v454
      %v461 = vpack.c.b16 %v456, %v456
      %v462 = vpack.c.b16 %v458, %v457
      %v463 = vpack.c.b16 %v459, %v459
      %468 = vst [vmem:[%s174] sm:$0xff] %v460
      %469 = vst [vmem:[%s174 + $0x8] sm:$0xf] %v461
      %470 = vst [vmem:[%s174 + $0xc] sm:$0xff] %v462
      %471 = vst [vmem:[%s174 + $0x14] sm:$0xf] %v463
      %s472 = smul.u32 2, %s14
      %p473 = scmp.lt.s32.totalorder %s472, 3
      %s474 = scalar_select %p473, %s472, 3
      %s475 = smul.addr %s474, 3
      %s476 = smul.addr %s475, 4
      %s477 = scalar_lea.vmem %s3, %s476
      // Predicated region
      $region33: #{deepseek_wrapper_forward.9} parent=31 // pred_check
        %p478 = pneg %p100
      $region34: #{deepseek_wrapper_forward.9} parent=31 // pred_check_branch
        %480 = sbr.rel (%p478) target = $region36
      $region35: #{deepseek_wrapper_forward.9} parent=31 // pred_region
        %s481 = smul.u32 2, %s14
      $region36: #{deepseek_wrapper_forward.9} parent=31 // pred_fallthru
        _
    $region32: #{deepseek_wrapper_forward.9} parent=5 // pred_fallthru
      _
    %p482 = scmp.le.s32.totalorder 2, %s9
    // Predicated region
    $region37: #{deepseek_wrapper_forward.9} parent=5 // pred_check
      %p483 = pneg %p482
    $region38: #{deepseek_wrapper_forward.9} parent=5 // pred_check_branch
      %485 = sbr.rel (%p483) target = $region40
    $region39: #{deepseek_wrapper_forward.9} parent=5 // pred_region
      %s486 = ssub.s32 %s9, 2
      // Predicated region
      $region41: #{deepseek_wrapper_forward.9} parent=39 // pred_check
        %p487 = pneg %p106
      $region42: #{deepseek_wrapper_forward.9} parent=39 // pred_check_branch
        %489 = sbr.rel (%p487) target = $region44
      $region43: #{deepseek_wrapper_forward.9} parent=39 // pred_region
        %s490 = smul.u32 2, %s15
        %p491 = scmp.lt.s32.totalorder %s490, 3
        %s492 = scalar_select %p491, %s490, 3
        %s493 = smul.addr %s492, 3
        %s494 = smul.addr %s493, 4
        %s495 = scalar_lea.vmem %s3, %s494
      $region44: #{deepseek_wrapper_forward.9} parent=39 // pred_fallthru
        _
    $region40: #{deepseek_wrapper_forward.9} parent=5 // pred_fallthru
      _
  $region6: #{deepseek_wrapper_forward.9} parent=0 // loop_footer
    %s13 = sadd.s32 1, %s9
  $region7: #{deepseek_wrapper_forward.9} parent=0 // loop_footer_branch
    %8 = sbr.rel target = $region3
  $region8: #{deepseek_wrapper_forward.9} parent=0 // loop_exit
    _

// kernel: deepseek_wrapper_forward.10
$region0: #{deepseek_wrapper_forward.10}
  #allocation0 [shape = 'u32[]', space=smem, size = 0x4, offset = 0x4, fixed_abs, tag = 'smem constant byte address 0x4 - core index']
  #allocation1 [shape = 'u32[144,128]{1,0:T(1,128)}', space=vmem, size = 0x12000, scoped, tag = 'internal scratch']
  %s0 = inlined_call_operand.vmem [shape: bf16[2,16,384], index: 0, kind: input, shape index: {}]
  %s1 = inlined_call_operand.vmem [shape: f32[16,32], index: 1, kind: input, shape index: {}]
  %s2 = inlined_call_operand.vmem [shape: f32[16,32], index: 2, kind: input, shape index: {}]
  %s3 = inlined_call_operand.vmem [shape: f32[2,1,16], index: 3, kind: input, shape index: {}]
  %s4 = inlined_call_operand.vmem [shape: bf16[2,16,128], index: 4, kind: output, shape index: {}]
  %s5 = sld [smem:[#allocation0]]
  $region49: #{deepseek_wrapper_forward.10} parent=0
    _
  %s7 = ssub.s32 1, %s5
  %s8 = scalar_select 0, %s7, %s5
  loop: start=0, step=1, limit=4
  $region2: #{deepseek_wrapper_forward.10} parent=0 // loop_pre_header
    _
  $region3: #{deepseek_wrapper_forward.10} parent=0 // loop_header
    %s10 = sphi 0, %s14
    %p11 = scmp.ge.s32.totalorder %s10, 4
    %s20 = sphi 0, %s22
    %s23 = sphi 0, %s20
    %s24 = sphi 0, %s23
    %s40 = sphi 0, %s24
    %s44 = sphi 0, %s44
    %s46 = sphi 0, %s44
    %s47 = sphi 0, %s46
    %s61 = sphi 0, %s47
    %s65 = sphi 0, %s65
    %s67 = sphi 0, %s65
    %s68 = sphi 0, %s67
    %s82 = sphi 0, %s68
    %s88 = sphi 0, %s90
    %s91 = sphi 0, %s88
    %s92 = sphi 0, %s91
    %s108 = sphi 0, %s92
    %s114 = sphi 0, %s116
    %s117 = sphi 0, %s114
    %s118 = sphi 0, %s117
    %s134 = sphi 0, %s118
  $region4: #{deepseek_wrapper_forward.10} parent=0 // loop_header_branch
    %13 = sbr.rel (%p11) target = $region8
  $region5: #{deepseek_wrapper_forward.10} parent=0 // loop_body
    %s15 = ssub.s32 %s10, 1
    %s16 = ssub.s32 %s10, 2
    %s17 = sadd.s32 %s10, 1
    %s18 = ssub.s32 %s10, %s17
    %p19 = scmp.eq.s32.totalorder %s18, 0
    %s21 = sadd.s32 %s20, 1
    %s22 = scalar_select %p19, %s20, %s21
    %p25 = pneg %p19
    %p26 = scmp.eq.s32.totalorder %s10, 1
    %p27 = por %p25, %p26
    %p28 = scmp.ne.s32.totalorder %s20, %s23
    %p29 = scmp.eq.s32.totalorder %s10, 0
    %p30 = por %p28, %p29
    %p31 = scmp.ne.s32.totalorder %s20, %s23
    %p32 = scmp.eq.s32.totalorder %s15, 1
    %p33 = por %p31, %p32
    %p34 = scmp.ne.s32.totalorder %s23, %s24
    %p35 = scmp.eq.s32.totalorder %s15, 0
    %p36 = por %p34, %p35
    %p37 = scmp.ne.s32.totalorder %s23, %s24
    %p38 = scmp.eq.s32.totalorder %s16, 1
    %p39 = por %p37, %p38
    %p41 = scmp.ne.s32.totalorder %s24, %s40
    %p42 = scmp.eq.s32.totalorder %s16, 0
    %p43 = por %p41, %p42
    %s45 = sadd.s32 %s44, 1
    %p48 = scmp.eq.s32.totalorder %s10, 1
    %p49 = scmp.ne.s32.totalorder %s44, %s46
    %p50 = scmp.eq.s32.totalorder %s10, 0
    %p51 = por %p49, %p50
    %p52 = scmp.ne.s32.totalorder %s44, %s46
    %p53 = scmp.eq.s32.totalorder %s15, 1
    %p54 = por %p52, %p53
    %p55 = scmp.ne.s32.totalorder %s46, %s47
    %p56 = scmp.eq.s32.totalorder %s15, 0
    %p57 = por %p55, %p56
    %p58 = scmp.ne.s32.totalorder %s46, %s47
    %p59 = scmp.eq.s32.totalorder %s16, 1
    %p60 = por %p58, %p59
    %p62 = scmp.ne.s32.totalorder %s47, %s61
    %p63 = scmp.eq.s32.totalorder %s16, 0
    %p64 = por %p62, %p63
    %s66 = sadd.s32 %s65, 1
    %p69 = scmp.eq.s32.totalorder %s10, 1
    %p70 = scmp.ne.s32.totalorder %s65, %s67
    %p71 = scmp.eq.s32.totalorder %s10, 0
    %p72 = por %p70, %p71
    %p73 = scmp.ne.s32.totalorder %s65, %s67
    %p74 = scmp.eq.s32.totalorder %s15, 1
    %p75 = por %p73, %p74
    %p76 = scmp.ne.s32.totalorder %s67, %s68
    %p77 = scmp.eq.s32.totalorder %s15, 0
    %p78 = por %p76, %p77
    %p79 = scmp.ne.s32.totalorder %s67, %s68
    %p80 = scmp.eq.s32.totalorder %s16, 1
    %p81 = por %p79, %p80
    %p83 = scmp.ne.s32.totalorder %s68, %s82
    %p84 = scmp.eq.s32.totalorder %s16, 0
    %p85 = por %p83, %p84
    %s86 = ssub.s32 %s10, %s17
    %p87 = scmp.eq.s32.totalorder %s86, 0
    %s89 = sadd.s32 %s88, 1
    %s90 = scalar_select %p87, %s88, %s89
    %p93 = pneg %p87
    %p94 = scmp.eq.s32.totalorder %s10, 1
    %p95 = por %p93, %p94
    %p96 = scmp.ne.s32.totalorder %s88, %s91
    %p97 = scmp.eq.s32.totalorder %s10, 0
    %p98 = por %p96, %p97
    %p99 = scmp.ne.s32.totalorder %s88, %s91
    %p100 = scmp.eq.s32.totalorder %s15, 1
    %p101 = por %p99, %p100
    %p102 = scmp.ne.s32.totalorder %s91, %s92
    %p103 = scmp.eq.s32.totalorder %s15, 0
    %p104 = por %p102, %p103
    %p105 = scmp.ne.s32.totalorder %s91, %s92
    %p106 = scmp.eq.s32.totalorder %s16, 1
    %p107 = por %p105, %p106
    %p109 = scmp.ne.s32.totalorder %s92, %s108
    %p110 = scmp.eq.s32.totalorder %s16, 0
    %p111 = por %p109, %p110
    %s112 = ssub.s32 %s10, %s17
    %p113 = scmp.eq.s32.totalorder %s112, 0
    %s115 = sadd.s32 %s114, 1
    %s116 = scalar_select %p113, %s114, %s115
    %p119 = pneg %p113
    %p120 = scmp.eq.s32.totalorder %s10, 1
    %p121 = por %p119, %p120
    %p122 = scmp.ne.s32.totalorder %s114, %s117
    %p123 = scmp.eq.s32.totalorder %s10, 0
    %p124 = por %p122, %p123
    %p125 = scmp.ne.s32.totalorder %s114, %s117
    %p126 = scmp.eq.s32.totalorder %s15, 1
    %p127 = por %p125, %p126
    %p128 = scmp.ne.s32.totalorder %s117, %s118
    %p129 = scmp.eq.s32.totalorder %s15, 0
    %p130 = por %p128, %p129
    %p131 = scmp.ne.s32.totalorder %s117, %s118
    %p132 = scmp.eq.s32.totalorder %s16, 1
    %p133 = por %p131, %p132
    %p135 = scmp.ne.s32.totalorder %s118, %s134
    %p136 = scmp.eq.s32.totalorder %s16, 0
    %p137 = por %p135, %p136
    %p138 = scmp.le.s32.totalorder 1, %s10
    %p139 = scmp.lt.s32.totalorder %s10, 3
    %p140 = pnand %p138, %p139
    %p141 = pneg %p140
    // Predicated region
    $region9: #{deepseek_wrapper_forward.10} parent=5 // pred_check
      _
    $region10: #{deepseek_wrapper_forward.10} parent=5 // pred_check_branch
      %143 = sbr.rel (%p140) target = $region12
    $region11: #{deepseek_wrapper_forward.10} parent=5 // pred_region
      %s144 = ssub.s32 %s10, 1
      // Predicated region
      $region13: #{deepseek_wrapper_forward.10} parent=11 // pred_check
        %p145 = pneg %p57
      $region14: #{deepseek_wrapper_forward.10} parent=11 // pred_check_branch
        %147 = sbr.rel (%p145) target = $region16
      $region15: #{deepseek_wrapper_forward.10} parent=11 // pred_region
        _
      $region16: #{deepseek_wrapper_forward.10} parent=11 // pred_fallthru
        _
      // Predicated region
      $region17: #{deepseek_wrapper_forward.10} parent=11 // pred_check
        %p148 = pneg %p78
      $region18: #{deepseek_wrapper_forward.10} parent=11 // pred_check_branch
        %150 = sbr.rel (%p148) target = $region20
      $region19: #{deepseek_wrapper_forward.10} parent=11 // pred_region
        _
      $region20: #{deepseek_wrapper_forward.10} parent=11 // pred_fallthru
        _
    $region12: #{deepseek_wrapper_forward.10} parent=5 // pred_fallthru
      _
    %p151 = scmp.lt.s32.totalorder %s10, 2
    // Predicated region
    $region21: #{deepseek_wrapper_forward.10} parent=5 // pred_check
      %p152 = pneg %p151
    $region22: #{deepseek_wrapper_forward.10} parent=5 // pred_check_branch
      %154 = sbr.rel (%p152) target = $region24
    $region23: #{deepseek_wrapper_forward.10} parent=5 // pred_region
      // Predicated region
      $region25: #{deepseek_wrapper_forward.10} parent=23 // pred_check
        %p155 = pneg %p30
      $region26: #{deepseek_wrapper_forward.10} parent=23 // pred_check_branch
        %157 = sbr.rel (%p155) target = $region28
      $region27: #{deepseek_wrapper_forward.10} parent=23 // pred_region
        %p158 = scmp.lt.s32.totalorder %s10, 1
        %s159 = scalar_select %p158, %s10, 1
        %s160 = smul.addr %s159, 6
        %s161 = smul.addr %s160, 4
        %s162 = scalar_lea.vmem %s0, %s161
      $region28: #{deepseek_wrapper_forward.10} parent=23 // pred_fallthru
        _
      // Predicated region
      $region29: #{deepseek_wrapper_forward.10} parent=23 // pred_check
        %p163 = pneg %p98
      $region30: #{deepseek_wrapper_forward.10} parent=23 // pred_check_branch
        %165 = sbr.rel (%p163) target = $region32
      $region31: #{deepseek_wrapper_forward.10} parent=23 // pred_region
        %p166 = scmp.lt.s32.totalorder %s10, 1
        %s167 = scalar_select %p166, %s10, 1
        %s168 = scalar_lea.vmem %s3, %s167
      $region32: #{deepseek_wrapper_forward.10} parent=23 // pred_fallthru
        _
    $region24: #{deepseek_wrapper_forward.10} parent=5 // pred_fallthru
      _
    %p169 = scmp.le.s32.totalorder 1, %s10
    %p170 = scmp.lt.s32.totalorder %s10, 3
    %p171 = pnand %p169, %p170
    %p172 = pneg %p171
    // Predicated region
    $region33: #{deepseek_wrapper_forward.10} parent=5 // pred_check
      _
    $region34: #{deepseek_wrapper_forward.10} parent=5 // pred_check_branch
      %174 = sbr.rel (%p171) target = $region36
    $region35: #{deepseek_wrapper_forward.10} parent=5 // pred_region
      %s175 = ssub.s32 %s10, 1
      %p176 = scmp.lt.s32.totalorder %s15, 1
      %s177 = scalar_select %p176, %s15, 1
      %s178 = smul.addr %s177, 6
      %s179 = smul.addr %s178, 4
      %s180 = scalar_lea.vmem %s0, %s179
      %p181 = pneg %p36
      %p182 = pneg %p33
      %p183 = pneg %p57
      %p184 = pneg %p54
      %p185 = pneg %p78
      %p186 = pneg %p75
      %p187 = scmp.lt.s32.totalorder %s15, 1
      %s188 = scalar_select %p187, %s15, 1
      %s189 = scalar_lea.vmem %s3, %s188
      %p190 = pneg %p104
      %p191 = pneg %p101
      %p192 = pneg %p130
      %p193 = pneg %p127
      %p194 = scmp.lt.s32.totalorder %s15, 1
      %s195 = scalar_select %p194, %s15, 1
      %s196 = smul.addr %s195, 2
      %s197 = smul.addr %s196, 4
      %s198 = scalar_lea.vmem %s4, %s197
      %p199 = scmp.lt.s32.totalorder %s15, 1
      %s200 = scalar_select %p199, %s15, 1
      %s201 = smul.addr %s200, 6
      %s202 = smul.addr %s201, 4
      %s203 = scalar_lea.vmem %s0, %s202
      %p204 = scmp.lt.s32.totalorder %s15, 1
      %s205 = scalar_select %p204, %s15, 1
      %s206 = scalar_lea.vmem %s3, %s205
      %p207 = scmp.lt.s32.totalorder %s15, 1
      %s208 = scalar_select %p207, %s15, 1
      %s209 = smul.addr %s208, 2
      %s210 = smul.addr %s209, 4
      %s211 = scalar_lea.vmem %s4, %s210
      %v213 = vld [vmem:[%s1] sm:$0xff]
      %v214 = vld [vmem:[%s1 + $0x8] sm:$0xff]
      %v215 = vld [vmem:[%s2] sm:$0xff]
      %v216 = vld [vmem:[%s2 + $0x8] sm:$0xff]
      %v217 = vlaneseq
      %v218 = vshrl.u32 %v217, 7
      %v219 = vadd.s32 %v218, 8
      %v220 = vlaneseq
      %v221 = vand.u32 %v220, 127
      %vm222 = vcmp.gt.s32.totalorder %v221, %v218
      %vm223 = vcmp.gt.s32.totalorder %v221, %v219
      %v224 = vsel %vm222, -3.4028235e+38, 0.0
      %v225 = vsel %vm223, -3.4028235e+38, 0.0
      %v226 = vld [vmem:[%s206] sm:$0x1]
      %v228 = vlaneseq
      %v229 = vshrl.u32 %v228, 7
      %v230 = vsub.s32 0, %v229
      %v231 = vrot.slane %v226, %v230
      %v233 = vadd.f32 %v224, %v231
      %v234 = vadd.f32 %v225, %v231
      %v235 = vmax.f32 %v233, -3.4028235e+38
      %v236 = vmax.f32 %v234, -3.4028235e+38
      %v237 = vld [vmem:[%s203] sm:$0xff]
      %v238 = vld [vmem:[%s203 + $0x8] sm:$0xf]
      %v239 = vld [vmem:[%s203 + $0xc] sm:$0xff]
      %v240 = vld [vmem:[%s203 + $0x14] sm:$0xf]
      %v241 = vunpack.c.l.bf16 %v237
      %v242 = vunpack.c.h.bf16 %v237
      %v243 = vunpack.c.l.bf16 %v239
      %v244 = vunpack.c.h.bf16 %v239
      %v245 = vmul.f32 %v241, %v213
      %v246 = vmul.f32 %v243, %v214
      %v247 = vsub.f32 0.0, %v241
      %v248 = vsub.f32 0.0, %v243
      %251 = vrot.lane.b32.xlu0 %v247, 112
      %v252 = vpop.permute.xlu0 %251
      %253 = vrot.lane.b32.xlu0 %v248, 112
      %v254 = vpop.permute.xlu0 %253
      %259 = vrot.lane.b32.xlu0 %v241, 16
      %v260 = vpop.permute.xlu0 %259
      %261 = vrot.lane.b32.xlu0 %v243, 16
      %v262 = vpop.permute.xlu0 %261
      %vm265 = vcmask 130048
      %v266 = vsel %vm265, %v252, %v260
      %v267 = vsel %vm265, %v254, %v262
      %v268 = vmul.f32 %v266, %v215
      %v269 = vmul.f32 %v267, %v216
      %v270 = vadd.f32 %v245, %v268
      %v271 = vadd.f32 %v246, %v269
      %v272 = vmul.f32 %v242, %v213
      %v273 = vmul.f32 %v244, %v214
      %v274 = vsub.f32 0.0, %v242
      %v275 = vsub.f32 0.0, %v244
      %278 = vrot.lane.b32.xlu0 %v274, 112
      %v279 = vpop.permute.xlu0 %278
      %280 = vrot.lane.b32.xlu0 %v275, 112
      %v281 = vpop.permute.xlu0 %280
      %286 = vrot.lane.b32.xlu0 %v242, 16
      %v287 = vpop.permute.xlu0 %286
      %288 = vrot.lane.b32.xlu0 %v244, 16
      %v289 = vpop.permute.xlu0 %288
      %v292 = vsel %vm265, %v279, %v287
      %v293 = vsel %vm265, %v281, %v289
      %v294 = vmul.f32 %v292, %v215
      %v295 = vmul.f32 %v293, %v216
      %v296 = vadd.f32 %v272, %v294
      %v297 = vadd.f32 %v273, %v295
      %v298 = vpack.c.bf16 %v271, %v270
      %v299 = vpack.c.bf16 %v297, %v296
      %vm300 = vcmask 261120
      %v302 = vsel %vm300, %v298, 0
      %v305 = vsel %vm300, %v299, 0
      %307 = vmatprep.subr.bf16.mxu0 0
      %308 = vmatpush1.bf16.xpose.msra.mxu0 0
      %309 = vmatprep.subr.bf16.mxu0 0
      %310 = vmatpush1.bf16.xpose.msra.mxu0 0
      %311 = vmatprep.subr.bf16.mxu0 0
      %312 = vmatpush1.bf16.xpose.msra.mxu0 0
      %313 = vmatprep.subr.bf16.mxu0 0
      %314 = vmatpush1.bf16.xpose.msra.mxu0 0
      %315 = vmatprep.subr.bf16.mxu0 0
      %316 = vmatpush1.bf16.xpose.msra.mxu0 0
      %317 = vmatprep.subr.bf16.mxu0 0
      %318 = vmatpush1.bf16.xpose.msra.mxu0 0
      %319 = vmatprep.subr.bf16.mxu0 0
      %320 = vmatpush1.bf16.xpose.msra.mxu0 0
      %321 = vmatprep.subr.bf16.mxu0 0
      %322 = vmatpush1.bf16.xpose.msra.mxu0 %v305
      %323 = vmatprep.subr.bf16.mxu0 0
      %324 = vmatpush2.bf16.xpose.msra.mxu0 0
      %325 = vmatprep.subr.bf16.mxu0 0
      %326 = vmatpush2.bf16.xpose.msra.mxu0 0
      %327 = vmatprep.subr.bf16.mxu0 0
      %328 = vmatpush2.bf16.xpose.msra.mxu0 0
      %329 = vmatprep.subr.bf16.mxu0 0
      %330 = vmatpush2.bf16.xpose.msra.mxu0 0
      %331 = vmatprep.subr.bf16.mxu0 0
      %332 = vmatpush2.bf16.xpose.msra.mxu0 0
      %333 = vmatprep.subr.bf16.mxu0 0
      %334 = vmatpush2.bf16.xpose.msra.mxu0 0
      %335 = vmatprep.subr.bf16.mxu0 0
      %336 = vmatpush2.bf16.xpose.msra.mxu0 0
      %337 = vmatprep.subr.bf16.mxu0 0
      %338 = vmatpush2.bf16.xpose.msra.mxu0 0
      %339 = vmatprep.mubr.bf16.mxu0 0
      %340 = vmatmul.mubr.bf16.gmra.mxu0 %v302
      %v341 = vpop.f32.mrf.mxu0
      %v342 = vadd.f32 0.0, %v341
      %v343 = vpop.f32.mrf.mxu0
      %v344 = vpop.f32.mrf.mxu0
      %v345 = vadd.f32 0.0, %v344
      %v346 = vpop.f32.mrf.mxu0
      %347 = vdwg.mxu0
      %v348 = vmul.f32 %v342, 0.17677669
      %v349 = vmul.f32 %v345, 0.17677669
      %v350 = vadd.f32 %v348, %v235
      %v351 = vadd.f32 %v349, %v236
      %v352 = vsel %vm265, %v350, -inf
      %353 = vmax.xlane.f32.xlu0 %v352
      %v354 = vpop.xlane.xlu0 %353
      %v355 = vsel %vm265, %v351, -inf
      %356 = vmax.xlane.f32.xlu0 %v355
      %v357 = vpop.xlane.xlu0 %356
      %v358 = vsub.f32 %v350, %v354
      %v359 = vsub.f32 %v351, %v357
      %v360 = vmul.f32 %v358, 1.442695
      %v361 = vpow.pop %v360
      %v362 = vmul.f32 %v359, 1.442695
      %v363 = vpow.pop %v362
      %v364 = vsel %vm265, %v361, 0.0
      %365 = vadd.xlane.f32.xlu0 %v364
      %v366 = vpop.xlane.xlu0 %365
      %v367 = vsel %vm265, %v363, 0.0
      %368 = vadd.xlane.f32.xlu0 %v367
      %v369 = vpop.xlane.xlu0 %368
      %v370 = vpack.c.bf16 %v363, %v361
      %v373 = vunpack.c.l.b16 %v238
      %v374 = vunpack.c.l.b16 %v240
      %v375 = vpack.c.b16 %v374, %v373
      %v378 = vsel %vm265, %v370, 0
      %380 = vmatprep.subr.bf16.mxu0 0
      %381 = vmatpush1.bf16.msra.mxu0 0
      %382 = vmatprep.subr.bf16.mxu0 0
      %383 = vmatpush1.bf16.msra.mxu0 0
      %384 = vmatprep.subr.bf16.mxu0 0
      %385 = vmatpush1.bf16.msra.mxu0 0
      %386 = vmatprep.subr.bf16.mxu0 0
      %387 = vmatpush1.bf16.msra.mxu0 0
      %388 = vmatprep.subr.bf16.mxu0 0
      %389 = vmatpush1.bf16.msra.mxu0 0
      %390 = vmatprep.subr.bf16.mxu0 0
      %391 = vmatpush1.bf16.msra.mxu0 0
      %392 = vmatprep.subr.bf16.mxu0 0
      %393 = vmatpush1.bf16.msra.mxu0 0
      %394 = vmatprep.subr.bf16.mxu0 0
      %395 = vmatpush1.bf16.msra.mxu0 %v375
      %396 = vmatprep.subr.bf16.mxu0 0
      %397 = vmatpush2.bf16.msra.mxu0 0
      %398 = vmatprep.subr.bf16.mxu0 0
      %399 = vmatpush2.bf16.msra.mxu0 0
      %400 = vmatprep.subr.bf16.mxu0 0
      %401 = vmatpush2.bf16.msra.mxu0 0
      %402 = vmatprep.subr.bf16.mxu0 0
      %403 = vmatpush2.bf16.msra.mxu0 0
      %404 = vmatprep.subr.bf16.mxu0 0
      %405 = vmatpush2.bf16.msra.mxu0 0
      %406 = vmatprep.subr.bf16.mxu0 0
      %407 = vmatpush2.bf16.msra.mxu0 0
      %408 = vmatprep.subr.bf16.mxu0 0
      %409 = vmatpush2.bf16.msra.mxu0 0
      %410 = vmatprep.subr.bf16.mxu0 0
      %411 = vmatpush2.bf16.msra.mxu0 0
      %412 = vmatprep.mubr.bf16.mxu0 0
      %413 = vmatmul.mubr.bf16.gmra.mxu0 %v378
      %v414 = vpop.f32.mrf.mxu0
      %v415 = vadd.f32 0.0, %v414
      %v416 = vpop.f32.mrf.mxu0
      %v417 = vpop.f32.mrf.mxu0
      %v418 = vadd.f32 0.0, %v417
      %v419 = vpop.f32.mrf.mxu0
      %420 = vdwg.mxu0
      %v421 = vrcp.pop %v366
      %v422 = vrcp.pop %v369
      %v423 = vmul.f32 %v415, %v421
      %v424 = vmul.f32 %v418, %v422
      %427 = vrot.lane.b32.xlu0 %v213, 32
      %v428 = vpop.permute.xlu0 %427
      %429 = vrot.lane.b32.xlu0 %v214, 32
      %v430 = vpop.permute.xlu0 %429
      %v433 = vmul.f32 %v241, %v428
      %v434 = vmul.f32 %v243, %v430
      %435 = vrot.lane.b32.xlu0 %v247, 80
      %v436 = vpop.permute.xlu0 %435
      %437 = vrot.lane.b32.xlu0 %v248, 80
      %v438 = vpop.permute.xlu0 %437
      %441 = vrot.lane.b32.xlu0 %v241, 112
      %v442 = vpop.permute.xlu0 %441
      %443 = vrot.lane.b32.xlu0 %v243, 112
      %v444 = vpop.permute.xlu0 %443
      %v447 = vsel %vm265, %v436, %v442
      %v448 = vsel %vm265, %v438, %v444
      %v449 = vmul.f32 %v447, %v215
      %v450 = vmul.f32 %v448, %v216
      %453 = vrot.lane.b32.xlu0 %v449, 32
      %v454 = vpop.permute.xlu0 %453
      %455 = vrot.lane.b32.xlu0 %v450, 32
      %v456 = vpop.permute.xlu0 %455
      %v459 = vadd.f32 %v433, %v454
      %v460 = vadd.f32 %v434, %v456
      %v461 = vmul.f32 %v242, %v428
      %v462 = vmul.f32 %v244, %v430
      %463 = vrot.lane.b32.xlu0 %v274, 80
      %v464 = vpop.permute.xlu0 %463
      %465 = vrot.lane.b32.xlu0 %v275, 80
      %v466 = vpop.permute.xlu0 %465
      %469 = vrot.lane.b32.xlu0 %v242, 112
      %v470 = vpop.permute.xlu0 %469
      %471 = vrot.lane.b32.xlu0 %v244, 112
      %v472 = vpop.permute.xlu0 %471
      %v475 = vsel %vm265, %v464, %v470
      %v476 = vsel %vm265, %v466, %v472
      %v477 = vmul.f32 %v475, %v215
      %v478 = vmul.f32 %v476, %v216
      %481 = vrot.lane.b32.xlu0 %v477, 32
      %v482 = vpop.permute.xlu0 %481
      %483 = vrot.lane.b32.xlu0 %v478, 32
      %v484 = vpop.permute.xlu0 %483
      %v487 = vadd.f32 %v461, %v482
      %v488 = vadd.f32 %v462, %v484
      %v489 = vpack.c.bf16 %v460, %v459
      %v490 = vpack.c.bf16 %v488, %v487
      %492 = vrot.lane.b32.xlu0 %v489, 96
      %v493 = vpop.permute.xlu0 %492
      %495 = vrot.lane.b32.xlu0 %v490, 96
      %v496 = vpop.permute.xlu0 %495
      %v498 = vsel %vm300, %v493, 0
      %v501 = vsel %vm300, %v496, 0
      %503 = vmatprep.subr.bf16.mxu0 0
      %504 = vmatpush1.bf16.xpose.msra.mxu0 0
      %505 = vmatprep.subr.bf16.mxu0 0
      %506 = vmatpush1.bf16.xpose.msra.mxu0 0
      %507 = vmatprep.subr.bf16.mxu0 0
      %508 = vmatpush1.bf16.xpose.msra.mxu0 0
      %509 = vmatprep.subr.bf16.mxu0 0
      %510 = vmatpush1.bf16.xpose.msra.mxu0 0
      %511 = vmatprep.subr.bf16.mxu0 0
      %512 = vmatpush1.bf16.xpose.msra.mxu0 0
      %513 = vmatprep.subr.bf16.mxu0 0
      %514 = vmatpush1.bf16.xpose.msra.mxu0 0
      %515 = vmatprep.subr.bf16.mxu0 0
      %516 = vmatpush1.bf16.xpose.msra.mxu0 0
      %517 = vmatprep.subr.bf16.mxu0 0
      %518 = vmatpush1.bf16.xpose.msra.mxu0 %v501
      %519 = vmatprep.subr.bf16.mxu0 0
      %520 = vmatpush2.bf16.xpose.msra.mxu0 0
      %521 = vmatprep.subr.bf16.mxu0 0
      %522 = vmatpush2.bf16.xpose.msra.mxu0 0
      %523 = vmatprep.subr.bf16.mxu0 0
      %524 = vmatpush2.bf16.xpose.msra.mxu0 0
      %525 = vmatprep.subr.bf16.mxu0 0
      %526 = vmatpush2.bf16.xpose.msra.mxu0 0
      %527 = vmatprep.subr.bf16.mxu0 0
      %528 = vmatpush2.bf16.xpose.msra.mxu0 0
      %529 = vmatprep.subr.bf16.mxu0 0
      %530 = vmatpush2.bf16.xpose.msra.mxu0 0
      %531 = vmatprep.subr.bf16.mxu0 0
      %532 = vmatpush2.bf16.xpose.msra.mxu0 0
      %533 = vmatprep.subr.bf16.mxu0 0
      %534 = vmatpush2.bf16.xpose.msra.mxu0 0
      %535 = vmatprep.mubr.bf16.mxu0 0
      %536 = vmatmul.mubr.bf16.gmra.mxu0 %v498
      %v537 = vpop.f32.mrf.mxu0
      %v538 = vadd.f32 0.0, %v537
      %v539 = vpop.f32.mrf.mxu0
      %v540 = vpop.f32.mrf.mxu0
      %v541 = vadd.f32 0.0, %v540
      %v542 = vpop.f32.mrf.mxu0
      %543 = vdwg.mxu0
      %v544 = vmul.f32 %v538, 0.17677669
      %v545 = vmul.f32 %v541, 0.17677669
      %v546 = vadd.f32 %v544, %v235
      %v547 = vadd.f32 %v545, %v236
      %v548 = vsel %vm265, %v546, -inf
      %549 = vmax.xlane.f32.xlu0 %v548
      %v550 = vpop.xlane.xlu0 %549
      %v551 = vsel %vm265, %v547, -inf
      %552 = vmax.xlane.f32.xlu0 %v551
      %v553 = vpop.xlane.xlu0 %552
      %v554 = vsub.f32 %v546, %v550
      %v555 = vsub.f32 %v547, %v553
      %v556 = vmul.f32 %v554, 1.442695
      %v557 = vpow.pop %v556
      %v558 = vmul.f32 %v555, 1.442695
      %v559 = vpow.pop %v558
      %v560 = vsel %vm265, %v557, 0.0
      %561 = vadd.xlane.f32.xlu0 %v560
      %v562 = vpop.xlane.xlu0 %561
      %v563 = vsel %vm265, %v559, 0.0
      %564 = vadd.xlane.f32.xlu0 %v563
      %v565 = vpop.xlane.xlu0 %564
      %v566 = vpack.c.bf16 %v559, %v557
      %567 = vrot.lane.b32.xlu0 %v375, 96
      %v568 = vpop.permute.xlu0 %567
      %v571 = vsel %vm265, %v566, 0
      %573 = vmatprep.subr.bf16.mxu0 0
      %574 = vmatpush1.bf16.msra.mxu0 0
      %575 = vmatprep.subr.bf16.mxu0 0
      %576 = vmatpush1.bf16.msra.mxu0 0
      %577 = vmatprep.subr.bf16.mxu0 0
      %578 = vmatpush1.bf16.msra.mxu0 0
      %579 = vmatprep.subr.bf16.mxu0 0
      %580 = vmatpush1.bf16.msra.mxu0 0
      %581 = vmatprep.subr.bf16.mxu0 0
      %582 = vmatpush1.bf16.msra.mxu0 0
      %583 = vmatprep.subr.bf16.mxu0 0
      %584 = vmatpush1.bf16.msra.mxu0 0
      %585 = vmatprep.subr.bf16.mxu0 0
      %586 = vmatpush1.bf16.msra.mxu0 0
      %587 = vmatprep.subr.bf16.mxu0 0
      %588 = vmatpush1.bf16.msra.mxu0 %v568
      %589 = vmatprep.subr.bf16.mxu0 0
      %590 = vmatpush2.bf16.msra.mxu0 0
      %591 = vmatprep.subr.bf16.mxu0 0
      %592 = vmatpush2.bf16.msra.mxu0 0
      %593 = vmatprep.subr.bf16.mxu0 0
      %594 = vmatpush2.bf16.msra.mxu0 0
      %595 = vmatprep.subr.bf16.mxu0 0
      %596 = vmatpush2.bf16.msra.mxu0 0
      %597 = vmatprep.subr.bf16.mxu0 0
      %598 = vmatpush2.bf16.msra.mxu0 0
      %599 = vmatprep.subr.bf16.mxu0 0
      %600 = vmatpush2.bf16.msra.mxu0 0
      %601 = vmatprep.subr.bf16.mxu0 0
      %602 = vmatpush2.bf16.msra.mxu0 0
      %603 = vmatprep.subr.bf16.mxu0 0
      %604 = vmatpush2.bf16.msra.mxu0 0
      %605 = vmatprep.mubr.bf16.mxu0 0
      %606 = vmatmul.mubr.bf16.gmra.mxu0 %v571
      %v607 = vpop.f32.mrf.mxu0
      %v608 = vadd.f32 0.0, %v607
      %v609 = vpop.f32.mrf.mxu0
      %v610 = vpop.f32.mrf.mxu0
      %v611 = vadd.f32 0.0, %v610
      %v612 = vpop.f32.mrf.mxu0
      %613 = vdwg.mxu0
      %v614 = vrcp.pop %v562
      %v615 = vrcp.pop %v565
      %v616 = vmul.f32 %v608, %v614
      %v617 = vmul.f32 %v611, %v615
      %618 = vrot.lane.b32.xlu0 %v213, 64
      %v619 = vpop.permute.xlu0 %618
      %620 = vrot.lane.b32.xlu0 %v214, 64
      %v621 = vpop.permute.xlu0 %620
      %v624 = vmul.f32 %v241, %v619
      %v625 = vmul.f32 %v243, %v621
      %626 = vrot.lane.b32.xlu0 %v247, 48
      %v627 = vpop.permute.xlu0 %626
      %628 = vrot.lane.b32.xlu0 %v248, 48
      %v629 = vpop.permute.xlu0 %628
      %632 = vrot.lane.b32.xlu0 %v241, 80
      %v633 = vpop.permute.xlu0 %632
      %634 = vrot.lane.b32.xlu0 %v243, 80
      %v635 = vpop.permute.xlu0 %634
      %v638 = vsel %vm265, %v627, %v633
      %v639 = vsel %vm265, %v629, %v635
      %v640 = vmul.f32 %v638, %v215
      %v641 = vmul.f32 %v639, %v216
      %644 = vrot.lane.b32.xlu0 %v640, 64
      %v645 = vpop.permute.xlu0 %644
      %646 = vrot.lane.b32.xlu0 %v641, 64
      %v647 = vpop.permute.xlu0 %646
      %v650 = vadd.f32 %v624, %v645
      %v651 = vadd.f32 %v625, %v647
      %v652 = vmul.f32 %v242, %v619
      %v653 = vmul.f32 %v244, %v621
      %654 = vrot.lane.b32.xlu0 %v274, 48
      %v655 = vpop.permute.xlu0 %654
      %656 = vrot.lane.b32.xlu0 %v275, 48
      %v657 = vpop.permute.xlu0 %656
      %660 = vrot.lane.b32.xlu0 %v242, 80
      %v661 = vpop.permute.xlu0 %660
      %662 = vrot.lane.b32.xlu0 %v244, 80
      %v663 = vpop.permute.xlu0 %662
      %v666 = vsel %vm265, %v655, %v661
      %v667 = vsel %vm265, %v657, %v663
      %v668 = vmul.f32 %v666, %v215
      %v669 = vmul.f32 %v667, %v216
      %672 = vrot.lane.b32.xlu0 %v668, 64
      %v673 = vpop.permute.xlu0 %672
      %674 = vrot.lane.b32.xlu0 %v669, 64
      %v675 = vpop.permute.xlu0 %674
      %v678 = vadd.f32 %v652, %v673
      %v679 = vadd.f32 %v653, %v675
      %v680 = vpack.c.bf16 %v651, %v650
      %v681 = vpack.c.bf16 %v679, %v678
      %683 = vrot.lane.b32.xlu0 %v680, 64
      %v684 = vpop.permute.xlu0 %683
      %686 = vrot.lane.b32.xlu0 %v681, 64
      %v687 = vpop.permute.xlu0 %686
      %v689 = vsel %vm300, %v684, 0
      %v692 = vsel %vm300, %v687, 0
      %694 = vmatprep.subr.bf16.mxu0 0
      %695 = vmatpush1.bf16.xpose.msra.mxu0 0
      %696 = vmatprep.subr.bf16.mxu0 0
      %697 = vmatpush1.bf16.xpose.msra.mxu0 0
      %698 = vmatprep.subr.bf16.mxu0 0
      %699 = vmatpush1.bf16.xpose.msra.mxu0 0
      %700 = vmatprep.subr.bf16.mxu0 0
      %701 = vmatpush1.bf16.xpose.msra.mxu0 0
      %702 = vmatprep.subr.bf16.mxu0 0
      %703 = vmatpush1.bf16.xpose.msra.mxu0 0
      %704 = vmatprep.subr.bf16.mxu0 0
      %705 = vmatpush1.bf16.xpose.msra.mxu0 0
      %706 = vmatprep.subr.bf16.mxu0 0
      %707 = vmatpush1.bf16.xpose.msra.mxu0 0
      %708 = vmatprep.subr.bf16.mxu0 0
      %709 = vmatpush1.bf16.xpose.msra.mxu0 %v692
      %710 = vmatprep.subr.bf16.mxu0 0
      %711 = vmatpush2.bf16.xpose.msra.mxu0 0
      %712 = vmatprep.subr.bf16.mxu0 0
      %713 = vmatpush2.bf16.xpose.msra.mxu0 0
      %714 = vmatprep.subr.bf16.mxu0 0
      %715 = vmatpush2.bf16.xpose.msra.mxu0 0
      %716 = vmatprep.subr.bf16.mxu0 0
      %717 = vmatpush2.bf16.xpose.msra.mxu0 0
      %718 = vmatprep.subr.bf16.mxu0 0
      %719 = vmatpush2.bf16.xpose.msra.mxu0 0
      %720 = vmatprep.subr.bf16.mxu0 0
      %721 = vmatpush2.bf16.xpose.msra.mxu0 0
      %722 = vmatprep.subr.bf16.mxu0 0
      %723 = vmatpush2.bf16.xpose.msra.mxu0 0
      %724 = vmatprep.subr.bf16.mxu0 0
      %725 = vmatpush2.bf16.xpose.msra.mxu0 0
      %726 = vmatprep.mubr.bf16.mxu0 0
      %727 = vmatmul.mubr.bf16.gmra.mxu0 %v689
      %v728 = vpop.f32.mrf.mxu0
      %v729 = vadd.f32 0.0, %v728
      %v730 = vpop.f32.mrf.mxu0
      %v731 = vpop.f32.mrf.mxu0
      %v732 = vadd.f32 0.0, %v731
      %v733 = vpop.f32.mrf.mxu0
      %734 = vdwg.mxu0
      %v735 = vmul.f32 %v729, 0.17677669
      %v736 = vmul.f32 %v732, 0.17677669
      %v737 = vadd.f32 %v735, %v235
      %v738 = vadd.f32 %v736, %v236
      %v739 = vsel %vm265, %v737, -inf
      %740 = vmax.xlane.f32.xlu0 %v739
      %v741 = vpop.xlane.xlu0 %740
      %v742 = vsel %vm265, %v738, -inf
      %743 = vmax.xlane.f32.xlu0 %v742
      %v744 = vpop.xlane.xlu0 %743
      %v745 = vsub.f32 %v737, %v741
      %v746 = vsub.f32 %v738, %v744
      %v747 = vmul.f32 %v745, 1.442695
      %v748 = vpow.pop %v747
      %v749 = vmul.f32 %v746, 1.442695
      %v750 = vpow.pop %v749
      %v751 = vsel %vm265, %v748, 0.0
      %752 = vadd.xlane.f32.xlu0 %v751
      %v753 = vpop.xlane.xlu0 %752
      %v754 = vsel %vm265, %v750, 0.0
      %755 = vadd.xlane.f32.xlu0 %v754
      %v756 = vpop.xlane.xlu0 %755
      %v757 = vpack.c.bf16 %v750, %v748
      %758 = vrot.lane.b32.xlu0 %v375, 64
      %v759 = vpop.permute.xlu0 %758
      %v762 = vsel %vm265, %v757, 0
      %764 = vmatprep.subr.bf16.mxu0 0
      %765 = vmatpush1.bf16.msra.mxu0 0
      %766 = vmatprep.subr.bf16.mxu0 0
      %767 = vmatpush1.bf16.msra.mxu0 0
      %768 = vmatprep.subr.bf16.mxu0 0
      %769 = vmatpush1.bf16.msra.mxu0 0
      %770 = vmatprep.subr.bf16.mxu0 0
      %771 = vmatpush1.bf16.msra.mxu0 0
      %772 = vmatprep.subr.bf16.mxu0 0
      %773 = vmatpush1.bf16.msra.mxu0 0
      %774 = vmatprep.subr.bf16.mxu0 0
      %775 = vmatpush1.bf16.msra.mxu0 0
      %776 = vmatprep.subr.bf16.mxu0 0
      %777 = vmatpush1.bf16.msra.mxu0 0
      %778 = vmatprep.subr.bf16.mxu0 0
      %779 = vmatpush1.bf16.msra.mxu0 %v759
      %780 = vmatprep.subr.bf16.mxu0 0
      %781 = vmatpush2.bf16.msra.mxu0 0
      %782 = vmatprep.subr.bf16.mxu0 0
      %783 = vmatpush2.bf16.msra.mxu0 0
      %784 = vmatprep.subr.bf16.mxu0 0
      %785 = vmatpush2.bf16.msra.mxu0 0
      %786 = vmatprep.subr.bf16.mxu0 0
      %787 = vmatpush2.bf16.msra.mxu0 0
      %788 = vmatprep.subr.bf16.mxu0 0
      %789 = vmatpush2.bf16.msra.mxu0 0
      %790 = vmatprep.subr.bf16.mxu0 0
      %791 = vmatpush2.bf16.msra.mxu0 0
      %792 = vmatprep.subr.bf16.mxu0 0
      %793 = vmatpush2.bf16.msra.mxu0 0
      %794 = vmatprep.subr.bf16.mxu0 0
      %795 = vmatpush2.bf16.msra.mxu0 0
      %796 = vmatprep.mubr.bf16.mxu0 0
      %797 = vmatmul.mubr.bf16.gmra.mxu0 %v762
      %v798 = vpop.f32.mrf.mxu0
      %v799 = vadd.f32 0.0, %v798
      %v800 = vpop.f32.mrf.mxu0
      %v801 = vpop.f32.mrf.mxu0
      %v802 = vadd.f32 0.0, %v801
      %v803 = vpop.f32.mrf.mxu0
      %804 = vdwg.mxu0
      %v805 = vrcp.pop %v753
      %v806 = vrcp.pop %v756
      %v807 = vmul.f32 %v799, %v805
      %v808 = vmul.f32 %v802, %v806
      %809 = vrot.lane.b32.xlu0 %v213, 96
      %v810 = vpop.permute.xlu0 %809
      %811 = vrot.lane.b32.xlu0 %v214, 96
      %v812 = vpop.permute.xlu0 %811
      %v815 = vmul.f32 %v241, %v810
      %v816 = vmul.f32 %v243, %v812
      %817 = vrot.lane.b32.xlu0 %v247, 16
      %v818 = vpop.permute.xlu0 %817
      %819 = vrot.lane.b32.xlu0 %v248, 16
      %v820 = vpop.permute.xlu0 %819
      %823 = vrot.lane.b32.xlu0 %v241, 48
      %v824 = vpop.permute.xlu0 %823
      %825 = vrot.lane.b32.xlu0 %v243, 48
      %v826 = vpop.permute.xlu0 %825
      %v829 = vsel %vm265, %v818, %v824
      %v830 = vsel %vm265, %v820, %v826
      %v831 = vmul.f32 %v829, %v215
      %v832 = vmul.f32 %v830, %v216
      %835 = vrot.lane.b32.xlu0 %v831, 96
      %v836 = vpop.permute.xlu0 %835
      %837 = vrot.lane.b32.xlu0 %v832, 96
      %v838 = vpop.permute.xlu0 %837
      %v841 = vadd.f32 %v815, %v836
      %v842 = vadd.f32 %v816, %v838
      %v843 = vmul.f32 %v242, %v810
      %v844 = vmul.f32 %v244, %v812
      %845 = vrot.lane.b32.xlu0 %v274, 16
      %v846 = vpop.permute.xlu0 %845
      %847 = vrot.lane.b32.xlu0 %v275, 16
      %v848 = vpop.permute.xlu0 %847
      %851 = vrot.lane.b32.xlu0 %v242, 48
      %v852 = vpop.permute.xlu0 %851
      %853 = vrot.lane.b32.xlu0 %v244, 48
      %v854 = vpop.permute.xlu0 %853
      %v857 = vsel %vm265, %v846, %v852
      %v858 = vsel %vm265, %v848, %v854
      %v859 = vmul.f32 %v857, %v215
      %v860 = vmul.f32 %v858, %v216
      %863 = vrot.lane.b32.xlu0 %v859, 96
      %v864 = vpop.permute.xlu0 %863
      %865 = vrot.lane.b32.xlu0 %v860, 96
      %v866 = vpop.permute.xlu0 %865
      %v869 = vadd.f32 %v843, %v864
      %v870 = vadd.f32 %v844, %v866
      %v871 = vpack.c.bf16 %v842, %v841
      %v872 = vpack.c.bf16 %v870, %v869
      %874 = vrot.lane.b32.xlu0 %v871, 32
      %v875 = vpop.permute.xlu0 %874
      %877 = vrot.lane.b32.xlu0 %v872, 32
      %v878 = vpop.permute.xlu0 %877
      %v880 = vsel %vm300, %v875, 0
      %v883 = vsel %vm300, %v878, 0
      %885 = vmatprep.subr.bf16.mxu0 0
      %886 = vmatpush1.bf16.xpose.msra.mxu0 0
      %887 = vmatprep.subr.bf16.mxu0 0
      %888 = vmatpush1.bf16.xpose.msra.mxu0 0
      %889 = vmatprep.subr.bf16.mxu0 0
      %890 = vmatpush1.bf16.xpose.msra.mxu0 0
      %891 = vmatprep.subr.bf16.mxu0 0
      %892 = vmatpush1.bf16.xpose.msra.mxu0 0
      %893 = vmatprep.subr.bf16.mxu0 0
      %894 = vmatpush1.bf16.xpose.msra.mxu0 0
      %895 = vmatprep.subr.bf16.mxu0 0
      %896 = vmatpush1.bf16.xpose.msra.mxu0 0
      %897 = vmatprep.subr.bf16.mxu0 0
      %898 = vmatpush1.bf16.xpose.msra.mxu0 0
      %899 = vmatprep.subr.bf16.mxu0 0
      %900 = vmatpush1.bf16.xpose.msra.mxu0 %v883
      %901 = vmatprep.subr.bf16.mxu0 0
      %902 = vmatpush2.bf16.xpose.msra.mxu0 0
      %903 = vmatprep.subr.bf16.mxu0 0
      %904 = vmatpush2.bf16.xpose.msra.mxu0 0
      %905 = vmatprep.subr.bf16.mxu0 0
      %906 = vmatpush2.bf16.xpose.msra.mxu0 0
      %907 = vmatprep.subr.bf16.mxu0 0
      %908 = vmatpush2.bf16.xpose.msra.mxu0 0
      %909 = vmatprep.subr.bf16.mxu0 0
      %910 = vmatpush2.bf16.xpose.msra.mxu0 0
      %911 = vmatprep.subr.bf16.mxu0 0
      %912 = vmatpush2.bf16.xpose.msra.mxu0 0
      %913 = vmatprep.subr.bf16.mxu0 0
      %914 = vmatpush2.bf16.xpose.msra.mxu0 0
      %915 = vmatprep.subr.bf16.mxu0 0
      %916 = vmatpush2.bf16.xpose.msra.mxu0 0
      %917 = vmatprep.mubr.bf16.mxu0 0
      %918 = vmatmul.mubr.bf16.gmra.mxu0 %v880
      %v919 = vpop.f32.mrf.mxu0
      %v920 = vadd.f32 0.0, %v919
      %v921 = vpop.f32.mrf.mxu0
      %v922 = vpop.f32.mrf.mxu0
      %v923 = vadd.f32 0.0, %v922
      %v924 = vpop.f32.mrf.mxu0
      %925 = vdwg.mxu0
      %v926 = vmul.f32 %v920, 0.17677669
      %v927 = vmul.f32 %v923, 0.17677669
      %v928 = vadd.f32 %v926, %v235
      %v929 = vadd.f32 %v927, %v236
      %v930 = vsel %vm265, %v928, -inf
      %931 = vmax.xlane.f32.xlu0 %v930
      %v932 = vpop.xlane.xlu0 %931
      %v933 = vsel %vm265, %v929, -inf
      %934 = vmax.xlane.f32.xlu0 %v933
      %v935 = vpop.xlane.xlu0 %934
      %v936 = vsub.f32 %v928, %v932
      %v937 = vsub.f32 %v929, %v935
      %v938 = vmul.f32 %v936, 1.442695
      %v939 = vpow.pop %v938
      %v940 = vmul.f32 %v937, 1.442695
      %v941 = vpow.pop %v940
      %v942 = vsel %vm265, %v939, 0.0
      %943 = vadd.xlane.f32.xlu0 %v942
      %v944 = vpop.xlane.xlu0 %943
      %v945 = vsel %vm265, %v941, 0.0
      %946 = vadd.xlane.f32.xlu0 %v945
      %v947 = vpop.xlane.xlu0 %946
      %v948 = vpack.c.bf16 %v941, %v939
      %949 = vrot.lane.b32.xlu0 %v375, 32
      %v950 = vpop.permute.xlu0 %949
      %v953 = vsel %vm265, %v948, 0
      %955 = vmatprep.subr.bf16.mxu0 0
      %956 = vmatpush1.bf16.msra.mxu0 0
      %957 = vmatprep.subr.bf16.mxu0 0
      %958 = vmatpush1.bf16.msra.mxu0 0
      %959 = vmatprep.subr.bf16.mxu0 0
      %960 = vmatpush1.bf16.msra.mxu0 0
      %961 = vmatprep.subr.bf16.mxu0 0
      %962 = vmatpush1.bf16.msra.mxu0 0
      %963 = vmatprep.subr.bf16.mxu0 0
      %964 = vmatpush1.bf16.msra.mxu0 0
      %965 = vmatprep.subr.bf16.mxu0 0
      %966 = vmatpush1.bf16.msra.mxu0 0
      %967 = vmatprep.subr.bf16.mxu0 0
      %968 = vmatpush1.bf16.msra.mxu0 0
      %969 = vmatprep.subr.bf16.mxu0 0
      %970 = vmatpush1.bf16.msra.mxu0 %v950
      %971 = vmatprep.subr.bf16.mxu0 0
      %972 = vmatpush2.bf16.msra.mxu0 0
      %973 = vmatprep.subr.bf16.mxu0 0
      %974 = vmatpush2.bf16.msra.mxu0 0
      %975 = vmatprep.subr.bf16.mxu0 0
      %976 = vmatpush2.bf16.msra.mxu0 0
      %977 = vmatprep.subr.bf16.mxu0 0
      %978 = vmatpush2.bf16.msra.mxu0 0
      %979 = vmatprep.subr.bf16.mxu0 0
      %980 = vmatpush2.bf16.msra.mxu0 0
      %981 = vmatprep.subr.bf16.mxu0 0
      %982 = vmatpush2.bf16.msra.mxu0 0
      %983 = vmatprep.subr.bf16.mxu0 0
      %984 = vmatpush2.bf16.msra.mxu0 0
      %985 = vmatprep.subr.bf16.mxu0 0
      %986 = vmatpush2.bf16.msra.mxu0 0
      %987 = vmatprep.mubr.bf16.mxu0 0
      %988 = vmatmul.mubr.bf16.gmra.mxu0 %v953
      %v989 = vpop.f32.mrf.mxu0
      %v990 = vadd.f32 0.0, %v989
      %v991 = vpop.f32.mrf.mxu0
      %v992 = vpop.f32.mrf.mxu0
      %v993 = vadd.f32 0.0, %v992
      %v994 = vpop.f32.mrf.mxu0
      %995 = vdwg.mxu0
      %v996 = vrcp.pop %v944
      %v997 = vrcp.pop %v947
      %v998 = vmul.f32 %v990, %v996
      %v999 = vmul.f32 %v993, %v997
      %1002 = vrot.lane.b32.xlu0 %v616, 32
      %v1003 = vpop.permute.xlu0 %1002
      %1004 = vrot.lane.b32.xlu0 %v617, 32
      %v1005 = vpop.permute.xlu0 %1004
      %1010 = vrot.lane.b32.xlu0 %v807, 64
      %v1011 = vpop.permute.xlu0 %1010
      %1012 = vrot.lane.b32.xlu0 %v808, 64
      %v1013 = vpop.permute.xlu0 %1012
      %1018 = vrot.lane.b32.xlu0 %v998, 96
      %v1019 = vpop.permute.xlu0 %1018
      %1020 = vrot.lane.b32.xlu0 %v999, 96
      %v1021 = vpop.permute.xlu0 %1020
      %v1024 = vsel %vm300, %v423, %v1003
      %v1025 = vsel %vm300, %v424, %v1005
      %vm1026 = vcmask 523264
      %v1027 = vsel %vm1026, %v1024, %v1011
      %v1028 = vsel %vm1026, %v1025, %v1013
      %vm1029 = vcmask 785408
      %v1030 = vsel %vm1029, %v1027, %v1019
      %v1031 = vsel %vm1029, %v1028, %v1021
      %v1032 = vpack.c.bf16 %v1031, %v1030
      %v1034 = vunpack.c.l.b16 %v1032
      %v1035 = vunpack.c.h.b16 %v1032
      %v1036 = vpack.c.b16 %v1034, %v1034
      %v1037 = vpack.c.b16 %v1035, %v1035
      %1040 = vst [vmem:[%s211] sm:$0xf] %v1036
      %1041 = vst [vmem:[%s211 + $0x4] sm:$0xf] %v1037
      %p1042 = scmp.lt.s32.totalorder %s15, 1
      %s1043 = scalar_select %p1042, %s15, 1
      %s1044 = smul.addr %s1043, 2
      %s1045 = smul.addr %s1044, 4
      %s1046 = scalar_lea.vmem %s4, %s1045
      // Predicated region
      $region37: #{deepseek_wrapper_forward.10} parent=35 // pred_check
        %p1047 = pneg %p127
      $region38: #{deepseek_wrapper_forward.10} parent=35 // pred_check_branch
        %1049 = sbr.rel (%p1047) target = $region40
      $region39: #{deepseek_wrapper_forward.10} parent=35 // pred_region
        _
      $region40: #{deepseek_wrapper_forward.10} parent=35 // pred_fallthru
        _
    $region36: #{deepseek_wrapper_forward.10} parent=5 // pred_fallthru
      _
    %p1050 = scmp.le.s32.totalorder 2, %s10
    // Predicated region
    $region41: #{deepseek_wrapper_forward.10} parent=5 // pred_check
      %p1051 = pneg %p1050
    $region42: #{deepseek_wrapper_forward.10} parent=5 // pred_check_branch
      %1053 = sbr.rel (%p1051) target = $region44
    $region43: #{deepseek_wrapper_forward.10} parent=5 // pred_region
      %s1054 = ssub.s32 %s10, 2
      // Predicated region
      $region45: #{deepseek_wrapper_forward.10} parent=43 // pred_check
        %p1055 = pneg %p133
      $region46: #{deepseek_wrapper_forward.10} parent=43 // pred_check_branch
        %1057 = sbr.rel (%p1055) target = $region48
      $region47: #{deepseek_wrapper_forward.10} parent=43 // pred_region
        %p1058 = scmp.lt.s32.totalorder %s16, 1
        %s1059 = scalar_select %p1058, %s16, 1
        %s1060 = smul.addr %s1059, 2
        %s1061 = smul.addr %s1060, 4
        %s1062 = scalar_lea.vmem %s4, %s1061
      $region48: #{deepseek_wrapper_forward.10} parent=43 // pred_fallthru
        _
    $region44: #{deepseek_wrapper_forward.10} parent=5 // pred_fallthru
      _
  $region6: #{deepseek_wrapper_forward.10} parent=0 // loop_footer
    %s14 = sadd.s32 1, %s10
  $region7: #{deepseek_wrapper_forward.10} parent=0 // loop_footer_branch
    %9 = sbr.rel target = $region3
  $region8: #{deepseek_wrapper_forward.10} parent=0 // loop_exit
    _

// kernel: deepseek_wrapper_forward.12
$region0: #{deepseek_wrapper_forward.12}
  #allocation0 [shape = 'u32[]', space=smem, size = 0x4, offset = 0x4, fixed_abs, tag = 'smem constant byte address 0x4 - core index']
  #allocation1 [shape = 'u32[144,128]{1,0:T(1,128)}', space=vmem, size = 0x12000, scoped, tag = 'internal scratch']
  %s0 = inlined_call_operand.vmem [shape: f32[32,128], index: 0, kind: input, shape index: {}]
  %s1 = inlined_call_operand.vmem [shape: f32[1,128], index: 1, kind: input, shape index: {}]
  %s2 = inlined_call_operand.vmem [shape: bf16[128,512], index: 2, kind: input, shape index: {}]
  %s3 = inlined_call_operand.vmem [shape: bf16[256,128], index: 3, kind: input, shape index: {}]
  %s4 = inlined_call_operand.vmem [shape: f32[32,128], index: 4, kind: output, shape index: {}]
  %s5 = sld [smem:[#allocation0]]
  $region49: #{deepseek_wrapper_forward.12} parent=0
    _
  %s7 = ssub.s32 1, %s5
  %s8 = scalar_select 0, %s7, %s5
  loop: start=0, step=1, limit=4
  $region2: #{deepseek_wrapper_forward.12} parent=0 // loop_pre_header
    _
  $region3: #{deepseek_wrapper_forward.12} parent=0 // loop_header
    %s10 = sphi 0, %s14
    %p11 = scmp.ge.s32.totalorder %s10, 4
    %s20 = sphi 0, %s22
    %s23 = sphi 0, %s20
    %s24 = sphi 0, %s23
    %s40 = sphi 0, %s24
    %s44 = sphi 0, %s44
    %s46 = sphi 0, %s44
    %s47 = sphi 0, %s46
    %s61 = sphi 0, %s47
    %s65 = sphi 0, %s65
    %s67 = sphi 0, %s65
    %s68 = sphi 0, %s67
    %s82 = sphi 0, %s68
    %s86 = sphi 0, %s86
    %s88 = sphi 0, %s86
    %s89 = sphi 0, %s88
    %s103 = sphi 0, %s89
    %s109 = sphi 0, %s111
    %s112 = sphi 0, %s109
    %s113 = sphi 0, %s112
    %s129 = sphi 0, %s113
  $region4: #{deepseek_wrapper_forward.12} parent=0 // loop_header_branch
    %13 = sbr.rel (%p11) target = $region8
  $region5: #{deepseek_wrapper_forward.12} parent=0 // loop_body
    %s15 = ssub.s32 %s10, 1
    %s16 = ssub.s32 %s10, 2
    %s17 = sadd.s32 %s10, 1
    %s18 = ssub.s32 %s10, %s17
    %p19 = scmp.eq.s32.totalorder %s18, 0
    %s21 = sadd.s32 %s20, 1
    %s22 = scalar_select %p19, %s20, %s21
    %p25 = pneg %p19
    %p26 = scmp.eq.s32.totalorder %s10, 1
    %p27 = por %p25, %p26
    %p28 = scmp.ne.s32.totalorder %s20, %s23
    %p29 = scmp.eq.s32.totalorder %s10, 0
    %p30 = por %p28, %p29
    %p31 = scmp.ne.s32.totalorder %s20, %s23
    %p32 = scmp.eq.s32.totalorder %s15, 1
    %p33 = por %p31, %p32
    %p34 = scmp.ne.s32.totalorder %s23, %s24
    %p35 = scmp.eq.s32.totalorder %s15, 0
    %p36 = por %p34, %p35
    %p37 = scmp.ne.s32.totalorder %s23, %s24
    %p38 = scmp.eq.s32.totalorder %s16, 1
    %p39 = por %p37, %p38
    %p41 = scmp.ne.s32.totalorder %s24, %s40
    %p42 = scmp.eq.s32.totalorder %s16, 0
    %p43 = por %p41, %p42
    %s45 = sadd.s32 %s44, 1
    %p48 = scmp.eq.s32.totalorder %s10, 1
    %p49 = scmp.ne.s32.totalorder %s44, %s46
    %p50 = scmp.eq.s32.totalorder %s10, 0
    %p51 = por %p49, %p50
    %p52 = scmp.ne.s32.totalorder %s44, %s46
    %p53 = scmp.eq.s32.totalorder %s15, 1
    %p54 = por %p52, %p53
    %p55 = scmp.ne.s32.totalorder %s46, %s47
    %p56 = scmp.eq.s32.totalorder %s15, 0
    %p57 = por %p55, %p56
    %p58 = scmp.ne.s32.totalorder %s46, %s47
    %p59 = scmp.eq.s32.totalorder %s16, 1
    %p60 = por %p58, %p59
    %p62 = scmp.ne.s32.totalorder %s47, %s61
    %p63 = scmp.eq.s32.totalorder %s16, 0
    %p64 = por %p62, %p63
    %s66 = sadd.s32 %s65, 1
    %p69 = scmp.eq.s32.totalorder %s10, 1
    %p70 = scmp.ne.s32.totalorder %s65, %s67
    %p71 = scmp.eq.s32.totalorder %s10, 0
    %p72 = por %p70, %p71
    %p73 = scmp.ne.s32.totalorder %s65, %s67
    %p74 = scmp.eq.s32.totalorder %s15, 1
    %p75 = por %p73, %p74
    %p76 = scmp.ne.s32.totalorder %s67, %s68
    %p77 = scmp.eq.s32.totalorder %s15, 0
    %p78 = por %p76, %p77
    %p79 = scmp.ne.s32.totalorder %s67, %s68
    %p80 = scmp.eq.s32.totalorder %s16, 1
    %p81 = por %p79, %p80
    %p83 = scmp.ne.s32.totalorder %s68, %s82
    %p84 = scmp.eq.s32.totalorder %s16, 0
    %p85 = por %p83, %p84
    %s87 = sadd.s32 %s86, 1
    %p90 = scmp.eq.s32.totalorder %s10, 1
    %p91 = scmp.ne.s32.totalorder %s86, %s88
    %p92 = scmp.eq.s32.totalorder %s10, 0
    %p93 = por %p91, %p92
    %p94 = scmp.ne.s32.totalorder %s86, %s88
    %p95 = scmp.eq.s32.totalorder %s15, 1
    %p96 = por %p94, %p95
    %p97 = scmp.ne.s32.totalorder %s88, %s89
    %p98 = scmp.eq.s32.totalorder %s15, 0
    %p99 = por %p97, %p98
    %p100 = scmp.ne.s32.totalorder %s88, %s89
    %p101 = scmp.eq.s32.totalorder %s16, 1
    %p102 = por %p100, %p101
    %p104 = scmp.ne.s32.totalorder %s89, %s103
    %p105 = scmp.eq.s32.totalorder %s16, 0
    %p106 = por %p104, %p105
    %s107 = ssub.s32 %s10, %s17
    %p108 = scmp.eq.s32.totalorder %s107, 0
    %s110 = sadd.s32 %s109, 1
    %s111 = scalar_select %p108, %s109, %s110
    %p114 = pneg %p108
    %p115 = scmp.eq.s32.totalorder %s10, 1
    %p116 = por %p114, %p115
    %p117 = scmp.ne.s32.totalorder %s109, %s112
    %p118 = scmp.eq.s32.totalorder %s10, 0
    %p119 = por %p117, %p118
    %p120 = scmp.ne.s32.totalorder %s109, %s112
    %p121 = scmp.eq.s32.totalorder %s15, 1
    %p122 = por %p120, %p121
    %p123 = scmp.ne.s32.totalorder %s112, %s113
    %p124 = scmp.eq.s32.totalorder %s15, 0
    %p125 = por %p123, %p124
    %p126 = scmp.ne.s32.totalorder %s112, %s113
    %p127 = scmp.eq.s32.totalorder %s16, 1
    %p128 = por %p126, %p127
    %p130 = scmp.ne.s32.totalorder %s113, %s129
    %p131 = scmp.eq.s32.totalorder %s16, 0
    %p132 = por %p130, %p131
    %p133 = scmp.le.s32.totalorder 1, %s10
    %p134 = scmp.lt.s32.totalorder %s10, 3
    %p135 = pnand %p133, %p134
    %p136 = pneg %p135
    // Predicated region
    $region9: #{deepseek_wrapper_forward.12} parent=5 // pred_check
      _
    $region10: #{deepseek_wrapper_forward.12} parent=5 // pred_check_branch
      %138 = sbr.rel (%p135) target = $region12
    $region11: #{deepseek_wrapper_forward.12} parent=5 // pred_region
      %s139 = ssub.s32 %s10, 1
      // Predicated region
      $region13: #{deepseek_wrapper_forward.12} parent=11 // pred_check
        %p140 = pneg %p57
      $region14: #{deepseek_wrapper_forward.12} parent=11 // pred_check_branch
        %142 = sbr.rel (%p140) target = $region16
      $region15: #{deepseek_wrapper_forward.12} parent=11 // pred_region
        _
      $region16: #{deepseek_wrapper_forward.12} parent=11 // pred_fallthru
        _
      // Predicated region
      $region17: #{deepseek_wrapper_forward.12} parent=11 // pred_check
        %p143 = pneg %p78
      $region18: #{deepseek_wrapper_forward.12} parent=11 // pred_check_branch
        %145 = sbr.rel (%p143) target = $region20
      $region19: #{deepseek_wrapper_forward.12} parent=11 // pred_region
        _
      $region20: #{deepseek_wrapper_forward.12} parent=11 // pred_fallthru
        _
      // Predicated region
      $region21: #{deepseek_wrapper_forward.12} parent=11 // pred_check
        %p146 = pneg %p99
      $region22: #{deepseek_wrapper_forward.12} parent=11 // pred_check_branch
        %148 = sbr.rel (%p146) target = $region24
      $region23: #{deepseek_wrapper_forward.12} parent=11 // pred_region
        _
      $region24: #{deepseek_wrapper_forward.12} parent=11 // pred_fallthru
        _
    $region12: #{deepseek_wrapper_forward.12} parent=5 // pred_fallthru
      _
    %p149 = scmp.lt.s32.totalorder %s10, 2
    // Predicated region
    $region25: #{deepseek_wrapper_forward.12} parent=5 // pred_check
      %p150 = pneg %p149
    $region26: #{deepseek_wrapper_forward.12} parent=5 // pred_check_branch
      %152 = sbr.rel (%p150) target = $region28
    $region27: #{deepseek_wrapper_forward.12} parent=5 // pred_region
      // Predicated region
      $region29: #{deepseek_wrapper_forward.12} parent=27 // pred_check
        %p153 = pneg %p30
      $region30: #{deepseek_wrapper_forward.12} parent=27 // pred_check_branch
        %155 = sbr.rel (%p153) target = $region32
      $region31: #{deepseek_wrapper_forward.12} parent=27 // pred_region
        %s156 = smul.u32 2, %s10
        %p157 = scmp.lt.s32.totalorder %s156, 3
        %s158 = scalar_select %p157, %s156, 3
        %s159 = smul.addr %s158, 8
        %s160 = scalar_lea.vmem %s0, %s159
        %s161 = smul.u32 2, %s10
      $region32: #{deepseek_wrapper_forward.12} parent=27 // pred_fallthru
        _
    $region28: #{deepseek_wrapper_forward.12} parent=5 // pred_fallthru
      _
    %p162 = scmp.le.s32.totalorder 1, %s10
    %p163 = scmp.lt.s32.totalorder %s10, 3
    %p164 = pnand %p162, %p163
    %p165 = pneg %p164
    // Predicated region
    $region33: #{deepseek_wrapper_forward.12} parent=5 // pred_check
      _
    $region34: #{deepseek_wrapper_forward.12} parent=5 // pred_check_branch
      %167 = sbr.rel (%p164) target = $region36
    $region35: #{deepseek_wrapper_forward.12} parent=5 // pred_region
      %s168 = ssub.s32 %s10, 1
      %s169 = smul.u32 2, %s15
      %p170 = scmp.lt.s32.totalorder %s169, 3
      %s171 = scalar_select %p170, %s169, 3
      %s172 = smul.addr %s171, 8
      %s173 = scalar_lea.vmem %s0, %s172
      %p174 = pneg %p36
      %p175 = pneg %p33
      %p176 = pneg %p57
      %p177 = pneg %p54
      %p178 = pneg %p78
      %p179 = pneg %p75
      %p180 = pneg %p99
      %p181 = pneg %p96
      %p182 = pneg %p125
      %p183 = pneg %p122
      %s184 = smul.u32 2, %s15
      %p185 = scmp.lt.s32.totalorder %s184, 3
      %s186 = scalar_select %p185, %s184, 3
      %s187 = smul.addr %s186, 8
      %s188 = scalar_lea.vmem %s4, %s187
      %s189 = smul.u32 2, %s15
      %p190 = scmp.lt.s32.totalorder %s189, 3
      %s191 = scalar_select %p190, %s189, 3
      %s192 = smul.addr %s191, 8
      %s193 = scalar_lea.vmem %s0, %s192
      %s194 = smul.u32 2, %s15
      %s195 = smul.u32 2, %s15
      %p196 = scmp.lt.s32.totalorder %s195, 3
      %s197 = scalar_select %p196, %s195, 3
      %s198 = smul.addr %s197, 8
      %s199 = scalar_lea.vmem %s4, %s198
      %s200 = smul.u32 2, %s15
      %v202 = vld [vmem:[%s193] sm:$0xff]
      %v203 = vld [vmem:[%s193 + $0x8] sm:$0xff]
      %v204 = vld [vmem:[%s1] sm:$0x1]
      %v205 = vmul.f32 %v202, %v202
      %v206 = vmul.f32 %v203, %v203
      %207 = vadd.xlane.f32.xlu0 %v205
      %v208 = vpop.xlane.xlu0 %207
      %209 = vadd.xlane.f32.xlu0 %v206
      %v210 = vpop.xlane.xlu0 %209
      %v211 = vrcp.pop 128.0
      %v212 = vmul.f32 %v208, %v211
      %v213 = vmul.f32 %v210, %v211
      %v214 = vadd.f32 %v212, 1e-06
      %v215 = vadd.f32 %v213, 1e-06
      %v216 = vrsqrt.pop %v214
      %v217 = vrsqrt.pop %v215
      %v218 = vmul.f32 %v202, %v216
      %v219 = vmul.f32 %v203, %v217
      %v221 = vlaneseq
      %v222 = vshrl.u32 %v221, 7
      %v223 = vsub.s32 0, %v222
      %v224 = vrot.slane %v204, %v223
      %v226 = vmul.f32 %v218, %v224
      %v227 = vmul.f32 %v219, %v224
      %v228 = vpack.c.bf16 %v227, %v226
      %v229 = vld [vmem:[%s2] sm:$0xff]
      %v230 = vld [vmem:[%s2 + $0x8] sm:$0xff]
      %v231 = vld [vmem:[%s2 + $0x10] sm:$0xff]
      %v232 = vld [vmem:[%s2 + $0x18] sm:$0xff]
      %v233 = vld [vmem:[%s2 + $0x20] sm:$0xff]
      %v234 = vld [vmem:[%s2 + $0x28] sm:$0xff]
      %v235 = vld [vmem:[%s2 + $0x30] sm:$0xff]
      %v236 = vld [vmem:[%s2 + $0x38] sm:$0xff]
      %v237 = vld [vmem:[%s2 + $0x40] sm:$0xff]
      %v238 = vld [vmem:[%s2 + $0x48] sm:$0xff]
      %v239 = vld [vmem:[%s2 + $0x50] sm:$0xff]
      %v240 = vld [vmem:[%s2 + $0x58] sm:$0xff]
      %v241 = vld [vmem:[%s2 + $0x60] sm:$0xff]
      %v242 = vld [vmem:[%s2 + $0x68] sm:$0xff]
      %v243 = vld [vmem:[%s2 + $0x70] sm:$0xff]
      %v244 = vld [vmem:[%s2 + $0x78] sm:$0xff]
      %v245 = vld [vmem:[%s2 + $0x80] sm:$0xff]
      %v246 = vld [vmem:[%s2 + $0x88] sm:$0xff]
      %v247 = vld [vmem:[%s2 + $0x90] sm:$0xff]
      %v248 = vld [vmem:[%s2 + $0x98] sm:$0xff]
      %v249 = vld [vmem:[%s2 + $0xa0] sm:$0xff]
      %v250 = vld [vmem:[%s2 + $0xa8] sm:$0xff]
      %v251 = vld [vmem:[%s2 + $0xb0] sm:$0xff]
      %v252 = vld [vmem:[%s2 + $0xb8] sm:$0xff]
      %v253 = vld [vmem:[%s2 + $0xc0] sm:$0xff]
      %v254 = vld [vmem:[%s2 + $0xc8] sm:$0xff]
      %v255 = vld [vmem:[%s2 + $0xd0] sm:$0xff]
      %v256 = vld [vmem:[%s2 + $0xd8] sm:$0xff]
      %v257 = vld [vmem:[%s2 + $0xe0] sm:$0xff]
      %v258 = vld [vmem:[%s2 + $0xe8] sm:$0xff]
      %v259 = vld [vmem:[%s2 + $0xf0] sm:$0xff]
      %v260 = vld [vmem:[%s2 + $0xf8] sm:$0xff]
      %v293 = vunpack.c.l.b16 %v229
      %v294 = vunpack.c.h.b16 %v229
      %v295 = vunpack.c.l.b16 %v230
      %v296 = vunpack.c.h.b16 %v230
      %v297 = vunpack.c.l.b16 %v231
      %v298 = vunpack.c.h.b16 %v231
      %v299 = vunpack.c.l.b16 %v232
      %v300 = vunpack.c.h.b16 %v232
      %v301 = vunpack.c.l.b16 %v233
      %v302 = vunpack.c.h.b16 %v233
      %v303 = vunpack.c.l.b16 %v234
      %v304 = vunpack.c.h.b16 %v234
      %v305 = vunpack.c.l.b16 %v235
      %v306 = vunpack.c.h.b16 %v235
      %v307 = vunpack.c.l.b16 %v236
      %v308 = vunpack.c.h.b16 %v236
      %v309 = vunpack.c.l.b16 %v237
      %v310 = vunpack.c.h.b16 %v237
      %v311 = vunpack.c.l.b16 %v238
      %v312 = vunpack.c.h.b16 %v238
      %v313 = vunpack.c.l.b16 %v239
      %v314 = vunpack.c.h.b16 %v239
      %v315 = vunpack.c.l.b16 %v240
      %v316 = vunpack.c.h.b16 %v240
      %v317 = vunpack.c.l.b16 %v241
      %v318 = vunpack.c.h.b16 %v241
      %v319 = vunpack.c.l.b16 %v242
      %v320 = vunpack.c.h.b16 %v242
      %v321 = vunpack.c.l.b16 %v243
      %v322 = vunpack.c.h.b16 %v243
      %v323 = vunpack.c.l.b16 %v244
      %v324 = vunpack.c.h.b16 %v244
      %v325 = vunpack.c.l.b16 %v245
      %v326 = vunpack.c.h.b16 %v245
      %v327 = vunpack.c.l.b16 %v246
      %v328 = vunpack.c.h.b16 %v246
      %v329 = vunpack.c.l.b16 %v247
      %v330 = vunpack.c.h.b16 %v247
      %v331 = vunpack.c.l.b16 %v248
      %v332 = vunpack.c.h.b16 %v248
      %v333 = vunpack.c.l.b16 %v249
      %v334 = vunpack.c.h.b16 %v249
      %v335 = vunpack.c.l.b16 %v250
      %v336 = vunpack.c.h.b16 %v250
      %v337 = vunpack.c.l.b16 %v251
      %v338 = vunpack.c.h.b16 %v251
      %v339 = vunpack.c.l.b16 %v252
      %v340 = vunpack.c.h.b16 %v252
      %v341 = vunpack.c.l.b16 %v253
      %v342 = vunpack.c.h.b16 %v253
      %v343 = vunpack.c.l.b16 %v254
      %v344 = vunpack.c.h.b16 %v254
      %v345 = vunpack.c.l.b16 %v255
      %v346 = vunpack.c.h.b16 %v255
      %v347 = vunpack.c.l.b16 %v256
      %v348 = vunpack.c.h.b16 %v256
      %v349 = vunpack.c.l.b16 %v257
      %v350 = vunpack.c.h.b16 %v257
      %v351 = vunpack.c.l.b16 %v258
      %v352 = vunpack.c.h.b16 %v258
      %v353 = vunpack.c.l.b16 %v259
      %v354 = vunpack.c.h.b16 %v259
      %v355 = vunpack.c.l.b16 %v260
      %v356 = vunpack.c.h.b16 %v260
      %v357 = vpack.c.b16 %v297, %v293
      %v358 = vpack.c.b16 %v298, %v294
      %v359 = vpack.c.b16 %v299, %v295
      %v360 = vpack.c.b16 %v300, %v296
      %v361 = vpack.c.b16 %v305, %v301
      %v362 = vpack.c.b16 %v306, %v302
      %v363 = vpack.c.b16 %v307, %v303
      %v364 = vpack.c.b16 %v308, %v304
      %v365 = vpack.c.b16 %v313, %v309
      %v366 = vpack.c.b16 %v314, %v310
      %v367 = vpack.c.b16 %v315, %v311
      %v368 = vpack.c.b16 %v316, %v312
      %v369 = vpack.c.b16 %v321, %v317
      %v370 = vpack.c.b16 %v322, %v318
      %v371 = vpack.c.b16 %v323, %v319
      %v372 = vpack.c.b16 %v324, %v320
      %v373 = vpack.c.b16 %v329, %v325
      %v374 = vpack.c.b16 %v330, %v326
      %v375 = vpack.c.b16 %v331, %v327
      %v376 = vpack.c.b16 %v332, %v328
      %v377 = vpack.c.b16 %v337, %v333
      %v378 = vpack.c.b16 %v338, %v334
      %v379 = vpack.c.b16 %v339, %v335
      %v380 = vpack.c.b16 %v340, %v336
      %v381 = vpack.c.b16 %v345, %v341
      %v382 = vpack.c.b16 %v346, %v342
      %v383 = vpack.c.b16 %v347, %v343
      %v384 = vpack.c.b16 %v348, %v344
      %v385 = vpack.c.b16 %v353, %v349
      %v386 = vpack.c.b16 %v354, %v350
      %v387 = vpack.c.b16 %v355, %v351
      %v388 = vpack.c.b16 %v356, %v352
      %421 = vmatprep.subr.bf16.mxu0 %v386
      %422 = vmatpush1.bf16.msra.mxu0 %v385
      %423 = vmatprep.subr.bf16.mxu0 %v382
      %424 = vmatpush1.bf16.msra.mxu0 %v381
      %425 = vmatprep.subr.bf16.mxu0 %v378
      %426 = vmatpush1.bf16.msra.mxu0 %v377
      %427 = vmatprep.subr.bf16.mxu0 %v374
      %428 = vmatpush1.bf16.msra.mxu0 %v373
      %429 = vmatprep.subr.bf16.mxu0 %v370
      %430 = vmatpush1.bf16.msra.mxu0 %v369
      %431 = vmatprep.subr.bf16.mxu0 %v366
      %432 = vmatpush1.bf16.msra.mxu0 %v365
      %433 = vmatprep.subr.bf16.mxu0 %v362
      %434 = vmatpush1.bf16.msra.mxu0 %v361
      %435 = vmatprep.subr.bf16.mxu0 %v358
      %436 = vmatpush1.bf16.msra.mxu0 %v357
      %437 = vmatprep.subr.bf16.mxu0 0
      %438 = vmatpush2.bf16.msra.mxu0 0
      %439 = vmatprep.subr.bf16.mxu0 0
      %440 = vmatpush2.bf16.msra.mxu0 0
      %441 = vmatprep.subr.bf16.mxu0 0
      %442 = vmatpush2.bf16.msra.mxu0 0
      %443 = vmatprep.subr.bf16.mxu0 0
      %444 = vmatpush2.bf16.msra.mxu0 0
      %445 = vmatprep.subr.bf16.mxu0 0
      %446 = vmatpush2.bf16.msra.mxu0 0
      %447 = vmatprep.subr.bf16.mxu0 0
      %448 = vmatpush2.bf16.msra.mxu0 0
      %449 = vmatprep.subr.bf16.mxu0 0
      %450 = vmatpush2.bf16.msra.mxu0 0
      %451 = vmatprep.subr.bf16.mxu0 0
      %452 = vmatpush2.bf16.msra.mxu0 0
      %453 = vmatprep.mubr.bf16.mxu0 0
      %454 = vmatmul.mubr.bf16.gmra.mxu0 %v228
      %v455 = vpop.f32.mrf.mxu0
      %v456 = vadd.f32 0.0, %v455
      %v457 = vpop.f32.mrf.mxu0
      %v458 = vadd.f32 0.0, %v457
      %v459 = vpop.f32.mrf.mxu0
      %v460 = vadd.f32 0.0, %v459
      %v461 = vpop.f32.mrf.mxu0
      %v462 = vadd.f32 0.0, %v461
      %463 = vdwg.mxu0
      %464 = vmatprep.subr.bf16.mxu0 %v388
      %465 = vmatpush1.bf16.msra.mxu0 %v387
      %466 = vmatprep.subr.bf16.mxu0 %v384
      %467 = vmatpush1.bf16.msra.mxu0 %v383
      %468 = vmatprep.subr.bf16.mxu0 %v380
      %469 = vmatpush1.bf16.msra.mxu0 %v379
      %470 = vmatprep.subr.bf16.mxu0 %v376
      %471 = vmatpush1.bf16.msra.mxu0 %v375
      %472 = vmatprep.subr.bf16.mxu0 %v372
      %473 = vmatpush1.bf16.msra.mxu0 %v371
      %474 = vmatprep.subr.bf16.mxu0 %v368
      %475 = vmatpush1.bf16.msra.mxu0 %v367
      %476 = vmatprep.subr.bf16.mxu0 %v364
      %477 = vmatpush1.bf16.msra.mxu0 %v363
      %478 = vmatprep.subr.bf16.mxu0 %v360
      %479 = vmatpush1.bf16.msra.mxu0 %v359
      %480 = vmatprep.subr.bf16.mxu0 0
      %481 = vmatpush2.bf16.msra.mxu0 0
      %482 = vmatprep.subr.bf16.mxu0 0
      %483 = vmatpush2.bf16.msra.mxu0 0
      %484 = vmatprep.subr.bf16.mxu0 0
      %485 = vmatpush2.bf16.msra.mxu0 0
      %486 = vmatprep.subr.bf16.mxu0 0
      %487 = vmatpush2.bf16.msra.mxu0 0
      %488 = vmatprep.subr.bf16.mxu0 0
      %489 = vmatpush2.bf16.msra.mxu0 0
      %490 = vmatprep.subr.bf16.mxu0 0
      %491 = vmatpush2.bf16.msra.mxu0 0
      %492 = vmatprep.subr.bf16.mxu0 0
      %493 = vmatpush2.bf16.msra.mxu0 0
      %494 = vmatprep.subr.bf16.mxu0 0
      %495 = vmatpush2.bf16.msra.mxu0 0
      %496 = vmatprep.mubr.bf16.mxu0 0
      %497 = vmatmul.mubr.bf16.gmra.mxu0 %v228
      %v498 = vpop.f32.mrf.mxu0
      %v499 = vadd.f32 0.0, %v498
      %v500 = vpop.f32.mrf.mxu0
      %v501 = vadd.f32 0.0, %v500
      %v502 = vpop.f32.mrf.mxu0
      %v503 = vadd.f32 0.0, %v502
      %v504 = vpop.f32.mrf.mxu0
      %v505 = vadd.f32 0.0, %v504
      %506 = vdwg.mxu0
      %v507 = vxor.u32 %v456, 2147483648
      %v508 = vxor.u32 %v458, 2147483648
      %v509 = vxor.u32 %v460, 2147483648
      %v510 = vxor.u32 %v462, 2147483648
      %v511 = vmul.f32 %v507, 1.442695
      %v512 = vpow.pop %v511
      %v513 = vmul.f32 %v508, 1.442695
      %v514 = vpow.pop %v513
      %v515 = vmul.f32 %v509, 1.442695
      %v516 = vpow.pop %v515
      %v517 = vmul.f32 %v510, 1.442695
      %v518 = vpow.pop %v517
      %v519 = vadd.f32 %v512, 1.0
      %v520 = vadd.f32 %v514, 1.0
      %v521 = vadd.f32 %v516, 1.0
      %v522 = vadd.f32 %v518, 1.0
      %v523 = vrcp.pop %v519
      %v524 = vmul.f32 1.0, %v523
      %v525 = vrcp.pop %v520
      %v526 = vmul.f32 1.0, %v525
      %v527 = vrcp.pop %v521
      %v528 = vmul.f32 1.0, %v527
      %v529 = vrcp.pop %v522
      %v530 = vmul.f32 1.0, %v529
      %v531 = vmul.f32 %v456, %v524
      %v532 = vmul.f32 %v458, %v526
      %v533 = vmul.f32 %v460, %v528
      %v534 = vmul.f32 %v462, %v530
      %v535 = vmul.f32 %v531, %v499
      %v536 = vmul.f32 %v532, %v501
      %v537 = vmul.f32 %v533, %v503
      %v538 = vmul.f32 %v534, %v505
      %v539 = vpack.c.bf16 %v537, %v535
      %v540 = vpack.c.bf16 %v538, %v536
      %v541 = vld [vmem:[%s3] sm:$0xf]
      %v542 = vld [vmem:[%s3 + $0x4] sm:$0xf]
      %v543 = vld [vmem:[%s3 + $0x8] sm:$0xf]
      %v544 = vld [vmem:[%s3 + $0xc] sm:$0xf]
      %v545 = vld [vmem:[%s3 + $0x10] sm:$0xf]
      %v546 = vld [vmem:[%s3 + $0x14] sm:$0xf]
      %v547 = vld [vmem:[%s3 + $0x18] sm:$0xf]
      %v548 = vld [vmem:[%s3 + $0x1c] sm:$0xf]
      %v549 = vld [vmem:[%s3 + $0x20] sm:$0xf]
      %v550 = vld [vmem:[%s3 + $0x24] sm:$0xf]
      %v551 = vld [vmem:[%s3 + $0x28] sm:$0xf]
      %v552 = vld [vmem:[%s3 + $0x2c] sm:$0xf]
      %v553 = vld [vmem:[%s3 + $0x30] sm:$0xf]
      %v554 = vld [vmem:[%s3 + $0x34] sm:$0xf]
      %v555 = vld [vmem:[%s3 + $0x38] sm:$0xf]
      %v556 = vld [vmem:[%s3 + $0x3c] sm:$0xf]
      %v557 = vld [vmem:[%s3 + $0x40] sm:$0xf]
      %v558 = vld [vmem:[%s3 + $0x44] sm:$0xf]
      %v559 = vld [vmem:[%s3 + $0x48] sm:$0xf]
      %v560 = vld [vmem:[%s3 + $0x4c] sm:$0xf]
      %v561 = vld [vmem:[%s3 + $0x50] sm:$0xf]
      %v562 = vld [vmem:[%s3 + $0x54] sm:$0xf]
      %v563 = vld [vmem:[%s3 + $0x58] sm:$0xf]
      %v564 = vld [vmem:[%s3 + $0x5c] sm:$0xf]
      %v565 = vld [vmem:[%s3 + $0x60] sm:$0xf]
      %v566 = vld [vmem:[%s3 + $0x64] sm:$0xf]
      %v567 = vld [vmem:[%s3 + $0x68] sm:$0xf]
      %v568 = vld [vmem:[%s3 + $0x6c] sm:$0xf]
      %v569 = vld [vmem:[%s3 + $0x70] sm:$0xf]
      %v570 = vld [vmem:[%s3 + $0x74] sm:$0xf]
      %v571 = vld [vmem:[%s3 + $0x78] sm:$0xf]
      %v572 = vld [vmem:[%s3 + $0x7c] sm:$0xf]
      %v605 = vunpack.c.l.b16 %v541
      %v606 = vunpack.c.l.b16 %v542
      %v607 = vunpack.c.l.b16 %v543
      %v608 = vunpack.c.l.b16 %v544
      %v609 = vunpack.c.l.b16 %v545
      %v610 = vunpack.c.l.b16 %v546
      %v611 = vunpack.c.l.b16 %v547
      %v612 = vunpack.c.l.b16 %v548
      %v613 = vunpack.c.l.b16 %v549
      %v614 = vunpack.c.l.b16 %v550
      %v615 = vunpack.c.l.b16 %v551
      %v616 = vunpack.c.l.b16 %v552
      %v617 = vunpack.c.l.b16 %v553
      %v618 = vunpack.c.l.b16 %v554
      %v619 = vunpack.c.l.b16 %v555
      %v620 = vunpack.c.l.b16 %v556
      %v621 = vunpack.c.l.b16 %v557
      %v622 = vunpack.c.l.b16 %v558
      %v623 = vunpack.c.l.b16 %v559
      %v624 = vunpack.c.l.b16 %v560
      %v625 = vunpack.c.l.b16 %v561
      %v626 = vunpack.c.l.b16 %v562
      %v627 = vunpack.c.l.b16 %v563
      %v628 = vunpack.c.l.b16 %v564
      %v629 = vunpack.c.l.b16 %v565
      %v630 = vunpack.c.l.b16 %v566
      %v631 = vunpack.c.l.b16 %v567
      %v632 = vunpack.c.l.b16 %v568
      %v633 = vunpack.c.l.b16 %v569
      %v634 = vunpack.c.l.b16 %v570
      %v635 = vunpack.c.l.b16 %v571
      %v636 = vunpack.c.l.b16 %v572
      %v637 = vpack.c.b16 %v606, %v605
      %v638 = vpack.c.b16 %v608, %v607
      %v639 = vpack.c.b16 %v610, %v609
      %v640 = vpack.c.b16 %v612, %v611
      %v641 = vpack.c.b16 %v614, %v613
      %v642 = vpack.c.b16 %v616, %v615
      %v643 = vpack.c.b16 %v618, %v617
      %v644 = vpack.c.b16 %v620, %v619
      %v645 = vpack.c.b16 %v622, %v621
      %v646 = vpack.c.b16 %v624, %v623
      %v647 = vpack.c.b16 %v626, %v625
      %v648 = vpack.c.b16 %v628, %v627
      %v649 = vpack.c.b16 %v630, %v629
      %v650 = vpack.c.b16 %v632, %v631
      %v651 = vpack.c.b16 %v634, %v633
      %v652 = vpack.c.b16 %v636, %v635
      %669 = vmatprep.subr.bf16.mxu0 0
      %670 = vmatpush1.bf16.msra.mxu0 %v644
      %671 = vmatprep.subr.bf16.mxu0 0
      %672 = vmatpush1.bf16.msra.mxu0 %v643
      %673 = vmatprep.subr.bf16.mxu0 0
      %674 = vmatpush1.bf16.msra.mxu0 %v642
      %675 = vmatprep.subr.bf16.mxu0 0
      %676 = vmatpush1.bf16.msra.mxu0 %v641
      %677 = vmatprep.subr.bf16.mxu0 0
      %678 = vmatpush1.bf16.msra.mxu0 %v640
      %679 = vmatprep.subr.bf16.mxu0 0
      %680 = vmatpush1.bf16.msra.mxu0 %v639
      %681 = vmatprep.subr.bf16.mxu0 0
      %682 = vmatpush1.bf16.msra.mxu0 %v638
      %683 = vmatprep.subr.bf16.mxu0 0
      %684 = vmatpush1.bf16.msra.mxu0 %v637
      %685 = vmatprep.subr.bf16.mxu0 0
      %686 = vmatpush2.bf16.msra.mxu0 %v652
      %687 = vmatprep.subr.bf16.mxu0 0
      %688 = vmatpush2.bf16.msra.mxu0 %v651
      %689 = vmatprep.subr.bf16.mxu0 0
      %690 = vmatpush2.bf16.msra.mxu0 %v650
      %691 = vmatprep.subr.bf16.mxu0 0
      %692 = vmatpush2.bf16.msra.mxu0 %v649
      %693 = vmatprep.subr.bf16.mxu0 0
      %694 = vmatpush2.bf16.msra.mxu0 %v648
      %695 = vmatprep.subr.bf16.mxu0 0
      %696 = vmatpush2.bf16.msra.mxu0 %v647
      %697 = vmatprep.subr.bf16.mxu0 0
      %698 = vmatpush2.bf16.msra.mxu0 %v646
      %699 = vmatprep.subr.bf16.mxu0 0
      %700 = vmatpush2.bf16.msra.mxu0 %v645
      %701 = vmatprep.mubr.bf16.mxu0 %v540
      %702 = vmatmul.mubr.bf16.gmra.mxu0 %v539
      %v703 = vpop.f32.mrf.mxu0
      %v704 = vadd.f32 0.0, %v703
      %v705 = vpop.f32.mrf.mxu0
      %v706 = vpop.f32.mrf.mxu0
      %v707 = vadd.f32 0.0, %v706
      %v708 = vpop.f32.mrf.mxu0
      %709 = vdwg.mxu0
      %v710 = vadd.f32 %v202, %v704
      %v711 = vadd.f32 %v203, %v707
      %712 = vst [vmem:[%s199] sm:$0xff] %v710
      %713 = vst [vmem:[%s199 + $0x8] sm:$0xff] %v711
      %s714 = smul.u32 2, %s15
      %p715 = scmp.lt.s32.totalorder %s714, 3
      %s716 = scalar_select %p715, %s714, 3
      %s717 = smul.addr %s716, 8
      %s718 = scalar_lea.vmem %s4, %s717
      // Predicated region
      $region37: #{deepseek_wrapper_forward.12} parent=35 // pred_check
        %p719 = pneg %p122
      $region38: #{deepseek_wrapper_forward.12} parent=35 // pred_check_branch
        %721 = sbr.rel (%p719) target = $region40
      $region39: #{deepseek_wrapper_forward.12} parent=35 // pred_region
        %s722 = smul.u32 2, %s15
      $region40: #{deepseek_wrapper_forward.12} parent=35 // pred_fallthru
        _
    $region36: #{deepseek_wrapper_forward.12} parent=5 // pred_fallthru
      _
    %p723 = scmp.le.s32.totalorder 2, %s10
    // Predicated region
    $region41: #{deepseek_wrapper_forward.12} parent=5 // pred_check
      %p724 = pneg %p723
    $region42: #{deepseek_wrapper_forward.12} parent=5 // pred_check_branch
      %726 = sbr.rel (%p724) target = $region44
    $region43: #{deepseek_wrapper_forward.12} parent=5 // pred_region
      %s727 = ssub.s32 %s10, 2
      // Predicated region
      $region45: #{deepseek_wrapper_forward.12} parent=43 // pred_check
        %p728 = pneg %p128
      $region46: #{deepseek_wrapper_forward.12} parent=43 // pred_check_branch
        %730 = sbr.rel (%p728) target = $region48
      $region47: #{deepseek_wrapper_forward.12} parent=43 // pred_region
        %s731 = smul.u32 2, %s16
        %p732 = scmp.lt.s32.totalorder %s731, 3
        %s733 = scalar_select %p732, %s731, 3
        %s734 = smul.addr %s733, 8
        %s735 = scalar_lea.vmem %s4, %s734
      $region48: #{deepseek_wrapper_forward.12} parent=43 // pred_fallthru
        _
    $region44: #{deepseek_wrapper_forward.12} parent=5 // pred_fallthru
      _
  $region6: #{deepseek_wrapper_forward.12} parent=0 // loop_footer
    %s14 = sadd.s32 1, %s10
  $region7: #{deepseek_wrapper_forward.12} parent=0 // loop_footer_branch
    %9 = sbr.rel target = $region3
  $region8: #{deepseek_wrapper_forward.12} parent=0 // loop_exit
    _

// kernel: deepseek_wrapper_forward.17
$region0: #{deepseek_wrapper_forward.17}
  #allocation0 [shape = 'u32[]', space=smem, size = 0x4, offset = 0x4, fixed_abs, tag = 'smem constant byte address 0x4 - core index']
  #allocation1 [shape = 'u32[144,128]{1,0:T(1,128)}', space=vmem, size = 0x12000, scoped, tag = 'internal scratch']
  %s0 = inlined_call_operand.vmem [shape: f32[32,128], index: 0, kind: input, shape index: {}]
  %s1 = inlined_call_operand.vmem [shape: f32[1,128], index: 1, kind: input, shape index: {}]
  %s2 = inlined_call_operand.vmem [shape: bf16[128,256], index: 2, kind: input, shape index: {}]
  %s3 = inlined_call_operand.hbm [shape: f32[32,256], index: 3, kind: output, shape index: {}]
  %s4 = sld [smem:[#allocation0]]
  $region45: #{deepseek_wrapper_forward.17} parent=0
    _
  %s6 = ssub.s32 1, %s4
  %s7 = scalar_select 0, %s6, %s4
  $region1: #{deepseek_wrapper_forward.17} parent=0
    #allocation2 [shape = 'u8[32768]{0}', space=vmem, size = 0x8000, scoped, tag = 'output window, operand 0']
    #allocation3 [shape = 's32[2]{0}', space=sflag, size = 0x8, scoped, tag = 'scoped memory for deepseek_wrapper_forward.17']
    %8 = vsyncpa [#allocation3], 0
    %s9 = scalar_lea.sflag [#allocation3], 1
    %10 = vsyncpa %s9, 0
    loop: start=0, step=1, limit=4
    $region2: #{deepseek_wrapper_forward.17} parent=1 // loop_pre_header
      _
    $region3: #{deepseek_wrapper_forward.17} parent=1 // loop_header
      %s12 = sphi 0, %s16
      %p13 = scmp.ge.s32.totalorder %s12, 4
      %s22 = sphi 0, %s24
      %s25 = sphi 0, %s22
      %s26 = sphi 0, %s25
      %s42 = sphi 0, %s26
      %s46 = sphi 0, %s46
      %s48 = sphi 0, %s46
      %s49 = sphi 0, %s48
      %s63 = sphi 0, %s49
      %s67 = sphi 0, %s67
      %s69 = sphi 0, %s67
      %s70 = sphi 0, %s69
      %s84 = sphi 0, %s70
      %s90 = sphi 0, %s92
      %s93 = sphi 0, %s90
      %s94 = sphi 0, %s93
      %s110 = sphi 0, %s94
    $region4: #{deepseek_wrapper_forward.17} parent=1 // loop_header_branch
      %15 = sbr.rel (%p13) target = $region8
    $region5: #{deepseek_wrapper_forward.17} parent=1 // loop_body
      %s17 = ssub.s32 %s12, 1
      %s18 = ssub.s32 %s12, 2
      %s19 = sadd.s32 %s12, 1
      %s20 = ssub.s32 %s12, %s19
      %p21 = scmp.eq.s32.totalorder %s20, 0
      %s23 = sadd.s32 %s22, 1
      %s24 = scalar_select %p21, %s22, %s23
      %p27 = pneg %p21
      %p28 = scmp.eq.s32.totalorder %s12, 1
      %p29 = por %p27, %p28
      %p30 = scmp.ne.s32.totalorder %s22, %s25
      %p31 = scmp.eq.s32.totalorder %s12, 0
      %p32 = por %p30, %p31
      %p33 = scmp.ne.s32.totalorder %s22, %s25
      %p34 = scmp.eq.s32.totalorder %s17, 1
      %p35 = por %p33, %p34
      %p36 = scmp.ne.s32.totalorder %s25, %s26
      %p37 = scmp.eq.s32.totalorder %s17, 0
      %p38 = por %p36, %p37
      %p39 = scmp.ne.s32.totalorder %s25, %s26
      %p40 = scmp.eq.s32.totalorder %s18, 1
      %p41 = por %p39, %p40
      %p43 = scmp.ne.s32.totalorder %s26, %s42
      %p44 = scmp.eq.s32.totalorder %s18, 0
      %p45 = por %p43, %p44
      %s47 = sadd.s32 %s46, 1
      %p50 = scmp.eq.s32.totalorder %s12, 1
      %p51 = scmp.ne.s32.totalorder %s46, %s48
      %p52 = scmp.eq.s32.totalorder %s12, 0
      %p53 = por %p51, %p52
      %p54 = scmp.ne.s32.totalorder %s46, %s48
      %p55 = scmp.eq.s32.totalorder %s17, 1
      %p56 = por %p54, %p55
      %p57 = scmp.ne.s32.totalorder %s48, %s49
      %p58 = scmp.eq.s32.totalorder %s17, 0
      %p59 = por %p57, %p58
      %p60 = scmp.ne.s32.totalorder %s48, %s49
      %p61 = scmp.eq.s32.totalorder %s18, 1
      %p62 = por %p60, %p61
      %p64 = scmp.ne.s32.totalorder %s49, %s63
      %p65 = scmp.eq.s32.totalorder %s18, 0
      %p66 = por %p64, %p65
      %s68 = sadd.s32 %s67, 1
      %p71 = scmp.eq.s32.totalorder %s12, 1
      %p72 = scmp.ne.s32.totalorder %s67, %s69
      %p73 = scmp.eq.s32.totalorder %s12, 0
      %p74 = por %p72, %p73
      %p75 = scmp.ne.s32.totalorder %s67, %s69
      %p76 = scmp.eq.s32.totalorder %s17, 1
      %p77 = por %p75, %p76
      %p78 = scmp.ne.s32.totalorder %s69, %s70
      %p79 = scmp.eq.s32.totalorder %s17, 0
      %p80 = por %p78, %p79
      %p81 = scmp.ne.s32.totalorder %s69, %s70
      %p82 = scmp.eq.s32.totalorder %s18, 1
      %p83 = por %p81, %p82
      %p85 = scmp.ne.s32.totalorder %s70, %s84
      %p86 = scmp.eq.s32.totalorder %s18, 0
      %p87 = por %p85, %p86
      %s88 = ssub.s32 %s12, %s19
      %p89 = scmp.eq.s32.totalorder %s88, 0
      %s91 = sadd.s32 %s90, 1
      %s92 = scalar_select %p89, %s90, %s91
      %p95 = pneg %p89
      %p96 = scmp.eq.s32.totalorder %s12, 1
      %p97 = por %p95, %p96
      %p98 = scmp.ne.s32.totalorder %s90, %s93
      %p99 = scmp.eq.s32.totalorder %s12, 0
      %p100 = por %p98, %p99
      %p101 = scmp.ne.s32.totalorder %s90, %s93
      %p102 = scmp.eq.s32.totalorder %s17, 1
      %p103 = por %p101, %p102
      %p104 = scmp.ne.s32.totalorder %s93, %s94
      %p105 = scmp.eq.s32.totalorder %s17, 0
      %p106 = por %p104, %p105
      %p107 = scmp.ne.s32.totalorder %s93, %s94
      %p108 = scmp.eq.s32.totalorder %s18, 1
      %p109 = por %p107, %p108
      %p111 = scmp.ne.s32.totalorder %s94, %s110
      %p112 = scmp.eq.s32.totalorder %s18, 0
      %p113 = por %p111, %p112
      %p114 = scmp.le.s32.totalorder 1, %s12
      %p115 = scmp.lt.s32.totalorder %s12, 3
      %p116 = pnand %p114, %p115
      %p117 = pneg %p116
      // Predicated region
      $region9: #{deepseek_wrapper_forward.17} parent=5 // pred_check
        _
      $region10: #{deepseek_wrapper_forward.17} parent=5 // pred_check_branch
        %119 = sbr.rel (%p116) target = $region12
      $region11: #{deepseek_wrapper_forward.17} parent=5 // pred_region
        %s120 = ssub.s32 %s12, 1
        // Predicated region
        $region13: #{deepseek_wrapper_forward.17} parent=11 // pred_check
          %p121 = pneg %p59
        $region14: #{deepseek_wrapper_forward.17} parent=11 // pred_check_branch
          %123 = sbr.rel (%p121) target = $region16
        $region15: #{deepseek_wrapper_forward.17} parent=11 // pred_region
          _
        $region16: #{deepseek_wrapper_forward.17} parent=11 // pred_fallthru
          _
        // Predicated region
        $region17: #{deepseek_wrapper_forward.17} parent=11 // pred_check
          %p124 = pneg %p80
        $region18: #{deepseek_wrapper_forward.17} parent=11 // pred_check_branch
          %126 = sbr.rel (%p124) target = $region20
        $region19: #{deepseek_wrapper_forward.17} parent=11 // pred_region
          _
        $region20: #{deepseek_wrapper_forward.17} parent=11 // pred_fallthru
          _
      $region12: #{deepseek_wrapper_forward.17} parent=5 // pred_fallthru
        _
      %p127 = scmp.lt.s32.totalorder %s12, 2
      // Predicated region
      $region21: #{deepseek_wrapper_forward.17} parent=5 // pred_check
        %p128 = pneg %p127
      $region22: #{deepseek_wrapper_forward.17} parent=5 // pred_check_branch
        %130 = sbr.rel (%p128) target = $region24
      $region23: #{deepseek_wrapper_forward.17} parent=5 // pred_region
        // Predicated region
        $region25: #{deepseek_wrapper_forward.17} parent=23 // pred_check
          %p131 = pneg %p32
        $region26: #{deepseek_wrapper_forward.17} parent=23 // pred_check_branch
          %133 = sbr.rel (%p131) target = $region28
        $region27: #{deepseek_wrapper_forward.17} parent=23 // pred_region
          %s134 = smul.u32 2, %s12
          %p135 = scmp.lt.s32.totalorder %s134, 3
          %s136 = scalar_select %p135, %s134, 3
          %s137 = smul.addr %s136, 8
          %s138 = scalar_lea.vmem %s0, %s137
          %s139 = smul.u32 2, %s12
        $region28: #{deepseek_wrapper_forward.17} parent=23 // pred_fallthru
          _
      $region24: #{deepseek_wrapper_forward.17} parent=5 // pred_fallthru
        _
      %p140 = scmp.le.s32.totalorder 1, %s12
      %p141 = scmp.lt.s32.totalorder %s12, 3
      %p142 = pnand %p140, %p141
      %p143 = pneg %p142
      // Predicated region
      $region29: #{deepseek_wrapper_forward.17} parent=5 // pred_check
        _
      $region30: #{deepseek_wrapper_forward.17} parent=5 // pred_check_branch
        %145 = sbr.rel (%p142) target = $region32
      $region31: #{deepseek_wrapper_forward.17} parent=5 // pred_region
        %s146 = ssub.s32 %s12, 1
        %s147 = smul.u32 2, %s17
        %p148 = scmp.lt.s32.totalorder %s147, 3
        %s149 = scalar_select %p148, %s147, 3
        %s150 = smul.addr %s149, 8
        %s151 = scalar_lea.vmem %s0, %s150
        %p152 = pneg %p38
        %p153 = pneg %p35
        %p154 = pneg %p59
        %p155 = pneg %p56
        %p156 = pneg %p80
        %p157 = pneg %p77
        %p158 = pneg %p106
        %p159 = pneg %p103
        %s160 = sand.u32 %s93, 1
        %s161 = scalar_lea.sflag [#allocation3], %s160
        %s162 = sand.u32 %s93, 1
        %s163 = smul.addr %s162, 32
        %s164 = scalar_lea.vmem [#allocation2], %s163
        %s165 = smul.u32 2, %s17
        %p166 = scmp.lt.s32.totalorder %s165, 3
        %s167 = scalar_select %p166, %s165, 3
        %s168 = smul.addr %s167, 8
        %s169 = scalar_lea.vmem %s0, %s168
        %s170 = smul.u32 2, %s17
        %s171 = smul.u32 2, %s17
        %v173 = vld [vmem:[%s169] sm:$0xff]
        %v174 = vld [vmem:[%s169 + $0x8] sm:$0xff]
        %v175 = vld [vmem:[%s1] sm:$0x1]
        %v176 = vmul.f32 %v173, %v173
        %v177 = vmul.f32 %v174, %v174
        %178 = vadd.xlane.f32.xlu0 %v176
        %v179 = vpop.xlane.xlu0 %178
        %180 = vadd.xlane.f32.xlu0 %v177
        %v181 = vpop.xlane.xlu0 %180
        %v182 = vrcp.pop 128.0
        %v183 = vmul.f32 %v179, %v182
        %v184 = vmul.f32 %v181, %v182
        %v185 = vadd.f32 %v183, 1e-06
        %v186 = vadd.f32 %v184, 1e-06
        %v187 = vrsqrt.pop %v185
        %v188 = vrsqrt.pop %v186
        %v189 = vmul.f32 %v173, %v187
        %v190 = vmul.f32 %v174, %v188
        %v192 = vlaneseq
        %v193 = vshrl.u32 %v192, 7
        %v194 = vsub.s32 0, %v193
        %v195 = vrot.slane %v175, %v194
        %v197 = vmul.f32 %v189, %v195
        %v198 = vmul.f32 %v190, %v195
        %v199 = vpack.c.bf16 %v198, %v197
        %v200 = vld [vmem:[%s2] sm:$0xff]
        %v201 = vld [vmem:[%s2 + $0x8] sm:$0xff]
        %v202 = vld [vmem:[%s2 + $0x10] sm:$0xff]
        %v203 = vld [vmem:[%s2 + $0x18] sm:$0xff]
        %v204 = vld [vmem:[%s2 + $0x20] sm:$0xff]
        %v205 = vld [vmem:[%s2 + $0x28] sm:$0xff]
        %v206 = vld [vmem:[%s2 + $0x30] sm:$0xff]
        %v207 = vld [vmem:[%s2 + $0x38] sm:$0xff]
        %v208 = vld [vmem:[%s2 + $0x40] sm:$0xff]
        %v209 = vld [vmem:[%s2 + $0x48] sm:$0xff]
        %v210 = vld [vmem:[%s2 + $0x50] sm:$0xff]
        %v211 = vld [vmem:[%s2 + $0x58] sm:$0xff]
        %v212 = vld [vmem:[%s2 + $0x60] sm:$0xff]
        %v213 = vld [vmem:[%s2 + $0x68] sm:$0xff]
        %v214 = vld [vmem:[%s2 + $0x70] sm:$0xff]
        %v215 = vld [vmem:[%s2 + $0x78] sm:$0xff]
        %v232 = vunpack.c.l.b16 %v200
        %v233 = vunpack.c.h.b16 %v200
        %v234 = vunpack.c.l.b16 %v201
        %v235 = vunpack.c.h.b16 %v201
        %v236 = vunpack.c.l.b16 %v202
        %v237 = vunpack.c.h.b16 %v202
        %v238 = vunpack.c.l.b16 %v203
        %v239 = vunpack.c.h.b16 %v203
        %v240 = vunpack.c.l.b16 %v204
        %v241 = vunpack.c.h.b16 %v204
        %v242 = vunpack.c.l.b16 %v205
        %v243 = vunpack.c.h.b16 %v205
        %v244 = vunpack.c.l.b16 %v206
        %v245 = vunpack.c.h.b16 %v206
        %v246 = vunpack.c.l.b16 %v207
        %v247 = vunpack.c.h.b16 %v207
        %v248 = vunpack.c.l.b16 %v208
        %v249 = vunpack.c.h.b16 %v208
        %v250 = vunpack.c.l.b16 %v209
        %v251 = vunpack.c.h.b16 %v209
        %v252 = vunpack.c.l.b16 %v210
        %v253 = vunpack.c.h.b16 %v210
        %v254 = vunpack.c.l.b16 %v211
        %v255 = vunpack.c.h.b16 %v211
        %v256 = vunpack.c.l.b16 %v212
        %v257 = vunpack.c.h.b16 %v212
        %v258 = vunpack.c.l.b16 %v213
        %v259 = vunpack.c.h.b16 %v213
        %v260 = vunpack.c.l.b16 %v214
        %v261 = vunpack.c.h.b16 %v214
        %v262 = vunpack.c.l.b16 %v215
        %v263 = vunpack.c.h.b16 %v215
        %v264 = vpack.c.b16 %v234, %v232
        %v265 = vpack.c.b16 %v235, %v233
        %v266 = vpack.c.b16 %v238, %v236
        %v267 = vpack.c.b16 %v239, %v237
        %v268 = vpack.c.b16 %v242, %v240
        %v269 = vpack.c.b16 %v243, %v241
        %v270 = vpack.c.b16 %v246, %v244
        %v271 = vpack.c.b16 %v247, %v245
        %v272 = vpack.c.b16 %v250, %v248
        %v273 = vpack.c.b16 %v251, %v249
        %v274 = vpack.c.b16 %v254, %v252
        %v275 = vpack.c.b16 %v255, %v253
        %v276 = vpack.c.b16 %v258, %v256
        %v277 = vpack.c.b16 %v259, %v257
        %v278 = vpack.c.b16 %v262, %v260
        %v279 = vpack.c.b16 %v263, %v261
        %296 = vmatprep.subr.bf16.mxu0 %v279
        %297 = vmatpush1.bf16.msra.mxu0 %v278
        %298 = vmatprep.subr.bf16.mxu0 %v277
        %299 = vmatpush1.bf16.msra.mxu0 %v276
        %300 = vmatprep.subr.bf16.mxu0 %v275
        %301 = vmatpush1.bf16.msra.mxu0 %v274
        %302 = vmatprep.subr.bf16.mxu0 %v273
        %303 = vmatpush1.bf16.msra.mxu0 %v272
        %304 = vmatprep.subr.bf16.mxu0 %v271
        %305 = vmatpush1.bf16.msra.mxu0 %v270
        %306 = vmatprep.subr.bf16.mxu0 %v269
        %307 = vmatpush1.bf16.msra.mxu0 %v268
        %308 = vmatprep.subr.bf16.mxu0 %v267
        %309 = vmatpush1.bf16.msra.mxu0 %v266
        %310 = vmatprep.subr.bf16.mxu0 %v265
        %311 = vmatpush1.bf16.msra.mxu0 %v264
        %312 = vmatprep.subr.bf16.mxu0 0
        %313 = vmatpush2.bf16.msra.mxu0 0
        %314 = vmatprep.subr.bf16.mxu0 0
        %315 = vmatpush2.bf16.msra.mxu0 0
        %316 = vmatprep.subr.bf16.mxu0 0
        %317 = vmatpush2.bf16.msra.mxu0 0
        %318 = vmatprep.subr.bf16.mxu0 0
        %319 = vmatpush2.bf16.msra.mxu0 0
        %320 = vmatprep.subr.bf16.mxu0 0
        %321 = vmatpush2.bf16.msra.mxu0 0
        %322 = vmatprep.subr.bf16.mxu0 0
        %323 = vmatpush2.bf16.msra.mxu0 0
        %324 = vmatprep.subr.bf16.mxu0 0
        %325 = vmatpush2.bf16.msra.mxu0 0
        %326 = vmatprep.subr.bf16.mxu0 0
        %327 = vmatpush2.bf16.msra.mxu0 0
        %328 = vmatprep.mubr.bf16.mxu0 0
        %329 = vmatmul.mubr.bf16.gmra.mxu0 %v199
        %v330 = vpop.f32.mrf.mxu0
        %v331 = vadd.f32 0.0, %v330
        %v332 = vpop.f32.mrf.mxu0
        %v333 = vadd.f32 0.0, %v332
        %v334 = vpop.f32.mrf.mxu0
        %v335 = vadd.f32 0.0, %v334
        %v336 = vpop.f32.mrf.mxu0
        %v337 = vadd.f32 0.0, %v336
        %338 = vdwg.mxu0
        %339 = vst [vmem:[%s164] sm:$0xff] %v331
        %340 = vst [vmem:[%s164 + $0x8] sm:$0xff] %v333
        %341 = vst [vmem:[%s164 + $0x10] sm:$0xff] %v335
        %342 = vst [vmem:[%s164 + $0x18] sm:$0xff] %v337
        %s343 = sand.u32 %s93, 1
        %s344 = scalar_lea.sflag [#allocation3], %s343
        %s345 = sand.u32 %s93, 1
        %s346 = smul.addr %s345, 32
        %s347 = scalar_lea.vmem [#allocation2], %s346
        // Predicated region
        $region33: #{deepseek_wrapper_forward.17} parent=31 // pred_check
          %p348 = pneg %p103
        $region34: #{deepseek_wrapper_forward.17} parent=31 // pred_check_branch
          %350 = sbr.rel (%p348) target = $region36
        $region35: #{deepseek_wrapper_forward.17} parent=31 // pred_region
          %s351 = smul.u32 2, %s17
          %s353 = ssub.s32 512, 512
          %354 = vsyncadd %s344, %s353
          %s355 = smul.addr %s351, 2
          %s356 = smul.addr %s355, 128
          %s357 = scalar_lea.hbm %s3, %s356
          %s358 = sshll.u32 %s347, 4
          %s359 = int_to_ptr.vmem [resolvable:$true] %s358
          %364 = dma.vmem_to_hbm [thread:$0]  %s359, 512, %s357, %s344, 256, 256, 16
        $region36: #{deepseek_wrapper_forward.17} parent=31 // pred_fallthru
          _
      $region32: #{deepseek_wrapper_forward.17} parent=5 // pred_fallthru
        _
      %p365 = scmp.le.s32.totalorder 2, %s12
      // Predicated region
      $region37: #{deepseek_wrapper_forward.17} parent=5 // pred_check
        %p366 = pneg %p365
      $region38: #{deepseek_wrapper_forward.17} parent=5 // pred_check_branch
        %368 = sbr.rel (%p366) target = $region40
      $region39: #{deepseek_wrapper_forward.17} parent=5 // pred_region
        %s369 = ssub.s32 %s12, 2
        // Predicated region
        $region41: #{deepseek_wrapper_forward.17} parent=39 // pred_check
          %p370 = pneg %p109
        $region42: #{deepseek_wrapper_forward.17} parent=39 // pred_check_branch
          %372 = sbr.rel (%p370) target = $region44
        $region43: #{deepseek_wrapper_forward.17} parent=39 // pred_region
          %s373 = sand.u32 %s94, 1
          %s374 = scalar_lea.sflag [#allocation3], %s373
          %s375 = sand.u32 %s94, 1
          %s376 = smul.addr %s375, 32
          %s377 = scalar_lea.vmem [#allocation2], %s376
          %378 = dma.done %s374, 512
        $region44: #{deepseek_wrapper_forward.17} parent=39 // pred_fallthru
          _
      $region40: #{deepseek_wrapper_forward.17} parent=5 // pred_fallthru
        _
    $region6: #{deepseek_wrapper_forward.17} parent=1 // loop_footer
      %s16 = sadd.s32 1, %s12
    $region7: #{deepseek_wrapper_forward.17} parent=1 // loop_footer_branch
      %11 = sbr.rel target = $region3
    $region8: #{deepseek_wrapper_forward.17} parent=1 // loop_exit
      _
    %379 = vsyncpa [#allocation3], 1
    %s380 = scalar_lea.sflag [#allocation3], 1
    %381 = vsyncpa %s380, 1

</llo_original>
